<compile_context>
chip_gen: v6e
topology: v6e:2x2x1
jax: 0.10.0
libtpu: 0.0.40
codegen_flags: <defaults>
</compile_context>

<pallas_src>
import functools

import jax
import jax.numpy as jnp
import numpy as np
from jax.experimental import pallas as pl
from jax.experimental.pallas import tpu as pltpu


def _cspn_kernel(x_ref, w_ref, b_ref, o_ref, pad_ref):
    # x_ref:   (1, Cin, H, W)      unpadded input image (VMEM, resident across h tiles)
    # w_ref:   (Cout, Cin*9)       SMEM; conv weights with BN scale folded in,
    #                              flat tap index = ci*9 + dy*3 + dx
    # b_ref:   (Cout,)             SMEM; folded BN bias
    # o_ref:   (1, Cout+1, TH, W)  output tile, channel-major, W on the lane axis
    # pad_ref: (Cin, TH+2, W+2)    VMEM scratch; zero-padded halo tile
    Cin = x_ref.shape[1]
    H = x_ref.shape[2]
    W = x_ref.shape[3]
    Cout = w_ref.shape[0]
    TH = o_ref.shape[2]

    r0 = pl.program_id(1) * TH  # first output row of this tile

    # ---- Build the zero-padded (TH+2, W+2) halo tile in VMEM scratch. ----
    # Whole-scratch zero is cheap (one store per pixel per channel) and keeps
    # the boundary handling trivial.
    pad_ref[...] = jnp.zeros_like(pad_ref)
    for ci in range(Cin):
        pad_ref[ci, 1:TH + 1, 1:W + 1] = x_ref[0, ci, pl.ds(r0, TH), :]

    @pl.when(r0 > 0)  # top halo row exists
    def _():
        for ci in range(Cin):
            pad_ref[ci, 0:1, 1:W + 1] = x_ref[0, ci, pl.ds(r0 - 1, 1), :]

    @pl.when(r0 + TH < H)  # bottom halo row exists
    def _():
        for ci in range(Cin):
            pad_ref[ci, TH + 1:TH + 2, 1:W + 1] = x_ref[0, ci, pl.ds(r0 + TH, 1), :]

    # ---- 3x3 conv as VPU multiply-adds with broadcast scalar weights. ----
    # All tap slices on the scratch use static offsets (no dynamic addressing
    # in the inner unrolled loops).
    accs = [None] * Cout
    for ci in range(Cin):
        for t in range(9):  # statically unrolled taps
            dy, dx = t // 3, t % 3
            patch = pad_ref[ci, dy:dy + TH, dx:dx + W]  # shifted (TH, W) window
            for co in range(Cout):
                term = w_ref[co, ci * 9 + t] * patch
                accs[co] = term if accs[co] is None else accs[co] + term

    # folded BatchNorm bias (per-channel scalar from SMEM)
    guides = [accs[co] + b_ref[co] for co in range(Cout)]

    # channel reductions are plane-wise VPU adds (channels unrolled, not on lanes)
    gsum = jnp.abs(guides[0])
    ssum = guides[0]
    for co in range(1, Cout):
        gsum = gsum + jnp.abs(guides[co])
        ssum = ssum + guides[co]

    # NOTE: no epsilon -- matches the PyTorch module (all-zero guide -> NaN there too).
    inv = pl.reciprocal(gsum, approx=False)
    mid = 1.0 - ssum * inv

    # direct per-plane stores: [guide[:half], mid, guide[half:]]
    half = Cout // 2
    for co in range(half):
        o_ref[0, co] = (guides[co] * inv).astype(o_ref.dtype)
    o_ref[0, half] = mid.astype(o_ref.dtype)
    for co in range(half, Cout):
        o_ref[0, co + 1] = (guides[co] * inv).astype(o_ref.dtype)


def _pick_tile_h(H, max_rows=64):
    """Largest row tile TH that divides H evenly and satisfies the sublane rule."""
    if H <= max_rows:
        return H
    for th in range(max_rows, 7, -1):
        if H % th == 0 and th % 8 == 0:
            return th
    return H  # no clean divisor: fall back to the whole image


@functools.partial(jax.jit, static_argnames=("kernel_size",))
def cspn_generate_accelerate(feature, conv_w, bn_gamma, bn_beta,
                             bn_mean, bn_var, *, kernel_size=3, eps=1e-5):
    """feature: (N, Cin, H, W) NCHW.  Returns (N, kernel_size**2, H, W) NCHW."""
    N, Cin, H, W = feature.shape
    Cout = kernel_size * kernel_size - 1
    assert conv_w.shape == (Cout, Cin, 3, 3)

    # Fold eval-mode BatchNorm: scale into the conv weights, keep only a bias.
    scale = bn_gamma.astype(jnp.float32) / jnp.sqrt(bn_var.astype(jnp.float32) + eps)
    bias = bn_beta.astype(jnp.float32) - bn_mean.astype(jnp.float32) * scale
    w = (conv_w.astype(jnp.float32) * scale[:, None, None, None]).reshape(Cout, Cin * 9)

    x = feature.astype(jnp.float32)  # no wrapper-side spatial pad (halo built in-kernel)

    TH = _pick_tile_h(H)
    grid = (N, H // TH)

    out = pl.pallas_call(
        _cspn_kernel,
        out_shape=jax.ShapeDtypeStruct((N, Cout + 1, H, W), jnp.float32),
        grid_spec=pltpu.PrefetchScalarGridSpec(
            num_scalar_prefetch=0,
            grid=grid,
            in_specs=[
                # whole (unpadded) image per batch element, resident across H tiles
                pl.BlockSpec((1, Cin, H, W), lambda n, h: (n, 0, 0, 0)),
                # scalar conv weights / bias live in SMEM
                pl.BlockSpec(memory_space=pltpu.MemorySpace.SMEM),
                pl.BlockSpec(memory_space=pltpu.MemorySpace.SMEM),
            ],
            out_specs=pl.BlockSpec((1, Cout + 1, TH, W),
                                   lambda n, h: (n, 0, h, 0)),
            scratch_shapes=[pltpu.VMEM((Cin, TH + 2, W + 2), jnp.float32)],
        ),
        compiler_params=pltpu.CompilerParams(
            dimension_semantics=("parallel", "parallel"),
            vmem_limit_bytes=48 * 1024 * 1024),
        cost_estimate=pl.CostEstimate(
            flops=2 * 9 * Cin * Cout * H * W * N,
            transcendentals=N * H * W,
            bytes_accessed=4 * (N * Cin * H * W + N * (Cout + 1) * H * W)),
    )(x, w, bias)
    return out


def _reference(feature, conv_w, bn_gamma, bn_beta, bn_mean, bn_var, eps=1e-5):
    """Pure-JAX reference of the PyTorch forward (eval-mode BN)."""
    conv = jax.lax.conv_general_dilated(
        feature.astype(jnp.float32), conv_w.astype(jnp.float32),
        window_strides=(1, 1), padding=((1, 1), (1, 1)),
        dimension_numbers=("NCHW", "OIHW", "NCHW"))
    scale = (bn_gamma / jnp.sqrt(bn_var + eps)).reshape(1, -1, 1, 1)
    shift = (bn_beta - bn_mean * bn_gamma / jnp.sqrt(bn_var + eps)).reshape(1, -1, 1, 1)
    guide = conv * scale + shift
    gsum = jnp.sum(jnp.abs(guide), axis=1, keepdims=True)
    guide = guide / gsum
    mid = (1.0 - jnp.sum(guide, axis=1))[:, None]
    h = guide.shape[1] // 2
    return jnp.concatenate([guide[:, :h], mid, guide[:, h:]], axis=1)


if __name__ == "__main__":
    key = jax.random.PRNGKey(0)
    N, Cin, H, W = 2, 4, 16, 16
    kernel_size = 3
    Cout = kernel_size * kernel_size - 1  # 8

    k0, k1, k2, k3, k4, k5 = jax.random.split(key, 6)
    feature = jax.random.normal(k0, (N, Cin, H, W), jnp.float32)
    # deterministic parameter init (kaiming-ish fan-in scaling for the conv)
    conv_w = jax.random.normal(k1, (Cout, Cin, 3, 3), jnp.float32) / np.sqrt(Cin * 9)
    bn_gamma = 1.0 + 0.1 * jax.random.normal(k2, (Cout,), jnp.float32)
    bn_beta = 0.1 * jax.random.normal(k3, (Cout,), jnp.float32)
    bn_mean = 0.05 * jax.random.normal(k4, (Cout,), jnp.float32)
    bn_var = 1.0 + 0.1 * jax.random.uniform(k5, (Cout,), jnp.float32)

    out = cspn_generate_accelerate(feature, conv_w, bn_gamma, bn_beta,
                                   bn_mean, bn_var, kernel_size=kernel_size)
    out = jax.block_until_ready(out)

    ref = _reference(feature, conv_w, bn_gamma, bn_beta, bn_mean, bn_var)
    assert out.shape == (N, kernel_size * kernel_size, H, W)
    np.testing.assert_allclose(np.asarray(out), np.asarray(ref),
                               rtol=1e-4, atol=1e-4)
    print("KERNEL_OK")
</pallas_src>

<mosaic_0001>
module attributes {stable_mosaic.version = 11 : i64} {
  func.func @_cspn_kernel(%arg0: i32, %arg1: i32, %arg2: memref<1x4x16x16xf32, #tpu.memory_space<vmem>>, %arg3: memref<8x36xf32, #tpu.memory_space<smem>>, %arg4: memref<8xf32, #tpu.memory_space<smem>>, %arg5: memref<1x9x16x16xf32, #tpu.memory_space<vmem>>, %arg6: memref<4x18x18xf32, #tpu.memory_space<vmem>>) attributes {dimension_semantics = [#tpu.dimension_semantics<parallel>, #tpu.dimension_semantics<parallel>], iteration_bounds = array<i64: 2, 1>, scalar_prefetch = 0 : i64, scratch_operands = 1 : i64, tpu.core_type = #tpu.core_type<tc>, window_params = [{transform_indices = @transform_0, window_bounds = array<i64: 1, 4, 16, 16>}, {transform_indices = @transform_1, window_bounds = array<i64: 8, 36>}, {transform_indices = @transform_2, window_bounds = array<i64: 8>}, {transform_indices = @transform_3, window_bounds = array<i64: 1, 9, 16, 16>}]} {
    %c16_i32 = arith.constant 16 : i32
    %0 = arith.muli %arg1, %c16_i32 : i32
    %cst = arith.constant 0.000000e+00 : f32
    %1 = vector.broadcast %cst : f32 to vector<4x18x18xf32>
    %c0 = arith.constant 0 : index
    %c0_0 = arith.constant 0 : index
    %c0_1 = arith.constant 0 : index
    %2 = vector.load %arg6[%c0, %c0_0, %c0_1] : memref<4x18x18xf32, #tpu.memory_space<vmem>>, vector<4x18x18xf32>
    tpu.vector_store %arg6[%c0, %c0_0, %c0_1], %1 {strides = array<i32>} : memref<4x18x18xf32, #tpu.memory_space<vmem>>, vector<4x18x18xf32>,
    %c0_2 = arith.constant 0 : index
    %c0_3 = arith.constant 0 : index
    %3 = arith.index_cast %0 : i32 to index
    %c0_4 = arith.constant 0 : index
    %4 = vector.load %arg2[%c0_2, %c0_3, %3, %c0_4] : memref<1x4x16x16xf32, #tpu.memory_space<vmem>>, vector<1x1x16x16xf32>
    %5 = vector.shape_cast %4 : vector<1x1x16x16xf32> to vector<16x16xf32>
    %c0_5 = arith.constant 0 : index
    %c1 = arith.constant 1 : index
    %c1_6 = arith.constant 1 : index
    %6 = vector.load %arg6[%c0_5, %c1, %c1_6] : memref<4x18x18xf32, #tpu.memory_space<vmem>>, vector<1x16x16xf32>
    %7 = vector.shape_cast %6 : vector<1x16x16xf32> to vector<16x16xf32>
    %8 = vector.shape_cast %5 : vector<16x16xf32> to vector<1x16x16xf32>
    tpu.vector_store %arg6[%c0_5, %c1, %c1_6], %8 {strides = array<i32>} : memref<4x18x18xf32, #tpu.memory_space<vmem>>, vector<1x16x16xf32>,
    %c0_7 = arith.constant 0 : index
    %c1_8 = arith.constant 1 : index
    %9 = arith.index_cast %0 : i32 to index
    %c0_9 = arith.constant 0 : index
    %10 = vector.load %arg2[%c0_7, %c1_8, %9, %c0_9] : memref<1x4x16x16xf32, #tpu.memory_space<vmem>>, vector<1x1x16x16xf32>
    %11 = vector.shape_cast %10 : vector<1x1x16x16xf32> to vector<16x16xf32>
    %c1_10 = arith.constant 1 : index
    %c1_11 = arith.constant 1 : index
    %c1_12 = arith.constant 1 : index
    %12 = vector.load %arg6[%c1_10, %c1_11, %c1_12] : memref<4x18x18xf32, #tpu.memory_space<vmem>>, vector<1x16x16xf32>
    %13 = vector.shape_cast %12 : vector<1x16x16xf32> to vector<16x16xf32>
    %14 = vector.shape_cast %11 : vector<16x16xf32> to vector<1x16x16xf32>
    tpu.vector_store %arg6[%c1_10, %c1_11, %c1_12], %14 {strides = array<i32>} : memref<4x18x18xf32, #tpu.memory_space<vmem>>, vector<1x16x16xf32>,
    %c0_13 = arith.constant 0 : index
    %c2 = arith.constant 2 : index
    %15 = arith.index_cast %0 : i32 to index
    %c0_14 = arith.constant 0 : index
    %16 = vector.load %arg2[%c0_13, %c2, %15, %c0_14] : memref<1x4x16x16xf32, #tpu.memory_space<vmem>>, vector<1x1x16x16xf32>
    %17 = vector.shape_cast %16 : vector<1x1x16x16xf32> to vector<16x16xf32>
    %c2_15 = arith.constant 2 : index
    %c1_16 = arith.constant 1 : index
    %c1_17 = arith.constant 1 : index
    %18 = vector.load %arg6[%c2_15, %c1_16, %c1_17] : memref<4x18x18xf32, #tpu.memory_space<vmem>>, vector<1x16x16xf32>
    %19 = vector.shape_cast %18 : vector<1x16x16xf32> to vector<16x16xf32>
    %20 = vector.shape_cast %17 : vector<16x16xf32> to vector<1x16x16xf32>
    tpu.vector_store %arg6[%c2_15, %c1_16, %c1_17], %20 {strides = array<i32>} : memref<4x18x18xf32, #tpu.memory_space<vmem>>, vector<1x16x16xf32>,
    %c0_18 = arith.constant 0 : index
    %c3 = arith.constant 3 : index
    %21 = arith.index_cast %0 : i32 to index
    %c0_19 = arith.constant 0 : index
    %22 = vector.load %arg2[%c0_18, %c3, %21, %c0_19] : memref<1x4x16x16xf32, #tpu.memory_space<vmem>>, vector<1x1x16x16xf32>
    %23 = vector.shape_cast %22 : vector<1x1x16x16xf32> to vector<16x16xf32>
    %c3_20 = arith.constant 3 : index
    %c1_21 = arith.constant 1 : index
    %c1_22 = arith.constant 1 : index
    %24 = vector.load %arg6[%c3_20, %c1_21, %c1_22] : memref<4x18x18xf32, #tpu.memory_space<vmem>>, vector<1x16x16xf32>
    %25 = vector.shape_cast %24 : vector<1x16x16xf32> to vector<16x16xf32>
    %26 = vector.shape_cast %23 : vector<16x16xf32> to vector<1x16x16xf32>
    tpu.vector_store %arg6[%c3_20, %c1_21, %c1_22], %26 {strides = array<i32>} : memref<4x18x18xf32, #tpu.memory_space<vmem>>, vector<1x16x16xf32>,
    %c0_i32 = arith.constant 0 : i32
    %27 = arith.cmpi sgt, %0, %c0_i32 : i32
    %28 = arith.extui %27 : i1 to i32
    %c0_i32_23 = arith.constant 0 : i32
    %29 = arith.cmpi ne, %28, %c0_i32_23 : i32
    scf.if %29 {
      %c1_i32 = arith.constant 1 : i32
      %1335 = arith.subi %0, %c1_i32 : i32
      %c0_724 = arith.constant 0 : index
      %c0_725 = arith.constant 0 : index
      %1336 = arith.index_cast %1335 : i32 to index
      %c0_726 = arith.constant 0 : index
      %1337 = vector.load %arg2[%c0_724, %c0_725, %1336, %c0_726] : memref<1x4x16x16xf32, #tpu.memory_space<vmem>>, vector<1x1x1x16xf32>
      %1338 = vector.shape_cast %1337 : vector<1x1x1x16xf32> to vector<1x16xf32>
      %c0_727 = arith.constant 0 : index
      %c0_728 = arith.constant 0 : index
      %c1_729 = arith.constant 1 : index
      %1339 = vector.load %arg6[%c0_727, %c0_728, %c1_729] : memref<4x18x18xf32, #tpu.memory_space<vmem>>, vector<1x1x16xf32>
      %1340 = vector.shape_cast %1339 : vector<1x1x16xf32> to vector<1x16xf32>
      %1341 = vector.shape_cast %1338 : vector<1x16xf32> to vector<1x1x16xf32>
      tpu.vector_store %arg6[%c0_727, %c0_728, %c1_729], %1341 {strides = array<i32>} : memref<4x18x18xf32, #tpu.memory_space<vmem>>, vector<1x1x16xf32>,
      %c1_i32_730 = arith.constant 1 : i32
      %1342 = arith.subi %0, %c1_i32_730 : i32
      %c0_731 = arith.constant 0 : index
      %c1_732 = arith.constant 1 : index
      %1343 = arith.index_cast %1342 : i32 to index
      %c0_733 = arith.constant 0 : index
      %1344 = vector.load %arg2[%c0_731, %c1_732, %1343, %c0_733] : memref<1x4x16x16xf32, #tpu.memory_space<vmem>>, vector<1x1x1x16xf32>
      %1345 = vector.shape_cast %1344 : vector<1x1x1x16xf32> to vector<1x16xf32>
      %c1_734 = arith.constant 1 : index
      %c0_735 = arith.constant 0 : index
      %c1_736 = arith.constant 1 : index
      %1346 = vector.load %arg6[%c1_734, %c0_735, %c1_736] : memref<4x18x18xf32, #tpu.memory_space<vmem>>, vector<1x1x16xf32>
      %1347 = vector.shape_cast %1346 : vector<1x1x16xf32> to vector<1x16xf32>
      %1348 = vector.shape_cast %1345 : vector<1x16xf32> to vector<1x1x16xf32>
      tpu.vector_store %arg6[%c1_734, %c0_735, %c1_736], %1348 {strides = array<i32>} : memref<4x18x18xf32, #tpu.memory_space<vmem>>, vector<1x1x16xf32>,
      %c1_i32_737 = arith.constant 1 : i32
      %1349 = arith.subi %0, %c1_i32_737 : i32
      %c0_738 = arith.constant 0 : index
      %c2_739 = arith.constant 2 : index
      %1350 = arith.index_cast %1349 : i32 to index
      %c0_740 = arith.constant 0 : index
      %1351 = vector.load %arg2[%c0_738, %c2_739, %1350, %c0_740] : memref<1x4x16x16xf32, #tpu.memory_space<vmem>>, vector<1x1x1x16xf32>
      %1352 = vector.shape_cast %1351 : vector<1x1x1x16xf32> to vector<1x16xf32>
      %c2_741 = arith.constant 2 : index
      %c0_742 = arith.constant 0 : index
      %c1_743 = arith.constant 1 : index
      %1353 = vector.load %arg6[%c2_741, %c0_742, %c1_743] : memref<4x18x18xf32, #tpu.memory_space<vmem>>, vector<1x1x16xf32>
      %1354 = vector.shape_cast %1353 : vector<1x1x16xf32> to vector<1x16xf32>
      %1355 = vector.shape_cast %1352 : vector<1x16xf32> to vector<1x1x16xf32>
      tpu.vector_store %arg6[%c2_741, %c0_742, %c1_743], %1355 {strides = array<i32>} : memref<4x18x18xf32, #tpu.memory_space<vmem>>, vector<1x1x16xf32>,
      %c1_i32_744 = arith.constant 1 : i32
      %1356 = arith.subi %0, %c1_i32_744 : i32
      %c0_745 = arith.constant 0 : index
      %c3_746 = arith.constant 3 : index
      %1357 = arith.index_cast %1356 : i32 to index
      %c0_747 = arith.constant 0 : index
      %1358 = vector.load %arg2[%c0_745, %c3_746, %1357, %c0_747] : memref<1x4x16x16xf32, #tpu.memory_space<vmem>>, vector<1x1x1x16xf32>
      %1359 = vector.shape_cast %1358 : vector<1x1x1x16xf32> to vector<1x16xf32>
      %c3_748 = arith.constant 3 : index
      %c0_749 = arith.constant 0 : index
      %c1_750 = arith.constant 1 : index
      %1360 = vector.load %arg6[%c3_748, %c0_749, %c1_750] : memref<4x18x18xf32, #tpu.memory_space<vmem>>, vector<1x1x16xf32>
      %1361 = vector.shape_cast %1360 : vector<1x1x16xf32> to vector<1x16xf32>
      %1362 = vector.shape_cast %1359 : vector<1x16xf32> to vector<1x1x16xf32>
      tpu.vector_store %arg6[%c3_748, %c0_749, %c1_750], %1362 {strides = array<i32>} : memref<4x18x18xf32, #tpu.memory_space<vmem>>, vector<1x1x16xf32>,
    } else {
    }
    %c16_i32_24 = arith.constant 16 : i32
    %30 = arith.addi %0, %c16_i32_24 : i32
    %c16_i32_25 = arith.constant 16 : i32
    %31 = arith.cmpi slt, %30, %c16_i32_25 : i32
    %32 = arith.extui %31 : i1 to i32
    %c0_i32_26 = arith.constant 0 : i32
    %33 = arith.cmpi ne, %32, %c0_i32_26 : i32
    scf.if %33 {
      %c16_i32_724 = arith.constant 16 : i32
      %1335 = arith.addi %0, %c16_i32_724 : i32
      %c0_725 = arith.constant 0 : index
      %c0_726 = arith.constant 0 : index
      %1336 = arith.index_cast %1335 : i32 to index
      %c0_727 = arith.constant 0 : index
      %1337 = vector.load %arg2[%c0_725, %c0_726, %1336, %c0_727] : memref<1x4x16x16xf32, #tpu.memory_space<vmem>>, vector<1x1x1x16xf32>
      %1338 = vector.shape_cast %1337 : vector<1x1x1x16xf32> to vector<1x16xf32>
      %c0_728 = arith.constant 0 : index
      %c17_729 = arith.constant 17 : index
      %c1_730 = arith.constant 1 : index
      %1339 = vector.load %arg6[%c0_728, %c17_729, %c1_730] : memref<4x18x18xf32, #tpu.memory_space<vmem>>, vector<1x1x16xf32>
      %1340 = vector.shape_cast %1339 : vector<1x1x16xf32> to vector<1x16xf32>
      %1341 = vector.shape_cast %1338 : vector<1x16xf32> to vector<1x1x16xf32>
      tpu.vector_store %arg6[%c0_728, %c17_729, %c1_730], %1341 {strides = array<i32>} : memref<4x18x18xf32, #tpu.memory_space<vmem>>, vector<1x1x16xf32>,
      %c16_i32_731 = arith.constant 16 : i32
      %1342 = arith.addi %0, %c16_i32_731 : i32
      %c0_732 = arith.constant 0 : index
      %c1_733 = arith.constant 1 : index
      %1343 = arith.index_cast %1342 : i32 to index
      %c0_734 = arith.constant 0 : index
      %1344 = vector.load %arg2[%c0_732, %c1_733, %1343, %c0_734] : memref<1x4x16x16xf32, #tpu.memory_space<vmem>>, vector<1x1x1x16xf32>
      %1345 = vector.shape_cast %1344 : vector<1x1x1x16xf32> to vector<1x16xf32>
      %c1_735 = arith.constant 1 : index
      %c17_736 = arith.constant 17 : index
      %c1_737 = arith.constant 1 : index
      %1346 = vector.load %arg6[%c1_735, %c17_736, %c1_737] : memref<4x18x18xf32, #tpu.memory_space<vmem>>, vector<1x1x16xf32>
      %1347 = vector.shape_cast %1346 : vector<1x1x16xf32> to vector<1x16xf32>
      %1348 = vector.shape_cast %1345 : vector<1x16xf32> to vector<1x1x16xf32>
      tpu.vector_store %arg6[%c1_735, %c17_736, %c1_737], %1348 {strides = array<i32>} : memref<4x18x18xf32, #tpu.memory_space<vmem>>, vector<1x1x16xf32>,
      %c16_i32_738 = arith.constant 16 : i32
      %1349 = arith.addi %0, %c16_i32_738 : i32
      %c0_739 = arith.constant 0 : index
      %c2_740 = arith.constant 2 : index
      %1350 = arith.index_cast %1349 : i32 to index
      %c0_741 = arith.constant 0 : index
      %1351 = vector.load %arg2[%c0_739, %c2_740, %1350, %c0_741] : memref<1x4x16x16xf32, #tpu.memory_space<vmem>>, vector<1x1x1x16xf32>
      %1352 = vector.shape_cast %1351 : vector<1x1x1x16xf32> to vector<1x16xf32>
      %c2_742 = arith.constant 2 : index
      %c17_743 = arith.constant 17 : index
      %c1_744 = arith.constant 1 : index
      %1353 = vector.load %arg6[%c2_742, %c17_743, %c1_744] : memref<4x18x18xf32, #tpu.memory_space<vmem>>, vector<1x1x16xf32>
      %1354 = vector.shape_cast %1353 : vector<1x1x16xf32> to vector<1x16xf32>
      %1355 = vector.shape_cast %1352 : vector<1x16xf32> to vector<1x1x16xf32>
      tpu.vector_store %arg6[%c2_742, %c17_743, %c1_744], %1355 {strides = array<i32>} : memref<4x18x18xf32, #tpu.memory_space<vmem>>, vector<1x1x16xf32>,
      %c16_i32_745 = arith.constant 16 : i32
      %1356 = arith.addi %0, %c16_i32_745 : i32
      %c0_746 = arith.constant 0 : index
      %c3_747 = arith.constant 3 : index
      %1357 = arith.index_cast %1356 : i32 to index
      %c0_748 = arith.constant 0 : index
      %1358 = vector.load %arg2[%c0_746, %c3_747, %1357, %c0_748] : memref<1x4x16x16xf32, #tpu.memory_space<vmem>>, vector<1x1x1x16xf32>
      %1359 = vector.shape_cast %1358 : vector<1x1x1x16xf32> to vector<1x16xf32>
      %c3_749 = arith.constant 3 : index
      %c17_750 = arith.constant 17 : index
      %c1_751 = arith.constant 1 : index
      %1360 = vector.load %arg6[%c3_749, %c17_750, %c1_751] : memref<4x18x18xf32, #tpu.memory_space<vmem>>, vector<1x1x16xf32>
      %1361 = vector.shape_cast %1360 : vector<1x1x16xf32> to vector<1x16xf32>
      %1362 = vector.shape_cast %1359 : vector<1x16xf32> to vector<1x1x16xf32>
      tpu.vector_store %arg6[%c3_749, %c17_750, %c1_751], %1362 {strides = array<i32>} : memref<4x18x18xf32, #tpu.memory_space<vmem>>, vector<1x1x16xf32>,
    } else {
    }
    %c0_27 = arith.constant 0 : index
    %c0_28 = arith.constant 0 : index
    %c0_29 = arith.constant 0 : index
    %34 = vector.load %arg6[%c0_27, %c0_28, %c0_29] : memref<4x18x18xf32, #tpu.memory_space<vmem>>, vector<1x16x16xf32>
    %35 = vector.shape_cast %34 : vector<1x16x16xf32> to vector<16x16xf32>
    %c0_30 = arith.constant 0 : index
    %c0_31 = arith.constant 0 : index
    %36 = memref.load %arg3[%c0_30, %c0_31] : memref<8x36xf32, #tpu.memory_space<smem>>
    %37 = vector.broadcast %36 : f32 to vector<16x16xf32>
    %38 = arith.mulf %37, %35 : vector<16x16xf32>
    %c1_32 = arith.constant 1 : index
    %c0_33 = arith.constant 0 : index
    %39 = memref.load %arg3[%c1_32, %c0_33] : memref<8x36xf32, #tpu.memory_space<smem>>
    %40 = vector.broadcast %39 : f32 to vector<16x16xf32>
    %41 = arith.mulf %40, %35 : vector<16x16xf32>
    %c2_34 = arith.constant 2 : index
    %c0_35 = arith.constant 0 : index
    %42 = memref.load %arg3[%c2_34, %c0_35] : memref<8x36xf32, #tpu.memory_space<smem>>
    %43 = vector.broadcast %42 : f32 to vector<16x16xf32>
    %44 = arith.mulf %43, %35 : vector<16x16xf32>
    %c3_36 = arith.constant 3 : index
    %c0_37 = arith.constant 0 : index
    %45 = memref.load %arg3[%c3_36, %c0_37] : memref<8x36xf32, #tpu.memory_space<smem>>
    %46 = vector.broadcast %45 : f32 to vector<16x16xf32>
    %47 = arith.mulf %46, %35 : vector<16x16xf32>
    %c4 = arith.constant 4 : index
    %c0_38 = arith.constant 0 : index
    %48 = memref.load %arg3[%c4, %c0_38] : memref<8x36xf32, #tpu.memory_space<smem>>
    %49 = vector.broadcast %48 : f32 to vector<16x16xf32>
    %50 = arith.mulf %49, %35 : vector<16x16xf32>
    %c5 = arith.constant 5 : index
    %c0_39 = arith.constant 0 : index
    %51 = memref.load %arg3[%c5, %c0_39] : memref<8x36xf32, #tpu.memory_space<smem>>
    %52 = vector.broadcast %51 : f32 to vector<16x16xf32>
    %53 = arith.mulf %52, %35 : vector<16x16xf32>
    %c6 = arith.constant 6 : index
    %c0_40 = arith.constant 0 : index
    %54 = memref.load %arg3[%c6, %c0_40] : memref<8x36xf32, #tpu.memory_space<smem>>
    %55 = vector.broadcast %54 : f32 to vector<16x16xf32>
    %56 = arith.mulf %55, %35 : vector<16x16xf32>
    %c7 = arith.constant 7 : index
    %c0_41 = arith.constant 0 : index
    %57 = memref.load %arg3[%c7, %c0_41] : memref<8x36xf32, #tpu.memory_space<smem>>
    %58 = vector.broadcast %57 : f32 to vector<16x16xf32>
    %59 = arith.mulf %58, %35 : vector<16x16xf32>
    %c0_42 = arith.constant 0 : index
    %c0_43 = arith.constant 0 : index
    %c1_44 = arith.constant 1 : index
    %60 = vector.load %arg6[%c0_42, %c0_43, %c1_44] : memref<4x18x18xf32, #tpu.memory_space<vmem>>, vector<1x16x16xf32>
    %61 = vector.shape_cast %60 : vector<1x16x16xf32> to vector<16x16xf32>
    %c0_45 = arith.constant 0 : index
    %c1_46 = arith.constant 1 : index
    %62 = memref.load %arg3[%c0_45, %c1_46] : memref<8x36xf32, #tpu.memory_space<smem>>
    %63 = vector.broadcast %62 : f32 to vector<16x16xf32>
    %64 = arith.mulf %63, %61 : vector<16x16xf32>
    %65 = arith.addf %38, %64 : vector<16x16xf32>
    %c1_47 = arith.constant 1 : index
    %c1_48 = arith.constant 1 : index
    %66 = memref.load %arg3[%c1_47, %c1_48] : memref<8x36xf32, #tpu.memory_space<smem>>
    %67 = vector.broadcast %66 : f32 to vector<16x16xf32>
    %68 = arith.mulf %67, %61 : vector<16x16xf32>
    %69 = arith.addf %41, %68 : vector<16x16xf32>
    %c2_49 = arith.constant 2 : index
    %c1_50 = arith.constant 1 : index
    %70 = memref.load %arg3[%c2_49, %c1_50] : memref<8x36xf32, #tpu.memory_space<smem>>
    %71 = vector.broadcast %70 : f32 to vector<16x16xf32>
    %72 = arith.mulf %71, %61 : vector<16x16xf32>
    %73 = arith.addf %44, %72 : vector<16x16xf32>
    %c3_51 = arith.constant 3 : index
    %c1_52 = arith.constant 1 : index
    %74 = memref.load %arg3[%c3_51, %c1_52] : memref<8x36xf32, #tpu.memory_space<smem>>
    %75 = vector.broadcast %74 : f32 to vector<16x16xf32>
    %76 = arith.mulf %75, %61 : vector<16x16xf32>
    %77 = arith.addf %47, %76 : vector<16x16xf32>
    %c4_53 = arith.constant 4 : index
    %c1_54 = arith.constant 1 : index
    %78 = memref.load %arg3[%c4_53, %c1_54] : memref<8x36xf32, #tpu.memory_space<smem>>
    %79 = vector.broadcast %78 : f32 to vector<16x16xf32>
    %80 = arith.mulf %79, %61 : vector<16x16xf32>
    %81 = arith.addf %50, %80 : vector<16x16xf32>
    %c5_55 = arith.constant 5 : index
    %c1_56 = arith.constant 1 : index
    %82 = memref.load %arg3[%c5_55, %c1_56] : memref<8x36xf32, #tpu.memory_space<smem>>
    %83 = vector.broadcast %82 : f32 to vector<16x16xf32>
    %84 = arith.mulf %83, %61 : vector<16x16xf32>
    %85 = arith.addf %53, %84 : vector<16x16xf32>
    %c6_57 = arith.constant 6 : index
    %c1_58 = arith.constant 1 : index
    %86 = memref.load %arg3[%c6_57, %c1_58] : memref<8x36xf32, #tpu.memory_space<smem>>
    %87 = vector.broadcast %86 : f32 to vector<16x16xf32>
    %88 = arith.mulf %87, %61 : vector<16x16xf32>
    %89 = arith.addf %56, %88 : vector<16x16xf32>
    %c7_59 = arith.constant 7 : index
    %c1_60 = arith.constant 1 : index
    %90 = memref.load %arg3[%c7_59, %c1_60] : memref<8x36xf32, #tpu.memory_space<smem>>
    %91 = vector.broadcast %90 : f32 to vector<16x16xf32>
    %92 = arith.mulf %91, %61 : vector<16x16xf32>
    %93 = arith.addf %59, %92 : vector<16x16xf32>
    %c0_61 = arith.constant 0 : index
    %c0_62 = arith.constant 0 : index
    %c2_63 = arith.constant 2 : index
    %94 = vector.load %arg6[%c0_61, %c0_62, %c2_63] : memref<4x18x18xf32, #tpu.memory_space<vmem>>, vector<1x16x16xf32>
    %95 = vector.shape_cast %94 : vector<1x16x16xf32> to vector<16x16xf32>
    %c0_64 = arith.constant 0 : index
    %c2_65 = arith.constant 2 : index
    %96 = memref.load %arg3[%c0_64, %c2_65] : memref<8x36xf32, #tpu.memory_space<smem>>
    %97 = vector.broadcast %96 : f32 to vector<16x16xf32>
    %98 = arith.mulf %97, %95 : vector<16x16xf32>
    %99 = arith.addf %65, %98 : vector<16x16xf32>
    %c1_66 = arith.constant 1 : index
    %c2_67 = arith.constant 2 : index
    %100 = memref.load %arg3[%c1_66, %c2_67] : memref<8x36xf32, #tpu.memory_space<smem>>
    %101 = vector.broadcast %100 : f32 to vector<16x16xf32>
    %102 = arith.mulf %101, %95 : vector<16x16xf32>
    %103 = arith.addf %69, %102 : vector<16x16xf32>
    %c2_68 = arith.constant 2 : index
    %c2_69 = arith.constant 2 : index
    %104 = memref.load %arg3[%c2_68, %c2_69] : memref<8x36xf32, #tpu.memory_space<smem>>
    %105 = vector.broadcast %104 : f32 to vector<16x16xf32>
    %106 = arith.mulf %105, %95 : vector<16x16xf32>
    %107 = arith.addf %73, %106 : vector<16x16xf32>
    %c3_70 = arith.constant 3 : index
    %c2_71 = arith.constant 2 : index
    %108 = memref.load %arg3[%c3_70, %c2_71] : memref<8x36xf32, #tpu.memory_space<smem>>
    %109 = vector.broadcast %108 : f32 to vector<16x16xf32>
    %110 = arith.mulf %109, %95 : vector<16x16xf32>
    %111 = arith.addf %77, %110 : vector<16x16xf32>
    %c4_72 = arith.constant 4 : index
    %c2_73 = arith.constant 2 : index
    %112 = memref.load %arg3[%c4_72, %c2_73] : memref<8x36xf32, #tpu.memory_space<smem>>
    %113 = vector.broadcast %112 : f32 to vector<16x16xf32>
    %114 = arith.mulf %113, %95 : vector<16x16xf32>
    %115 = arith.addf %81, %114 : vector<16x16xf32>
    %c5_74 = arith.constant 5 : index
    %c2_75 = arith.constant 2 : index
    %116 = memref.load %arg3[%c5_74, %c2_75] : memref<8x36xf32, #tpu.memory_space<smem>>
    %117 = vector.broadcast %116 : f32 to vector<16x16xf32>
    %118 = arith.mulf %117, %95 : vector<16x16xf32>
    %119 = arith.addf %85, %118 : vector<16x16xf32>
    %c6_76 = arith.constant 6 : index
    %c2_77 = arith.constant 2 : index
    %120 = memref.load %arg3[%c6_76, %c2_77] : memref<8x36xf32, #tpu.memory_space<smem>>
    %121 = vector.broadcast %120 : f32 to vector<16x16xf32>
    %122 = arith.mulf %121, %95 : vector<16x16xf32>
    %123 = arith.addf %89, %122 : vector<16x16xf32>
    %c7_78 = arith.constant 7 : index
    %c2_79 = arith.constant 2 : index
    %124 = memref.load %arg3[%c7_78, %c2_79] : memref<8x36xf32, #tpu.memory_space<smem>>
    %125 = vector.broadcast %124 : f32 to vector<16x16xf32>
    %126 = arith.mulf %125, %95 : vector<16x16xf32>
    %127 = arith.addf %93, %126 : vector<16x16xf32>
    %c0_80 = arith.constant 0 : index
    %c1_81 = arith.constant 1 : index
    %c0_82 = arith.constant 0 : index
    %128 = vector.load %arg6[%c0_80, %c1_81, %c0_82] : memref<4x18x18xf32, #tpu.memory_space<vmem>>, vector<1x16x16xf32>
    %129 = vector.shape_cast %128 : vector<1x16x16xf32> to vector<16x16xf32>
    %c0_83 = arith.constant 0 : index
    %c3_84 = arith.constant 3 : index
    %130 = memref.load %arg3[%c0_83, %c3_84] : memref<8x36xf32, #tpu.memory_space<smem>>
    %131 = vector.broadcast %130 : f32 to vector<16x16xf32>
    %132 = arith.mulf %131, %129 : vector<16x16xf32>
    %133 = arith.addf %99, %132 : vector<16x16xf32>
    %c1_85 = arith.constant 1 : index
    %c3_86 = arith.constant 3 : index
    %134 = memref.load %arg3[%c1_85, %c3_86] : memref<8x36xf32, #tpu.memory_space<smem>>
    %135 = vector.broadcast %134 : f32 to vector<16x16xf32>
    %136 = arith.mulf %135, %129 : vector<16x16xf32>
    %137 = arith.addf %103, %136 : vector<16x16xf32>
    %c2_87 = arith.constant 2 : index
    %c3_88 = arith.constant 3 : index
    %138 = memref.load %arg3[%c2_87, %c3_88] : memref<8x36xf32, #tpu.memory_space<smem>>
    %139 = vector.broadcast %138 : f32 to vector<16x16xf32>
    %140 = arith.mulf %139, %129 : vector<16x16xf32>
    %141 = arith.addf %107, %140 : vector<16x16xf32>
    %c3_89 = arith.constant 3 : index
    %c3_90 = arith.constant 3 : index
    %142 = memref.load %arg3[%c3_89, %c3_90] : memref<8x36xf32, #tpu.memory_space<smem>>
    %143 = vector.broadcast %142 : f32 to vector<16x16xf32>
    %144 = arith.mulf %143, %129 : vector<16x16xf32>
    %145 = arith.addf %111, %144 : vector<16x16xf32>
    %c4_91 = arith.constant 4 : index
    %c3_92 = arith.constant 3 : index
    %146 = memref.load %arg3[%c4_91, %c3_92] : memref<8x36xf32, #tpu.memory_space<smem>>
    %147 = vector.broadcast %146 : f32 to vector<16x16xf32>
    %148 = arith.mulf %147, %129 : vector<16x16xf32>
    %149 = arith.addf %115, %148 : vector<16x16xf32>
    %c5_93 = arith.constant 5 : index
    %c3_94 = arith.constant 3 : index
    %150 = memref.load %arg3[%c5_93, %c3_94] : memref<8x36xf32, #tpu.memory_space<smem>>
    %151 = vector.broadcast %150 : f32 to vector<16x16xf32>
    %152 = arith.mulf %151, %129 : vector<16x16xf32>
    %153 = arith.addf %119, %152 : vector<16x16xf32>
    %c6_95 = arith.constant 6 : index
    %c3_96 = arith.constant 3 : index
    %154 = memref.load %arg3[%c6_95, %c3_96] : memref<8x36xf32, #tpu.memory_space<smem>>
    %155 = vector.broadcast %154 : f32 to vector<16x16xf32>
    %156 = arith.mulf %155, %129 : vector<16x16xf32>
    %157 = arith.addf %123, %156 : vector<16x16xf32>
    %c7_97 = arith.constant 7 : index
    %c3_98 = arith.constant 3 : index
    %158 = memref.load %arg3[%c7_97, %c3_98] : memref<8x36xf32, #tpu.memory_space<smem>>
    %159 = vector.broadcast %158 : f32 to vector<16x16xf32>
    %160 = arith.mulf %159, %129 : vector<16x16xf32>
    %161 = arith.addf %127, %160 : vector<16x16xf32>
    %c0_99 = arith.constant 0 : index
    %c1_100 = arith.constant 1 : index
    %c1_101 = arith.constant 1 : index
    %162 = vector.load %arg6[%c0_99, %c1_100, %c1_101] : memref<4x18x18xf32, #tpu.memory_space<vmem>>, vector<1x16x16xf32>
    %163 = vector.shape_cast %162 : vector<1x16x16xf32> to vector<16x16xf32>
    %c0_102 = arith.constant 0 : index
    %c4_103 = arith.constant 4 : index
    %164 = memref.load %arg3[%c0_102, %c4_103] : memref<8x36xf32, #tpu.memory_space<smem>>
    %165 = vector.broadcast %164 : f32 to vector<16x16xf32>
    %166 = arith.mulf %165, %163 : vector<16x16xf32>
    %167 = arith.addf %133, %166 : vector<16x16xf32>
    %c1_104 = arith.constant 1 : index
    %c4_105 = arith.constant 4 : index
    %168 = memref.load %arg3[%c1_104, %c4_105] : memref<8x36xf32, #tpu.memory_space<smem>>
    %169 = vector.broadcast %168 : f32 to vector<16x16xf32>
    %170 = arith.mulf %169, %163 : vector<16x16xf32>
    %171 = arith.addf %137, %170 : vector<16x16xf32>
    %c2_106 = arith.constant 2 : index
    %c4_107 = arith.constant 4 : index
    %172 = memref.load %arg3[%c2_106, %c4_107] : memref<8x36xf32, #tpu.memory_space<smem>>
    %173 = vector.broadcast %172 : f32 to vector<16x16xf32>
    %174 = arith.mulf %173, %163 : vector<16x16xf32>
    %175 = arith.addf %141, %174 : vector<16x16xf32>
    %c3_108 = arith.constant 3 : index
    %c4_109 = arith.constant 4 : index
    %176 = memref.load %arg3[%c3_108, %c4_109] : memref<8x36xf32, #tpu.memory_space<smem>>
    %177 = vector.broadcast %176 : f32 to vector<16x16xf32>
    %178 = arith.mulf %177, %163 : vector<16x16xf32>
    %179 = arith.addf %145, %178 : vector<16x16xf32>
    %c4_110 = arith.constant 4 : index
    %c4_111 = arith.constant 4 : index
    %180 = memref.load %arg3[%c4_110, %c4_111] : memref<8x36xf32, #tpu.memory_space<smem>>
    %181 = vector.broadcast %180 : f32 to vector<16x16xf32>
    %182 = arith.mulf %181, %163 : vector<16x16xf32>
    %183 = arith.addf %149, %182 : vector<16x16xf32>
    %c5_112 = arith.constant 5 : index
    %c4_113 = arith.constant 4 : index
    %184 = memref.load %arg3[%c5_112, %c4_113] : memref<8x36xf32, #tpu.memory_space<smem>>
    %185 = vector.broadcast %184 : f32 to vector<16x16xf32>
    %186 = arith.mulf %185, %163 : vector<16x16xf32>
    %187 = arith.addf %153, %186 : vector<16x16xf32>
    %c6_114 = arith.constant 6 : index
    %c4_115 = arith.constant 4 : index
    %188 = memref.load %arg3[%c6_114, %c4_115] : memref<8x36xf32, #tpu.memory_space<smem>>
    %189 = vector.broadcast %188 : f32 to vector<16x16xf32>
    %190 = arith.mulf %189, %163 : vector<16x16xf32>
    %191 = arith.addf %157, %190 : vector<16x16xf32>
    %c7_116 = arith.constant 7 : index
    %c4_117 = arith.constant 4 : index
    %192 = memref.load %arg3[%c7_116, %c4_117] : memref<8x36xf32, #tpu.memory_space<smem>>
    %193 = vector.broadcast %192 : f32 to vector<16x16xf32>
    %194 = arith.mulf %193, %163 : vector<16x16xf32>
    %195 = arith.addf %161, %194 : vector<16x16xf32>
    %c0_118 = arith.constant 0 : index
    %c1_119 = arith.constant 1 : index
    %c2_120 = arith.constant 2 : index
    %196 = vector.load %arg6[%c0_118, %c1_119, %c2_120] : memref<4x18x18xf32, #tpu.memory_space<vmem>>, vector<1x16x16xf32>
    %197 = vector.shape_cast %196 : vector<1x16x16xf32> to vector<16x16xf32>
    %c0_121 = arith.constant 0 : index
    %c5_122 = arith.constant 5 : index
    %198 = memref.load %arg3[%c0_121, %c5_122] : memref<8x36xf32, #tpu.memory_space<smem>>
    %199 = vector.broadcast %198 : f32 to vector<16x16xf32>
    %200 = arith.mulf %199, %197 : vector<16x16xf32>
    %201 = arith.addf %167, %200 : vector<16x16xf32>
    %c1_123 = arith.constant 1 : index
    %c5_124 = arith.constant 5 : index
    %202 = memref.load %arg3[%c1_123, %c5_124] : memref<8x36xf32, #tpu.memory_space<smem>>
    %203 = vector.broadcast %202 : f32 to vector<16x16xf32>
    %204 = arith.mulf %203, %197 : vector<16x16xf32>
    %205 = arith.addf %171, %204 : vector<16x16xf32>
    %c2_125 = arith.constant 2 : index
    %c5_126 = arith.constant 5 : index
    %206 = memref.load %arg3[%c2_125, %c5_126] : memref<8x36xf32, #tpu.memory_space<smem>>
    %207 = vector.broadcast %206 : f32 to vector<16x16xf32>
    %208 = arith.mulf %207, %197 : vector<16x16xf32>
    %209 = arith.addf %175, %208 : vector<16x16xf32>
    %c3_127 = arith.constant 3 : index
    %c5_128 = arith.constant 5 : index
    %210 = memref.load %arg3[%c3_127, %c5_128] : memref<8x36xf32, #tpu.memory_space<smem>>
    %211 = vector.broadcast %210 : f32 to vector<16x16xf32>
    %212 = arith.mulf %211, %197 : vector<16x16xf32>
    %213 = arith.addf %179, %212 : vector<16x16xf32>
    %c4_129 = arith.constant 4 : index
    %c5_130 = arith.constant 5 : index
    %214 = memref.load %arg3[%c4_129, %c5_130] : memref<8x36xf32, #tpu.memory_space<smem>>
    %215 = vector.broadcast %214 : f32 to vector<16x16xf32>
    %216 = arith.mulf %215, %197 : vector<16x16xf32>
    %217 = arith.addf %183, %216 : vector<16x16xf32>
    %c5_131 = arith.constant 5 : index
    %c5_132 = arith.constant 5 : index
    %218 = memref.load %arg3[%c5_131, %c5_132] : memref<8x36xf32, #tpu.memory_space<smem>>
    %219 = vector.broadcast %218 : f32 to vector<16x16xf32>
    %220 = arith.mulf %219, %197 : vector<16x16xf32>
    %221 = arith.addf %187, %220 : vector<16x16xf32>
    %c6_133 = arith.constant 6 : index
    %c5_134 = arith.constant 5 : index
    %222 = memref.load %arg3[%c6_133, %c5_134] : memref<8x36xf32, #tpu.memory_space<smem>>
    %223 = vector.broadcast %222 : f32 to vector<16x16xf32>
    %224 = arith.mulf %223, %197 : vector<16x16xf32>
    %225 = arith.addf %191, %224 : vector<16x16xf32>
    %c7_135 = arith.constant 7 : index
    %c5_136 = arith.constant 5 : index
    %226 = memref.load %arg3[%c7_135, %c5_136] : memref<8x36xf32, #tpu.memory_space<smem>>
    %227 = vector.broadcast %226 : f32 to vector<16x16xf32>
    %228 = arith.mulf %227, %197 : vector<16x16xf32>
    %229 = arith.addf %195, %228 : vector<16x16xf32>
    %c0_137 = arith.constant 0 : index
    %c2_138 = arith.constant 2 : index
    %c0_139 = arith.constant 0 : index
    %230 = vector.load %arg6[%c0_137, %c2_138, %c0_139] : memref<4x18x18xf32, #tpu.memory_space<vmem>>, vector<1x16x16xf32>
    %231 = vector.shape_cast %230 : vector<1x16x16xf32> to vector<16x16xf32>
    %c0_140 = arith.constant 0 : index
    %c6_141 = arith.constant 6 : index
    %232 = memref.load %arg3[%c0_140, %c6_141] : memref<8x36xf32, #tpu.memory_space<smem>>
    %233 = vector.broadcast %232 : f32 to vector<16x16xf32>
    %234 = arith.mulf %233, %231 : vector<16x16xf32>
    %235 = arith.addf %201, %234 : vector<16x16xf32>
    %c1_142 = arith.constant 1 : index
    %c6_143 = arith.constant 6 : index
    %236 = memref.load %arg3[%c1_142, %c6_143] : memref<8x36xf32, #tpu.memory_space<smem>>
    %237 = vector.broadcast %236 : f32 to vector<16x16xf32>
    %238 = arith.mulf %237, %231 : vector<16x16xf32>
    %239 = arith.addf %205, %238 : vector<16x16xf32>
    %c2_144 = arith.constant 2 : index
    %c6_145 = arith.constant 6 : index
    %240 = memref.load %arg3[%c2_144, %c6_145] : memref<8x36xf32, #tpu.memory_space<smem>>
    %241 = vector.broadcast %240 : f32 to vector<16x16xf32>
    %242 = arith.mulf %241, %231 : vector<16x16xf32>
    %243 = arith.addf %209, %242 : vector<16x16xf32>
    %c3_146 = arith.constant 3 : index
    %c6_147 = arith.constant 6 : index
    %244 = memref.load %arg3[%c3_146, %c6_147] : memref<8x36xf32, #tpu.memory_space<smem>>
    %245 = vector.broadcast %244 : f32 to vector<16x16xf32>
    %246 = arith.mulf %245, %231 : vector<16x16xf32>
    %247 = arith.addf %213, %246 : vector<16x16xf32>
    %c4_148 = arith.constant 4 : index
    %c6_149 = arith.constant 6 : index
    %248 = memref.load %arg3[%c4_148, %c6_149] : memref<8x36xf32, #tpu.memory_space<smem>>
    %249 = vector.broadcast %248 : f32 to vector<16x16xf32>
    %250 = arith.mulf %249, %231 : vector<16x16xf32>
    %251 = arith.addf %217, %250 : vector<16x16xf32>
    %c5_150 = arith.constant 5 : index
    %c6_151 = arith.constant 6 : index
    %252 = memref.load %arg3[%c5_150, %c6_151] : memref<8x36xf32, #tpu.memory_space<smem>>
    %253 = vector.broadcast %252 : f32 to vector<16x16xf32>
    %254 = arith.mulf %253, %231 : vector<16x16xf32>
    %255 = arith.addf %221, %254 : vector<16x16xf32>
    %c6_152 = arith.constant 6 : index
    %c6_153 = arith.constant 6 : index
    %256 = memref.load %arg3[%c6_152, %c6_153] : memref<8x36xf32, #tpu.memory_space<smem>>
    %257 = vector.broadcast %256 : f32 to vector<16x16xf32>
    %258 = arith.mulf %257, %231 : vector<16x16xf32>
    %259 = arith.addf %225, %258 : vector<16x16xf32>
    %c7_154 = arith.constant 7 : index
    %c6_155 = arith.constant 6 : index
    %260 = memref.load %arg3[%c7_154, %c6_155] : memref<8x36xf32, #tpu.memory_space<smem>>
    %261 = vector.broadcast %260 : f32 to vector<16x16xf32>
    %262 = arith.mulf %261, %231 : vector<16x16xf32>
    %263 = arith.addf %229, %262 : vector<16x16xf32>
    %c0_156 = arith.constant 0 : index
    %c2_157 = arith.constant 2 : index
    %c1_158 = arith.constant 1 : index
    %264 = vector.load %arg6[%c0_156, %c2_157, %c1_158] : memref<4x18x18xf32, #tpu.memory_space<vmem>>, vector<1x16x16xf32>
    %265 = vector.shape_cast %264 : vector<1x16x16xf32> to vector<16x16xf32>
    %c0_159 = arith.constant 0 : index
    %c7_160 = arith.constant 7 : index
    %266 = memref.load %arg3[%c0_159, %c7_160] : memref<8x36xf32, #tpu.memory_space<smem>>
    %267 = vector.broadcast %266 : f32 to vector<16x16xf32>
    %268 = arith.mulf %267, %265 : vector<16x16xf32>
    %269 = arith.addf %235, %268 : vector<16x16xf32>
    %c1_161 = arith.constant 1 : index
    %c7_162 = arith.constant 7 : index
    %270 = memref.load %arg3[%c1_161, %c7_162] : memref<8x36xf32, #tpu.memory_space<smem>>
    %271 = vector.broadcast %270 : f32 to vector<16x16xf32>
    %272 = arith.mulf %271, %265 : vector<16x16xf32>
    %273 = arith.addf %239, %272 : vector<16x16xf32>
    %c2_163 = arith.constant 2 : index
    %c7_164 = arith.constant 7 : index
    %274 = memref.load %arg3[%c2_163, %c7_164] : memref<8x36xf32, #tpu.memory_space<smem>>
    %275 = vector.broadcast %274 : f32 to vector<16x16xf32>
    %276 = arith.mulf %275, %265 : vector<16x16xf32>
    %277 = arith.addf %243, %276 : vector<16x16xf32>
    %c3_165 = arith.constant 3 : index
    %c7_166 = arith.constant 7 : index
    %278 = memref.load %arg3[%c3_165, %c7_166] : memref<8x36xf32, #tpu.memory_space<smem>>
    %279 = vector.broadcast %278 : f32 to vector<16x16xf32>
    %280 = arith.mulf %279, %265 : vector<16x16xf32>
    %281 = arith.addf %247, %280 : vector<16x16xf32>
    %c4_167 = arith.constant 4 : index
    %c7_168 = arith.constant 7 : index
    %282 = memref.load %arg3[%c4_167, %c7_168] : memref<8x36xf32, #tpu.memory_space<smem>>
    %283 = vector.broadcast %282 : f32 to vector<16x16xf32>
    %284 = arith.mulf %283, %265 : vector<16x16xf32>
    %285 = arith.addf %251, %284 : vector<16x16xf32>
    %c5_169 = arith.constant 5 : index
    %c7_170 = arith.constant 7 : index
    %286 = memref.load %arg3[%c5_169, %c7_170] : memref<8x36xf32, #tpu.memory_space<smem>>
    %287 = vector.broadcast %286 : f32 to vector<16x16xf32>
    %288 = arith.mulf %287, %265 : vector<16x16xf32>
    %289 = arith.addf %255, %288 : vector<16x16xf32>
    %c6_171 = arith.constant 6 : index
    %c7_172 = arith.constant 7 : index
    %290 = memref.load %arg3[%c6_171, %c7_172] : memref<8x36xf32, #tpu.memory_space<smem>>
    %291 = vector.broadcast %290 : f32 to vector<16x16xf32>
    %292 = arith.mulf %291, %265 : vector<16x16xf32>
    %293 = arith.addf %259, %292 : vector<16x16xf32>
    %c7_173 = arith.constant 7 : index
    %c7_174 = arith.constant 7 : index
    %294 = memref.load %arg3[%c7_173, %c7_174] : memref<8x36xf32, #tpu.memory_space<smem>>
    %295 = vector.broadcast %294 : f32 to vector<16x16xf32>
    %296 = arith.mulf %295, %265 : vector<16x16xf32>
    %297 = arith.addf %263, %296 : vector<16x16xf32>
    %c0_175 = arith.constant 0 : index
    %c2_176 = arith.constant 2 : index
    %c2_177 = arith.constant 2 : index
    %298 = vector.load %arg6[%c0_175, %c2_176, %c2_177] : memref<4x18x18xf32, #tpu.memory_space<vmem>>, vector<1x16x16xf32>
    %299 = vector.shape_cast %298 : vector<1x16x16xf32> to vector<16x16xf32>
    %c0_178 = arith.constant 0 : index
    %c8 = arith.constant 8 : index
    %300 = memref.load %arg3[%c0_178, %c8] : memref<8x36xf32, #tpu.memory_space<smem>>
    %301 = vector.broadcast %300 : f32 to vector<16x16xf32>
    %302 = arith.mulf %301, %299 : vector<16x16xf32>
    %303 = arith.addf %269, %302 : vector<16x16xf32>
    %c1_179 = arith.constant 1 : index
    %c8_180 = arith.constant 8 : index
    %304 = memref.load %arg3[%c1_179, %c8_180] : memref<8x36xf32, #tpu.memory_space<smem>>
    %305 = vector.broadcast %304 : f32 to vector<16x16xf32>
    %306 = arith.mulf %305, %299 : vector<16x16xf32>
    %307 = arith.addf %273, %306 : vector<16x16xf32>
    %c2_181 = arith.constant 2 : index
    %c8_182 = arith.constant 8 : index
    %308 = memref.load %arg3[%c2_181, %c8_182] : memref<8x36xf32, #tpu.memory_space<smem>>
    %309 = vector.broadcast %308 : f32 to vector<16x16xf32>
    %310 = arith.mulf %309, %299 : vector<16x16xf32>
    %311 = arith.addf %277, %310 : vector<16x16xf32>
    %c3_183 = arith.constant 3 : index
    %c8_184 = arith.constant 8 : index
    %312 = memref.load %arg3[%c3_183, %c8_184] : memref<8x36xf32, #tpu.memory_space<smem>>
    %313 = vector.broadcast %312 : f32 to vector<16x16xf32>
    %314 = arith.mulf %313, %299 : vector<16x16xf32>
    %315 = arith.addf %281, %314 : vector<16x16xf32>
    %c4_185 = arith.constant 4 : index
    %c8_186 = arith.constant 8 : index
    %316 = memref.load %arg3[%c4_185, %c8_186] : memref<8x36xf32, #tpu.memory_space<smem>>
    %317 = vector.broadcast %316 : f32 to vector<16x16xf32>
    %318 = arith.mulf %317, %299 : vector<16x16xf32>
    %319 = arith.addf %285, %318 : vector<16x16xf32>
    %c5_187 = arith.constant 5 : index
    %c8_188 = arith.constant 8 : index
    %320 = memref.load %arg3[%c5_187, %c8_188] : memref<8x36xf32, #tpu.memory_space<smem>>
    %321 = vector.broadcast %320 : f32 to vector<16x16xf32>
    %322 = arith.mulf %321, %299 : vector<16x16xf32>
    %323 = arith.addf %289, %322 : vector<16x16xf32>
    %c6_189 = arith.constant 6 : index
    %c8_190 = arith.constant 8 : index
    %324 = memref.load %arg3[%c6_189, %c8_190] : memref<8x36xf32, #tpu.memory_space<smem>>
    %325 = vector.broadcast %324 : f32 to vector<16x16xf32>
    %326 = arith.mulf %325, %299 : vector<16x16xf32>
    %327 = arith.addf %293, %326 : vector<16x16xf32>
    %c7_191 = arith.constant 7 : index
    %c8_192 = arith.constant 8 : index
    %328 = memref.load %arg3[%c7_191, %c8_192] : memref<8x36xf32, #tpu.memory_space<smem>>
    %329 = vector.broadcast %328 : f32 to vector<16x16xf32>
    %330 = arith.mulf %329, %299 : vector<16x16xf32>
    %331 = arith.addf %297, %330 : vector<16x16xf32>
    %c1_193 = arith.constant 1 : index
    %c0_194 = arith.constant 0 : index
    %c0_195 = arith.constant 0 : index
    %332 = vector.load %arg6[%c1_193, %c0_194, %c0_195] : memref<4x18x18xf32, #tpu.memory_space<vmem>>, vector<1x16x16xf32>
    %333 = vector.shape_cast %332 : vector<1x16x16xf32> to vector<16x16xf32>
    %c0_196 = arith.constant 0 : index
    %c9 = arith.constant 9 : index
    %334 = memref.load %arg3[%c0_196, %c9] : memref<8x36xf32, #tpu.memory_space<smem>>
    %335 = vector.broadcast %334 : f32 to vector<16x16xf32>
    %336 = arith.mulf %335, %333 : vector<16x16xf32>
    %337 = arith.addf %303, %336 : vector<16x16xf32>
    %c1_197 = arith.constant 1 : index
    %c9_198 = arith.constant 9 : index
    %338 = memref.load %arg3[%c1_197, %c9_198] : memref<8x36xf32, #tpu.memory_space<smem>>
    %339 = vector.broadcast %338 : f32 to vector<16x16xf32>
    %340 = arith.mulf %339, %333 : vector<16x16xf32>
    %341 = arith.addf %307, %340 : vector<16x16xf32>
    %c2_199 = arith.constant 2 : index
    %c9_200 = arith.constant 9 : index
    %342 = memref.load %arg3[%c2_199, %c9_200] : memref<8x36xf32, #tpu.memory_space<smem>>
    %343 = vector.broadcast %342 : f32 to vector<16x16xf32>
    %344 = arith.mulf %343, %333 : vector<16x16xf32>
    %345 = arith.addf %311, %344 : vector<16x16xf32>
    %c3_201 = arith.constant 3 : index
    %c9_202 = arith.constant 9 : index
    %346 = memref.load %arg3[%c3_201, %c9_202] : memref<8x36xf32, #tpu.memory_space<smem>>
    %347 = vector.broadcast %346 : f32 to vector<16x16xf32>
    %348 = arith.mulf %347, %333 : vector<16x16xf32>
    %349 = arith.addf %315, %348 : vector<16x16xf32>
    %c4_203 = arith.constant 4 : index
    %c9_204 = arith.constant 9 : index
    %350 = memref.load %arg3[%c4_203, %c9_204] : memref<8x36xf32, #tpu.memory_space<smem>>
    %351 = vector.broadcast %350 : f32 to vector<16x16xf32>
    %352 = arith.mulf %351, %333 : vector<16x16xf32>
    %353 = arith.addf %319, %352 : vector<16x16xf32>
    %c5_205 = arith.constant 5 : index
    %c9_206 = arith.constant 9 : index
    %354 = memref.load %arg3[%c5_205, %c9_206] : memref<8x36xf32, #tpu.memory_space<smem>>
    %355 = vector.broadcast %354 : f32 to vector<16x16xf32>
    %356 = arith.mulf %355, %333 : vector<16x16xf32>
    %357 = arith.addf %323, %356 : vector<16x16xf32>
    %c6_207 = arith.constant 6 : index
    %c9_208 = arith.constant 9 : index
    %358 = memref.load %arg3[%c6_207, %c9_208] : memref<8x36xf32, #tpu.memory_space<smem>>
    %359 = vector.broadcast %358 : f32 to vector<16x16xf32>
    %360 = arith.mulf %359, %333 : vector<16x16xf32>
    %361 = arith.addf %327, %360 : vector<16x16xf32>
    %c7_209 = arith.constant 7 : index
    %c9_210 = arith.constant 9 : index
    %362 = memref.load %arg3[%c7_209, %c9_210] : memref<8x36xf32, #tpu.memory_space<smem>>
    %363 = vector.broadcast %362 : f32 to vector<16x16xf32>
    %364 = arith.mulf %363, %333 : vector<16x16xf32>
    %365 = arith.addf %331, %364 : vector<16x16xf32>
    %c1_211 = arith.constant 1 : index
    %c0_212 = arith.constant 0 : index
    %c1_213 = arith.constant 1 : index
    %366 = vector.load %arg6[%c1_211, %c0_212, %c1_213] : memref<4x18x18xf32, #tpu.memory_space<vmem>>, vector<1x16x16xf32>
    %367 = vector.shape_cast %366 : vector<1x16x16xf32> to vector<16x16xf32>
    %c0_214 = arith.constant 0 : index
    %c10 = arith.constant 10 : index
    %368 = memref.load %arg3[%c0_214, %c10] : memref<8x36xf32, #tpu.memory_space<smem>>
    %369 = vector.broadcast %368 : f32 to vector<16x16xf32>
    %370 = arith.mulf %369, %367 : vector<16x16xf32>
    %371 = arith.addf %337, %370 : vector<16x16xf32>
    %c1_215 = arith.constant 1 : index
    %c10_216 = arith.constant 10 : index
    %372 = memref.load %arg3[%c1_215, %c10_216] : memref<8x36xf32, #tpu.memory_space<smem>>
    %373 = vector.broadcast %372 : f32 to vector<16x16xf32>
    %374 = arith.mulf %373, %367 : vector<16x16xf32>
    %375 = arith.addf %341, %374 : vector<16x16xf32>
    %c2_217 = arith.constant 2 : index
    %c10_218 = arith.constant 10 : index
    %376 = memref.load %arg3[%c2_217, %c10_218] : memref<8x36xf32, #tpu.memory_space<smem>>
    %377 = vector.broadcast %376 : f32 to vector<16x16xf32>
    %378 = arith.mulf %377, %367 : vector<16x16xf32>
    %379 = arith.addf %345, %378 : vector<16x16xf32>
    %c3_219 = arith.constant 3 : index
    %c10_220 = arith.constant 10 : index
    %380 = memref.load %arg3[%c3_219, %c10_220] : memref<8x36xf32, #tpu.memory_space<smem>>
    %381 = vector.broadcast %380 : f32 to vector<16x16xf32>
    %382 = arith.mulf %381, %367 : vector<16x16xf32>
    %383 = arith.addf %349, %382 : vector<16x16xf32>
    %c4_221 = arith.constant 4 : index
    %c10_222 = arith.constant 10 : index
    %384 = memref.load %arg3[%c4_221, %c10_222] : memref<8x36xf32, #tpu.memory_space<smem>>
    %385 = vector.broadcast %384 : f32 to vector<16x16xf32>
    %386 = arith.mulf %385, %367 : vector<16x16xf32>
    %387 = arith.addf %353, %386 : vector<16x16xf32>
    %c5_223 = arith.constant 5 : index
    %c10_224 = arith.constant 10 : index
    %388 = memref.load %arg3[%c5_223, %c10_224] : memref<8x36xf32, #tpu.memory_space<smem>>
    %389 = vector.broadcast %388 : f32 to vector<16x16xf32>
    %390 = arith.mulf %389, %367 : vector<16x16xf32>
    %391 = arith.addf %357, %390 : vector<16x16xf32>
    %c6_225 = arith.constant 6 : index
    %c10_226 = arith.constant 10 : index
    %392 = memref.load %arg3[%c6_225, %c10_226] : memref<8x36xf32, #tpu.memory_space<smem>>
    %393 = vector.broadcast %392 : f32 to vector<16x16xf32>
    %394 = arith.mulf %393, %367 : vector<16x16xf32>
    %395 = arith.addf %361, %394 : vector<16x16xf32>
    %c7_227 = arith.constant 7 : index
    %c10_228 = arith.constant 10 : index
    %396 = memref.load %arg3[%c7_227, %c10_228] : memref<8x36xf32, #tpu.memory_space<smem>>
    %397 = vector.broadcast %396 : f32 to vector<16x16xf32>
    %398 = arith.mulf %397, %367 : vector<16x16xf32>
    %399 = arith.addf %365, %398 : vector<16x16xf32>
    %c1_229 = arith.constant 1 : index
    %c0_230 = arith.constant 0 : index
    %c2_231 = arith.constant 2 : index
    %400 = vector.load %arg6[%c1_229, %c0_230, %c2_231] : memref<4x18x18xf32, #tpu.memory_space<vmem>>, vector<1x16x16xf32>
    %401 = vector.shape_cast %400 : vector<1x16x16xf32> to vector<16x16xf32>
    %c0_232 = arith.constant 0 : index
    %c11 = arith.constant 11 : index
    %402 = memref.load %arg3[%c0_232, %c11] : memref<8x36xf32, #tpu.memory_space<smem>>
    %403 = vector.broadcast %402 : f32 to vector<16x16xf32>
    %404 = arith.mulf %403, %401 : vector<16x16xf32>
    %405 = arith.addf %371, %404 : vector<16x16xf32>
    %c1_233 = arith.constant 1 : index
    %c11_234 = arith.constant 11 : index
    %406 = memref.load %arg3[%c1_233, %c11_234] : memref<8x36xf32, #tpu.memory_space<smem>>
    %407 = vector.broadcast %406 : f32 to vector<16x16xf32>
    %408 = arith.mulf %407, %401 : vector<16x16xf32>
    %409 = arith.addf %375, %408 : vector<16x16xf32>
    %c2_235 = arith.constant 2 : index
    %c11_236 = arith.constant 11 : index
    %410 = memref.load %arg3[%c2_235, %c11_236] : memref<8x36xf32, #tpu.memory_space<smem>>
    %411 = vector.broadcast %410 : f32 to vector<16x16xf32>
    %412 = arith.mulf %411, %401 : vector<16x16xf32>
    %413 = arith.addf %379, %412 : vector<16x16xf32>
    %c3_237 = arith.constant 3 : index
    %c11_238 = arith.constant 11 : index
    %414 = memref.load %arg3[%c3_237, %c11_238] : memref<8x36xf32, #tpu.memory_space<smem>>
    %415 = vector.broadcast %414 : f32 to vector<16x16xf32>
    %416 = arith.mulf %415, %401 : vector<16x16xf32>
    %417 = arith.addf %383, %416 : vector<16x16xf32>
    %c4_239 = arith.constant 4 : index
    %c11_240 = arith.constant 11 : index
    %418 = memref.load %arg3[%c4_239, %c11_240] : memref<8x36xf32, #tpu.memory_space<smem>>
    %419 = vector.broadcast %418 : f32 to vector<16x16xf32>
    %420 = arith.mulf %419, %401 : vector<16x16xf32>
    %421 = arith.addf %387, %420 : vector<16x16xf32>
    %c5_241 = arith.constant 5 : index
    %c11_242 = arith.constant 11 : index
    %422 = memref.load %arg3[%c5_241, %c11_242] : memref<8x36xf32, #tpu.memory_space<smem>>
    %423 = vector.broadcast %422 : f32 to vector<16x16xf32>
    %424 = arith.mulf %423, %401 : vector<16x16xf32>
    %425 = arith.addf %391, %424 : vector<16x16xf32>
    %c6_243 = arith.constant 6 : index
    %c11_244 = arith.constant 11 : index
    %426 = memref.load %arg3[%c6_243, %c11_244] : memref<8x36xf32, #tpu.memory_space<smem>>
    %427 = vector.broadcast %426 : f32 to vector<16x16xf32>
    %428 = arith.mulf %427, %401 : vector<16x16xf32>
    %429 = arith.addf %395, %428 : vector<16x16xf32>
    %c7_245 = arith.constant 7 : index
    %c11_246 = arith.constant 11 : index
    %430 = memref.load %arg3[%c7_245, %c11_246] : memref<8x36xf32, #tpu.memory_space<smem>>
    %431 = vector.broadcast %430 : f32 to vector<16x16xf32>
    %432 = arith.mulf %431, %401 : vector<16x16xf32>
    %433 = arith.addf %399, %432 : vector<16x16xf32>
    %c1_247 = arith.constant 1 : index
    %c1_248 = arith.constant 1 : index
    %c0_249 = arith.constant 0 : index
    %434 = vector.load %arg6[%c1_247, %c1_248, %c0_249] : memref<4x18x18xf32, #tpu.memory_space<vmem>>, vector<1x16x16xf32>
    %435 = vector.shape_cast %434 : vector<1x16x16xf32> to vector<16x16xf32>
    %c0_250 = arith.constant 0 : index
    %c12 = arith.constant 12 : index
    %436 = memref.load %arg3[%c0_250, %c12] : memref<8x36xf32, #tpu.memory_space<smem>>
    %437 = vector.broadcast %436 : f32 to vector<16x16xf32>
    %438 = arith.mulf %437, %435 : vector<16x16xf32>
    %439 = arith.addf %405, %438 : vector<16x16xf32>
    %c1_251 = arith.constant 1 : index
    %c12_252 = arith.constant 12 : index
    %440 = memref.load %arg3[%c1_251, %c12_252] : memref<8x36xf32, #tpu.memory_space<smem>>
    %441 = vector.broadcast %440 : f32 to vector<16x16xf32>
    %442 = arith.mulf %441, %435 : vector<16x16xf32>
    %443 = arith.addf %409, %442 : vector<16x16xf32>
    %c2_253 = arith.constant 2 : index
    %c12_254 = arith.constant 12 : index
    %444 = memref.load %arg3[%c2_253, %c12_254] : memref<8x36xf32, #tpu.memory_space<smem>>
    %445 = vector.broadcast %444 : f32 to vector<16x16xf32>
    %446 = arith.mulf %445, %435 : vector<16x16xf32>
    %447 = arith.addf %413, %446 : vector<16x16xf32>
    %c3_255 = arith.constant 3 : index
    %c12_256 = arith.constant 12 : index
    %448 = memref.load %arg3[%c3_255, %c12_256] : memref<8x36xf32, #tpu.memory_space<smem>>
    %449 = vector.broadcast %448 : f32 to vector<16x16xf32>
    %450 = arith.mulf %449, %435 : vector<16x16xf32>
    %451 = arith.addf %417, %450 : vector<16x16xf32>
    %c4_257 = arith.constant 4 : index
    %c12_258 = arith.constant 12 : index
    %452 = memref.load %arg3[%c4_257, %c12_258] : memref<8x36xf32, #tpu.memory_space<smem>>
    %453 = vector.broadcast %452 : f32 to vector<16x16xf32>
    %454 = arith.mulf %453, %435 : vector<16x16xf32>
    %455 = arith.addf %421, %454 : vector<16x16xf32>
    %c5_259 = arith.constant 5 : index
    %c12_260 = arith.constant 12 : index
    %456 = memref.load %arg3[%c5_259, %c12_260] : memref<8x36xf32, #tpu.memory_space<smem>>
    %457 = vector.broadcast %456 : f32 to vector<16x16xf32>
    %458 = arith.mulf %457, %435 : vector<16x16xf32>
    %459 = arith.addf %425, %458 : vector<16x16xf32>
    %c6_261 = arith.constant 6 : index
    %c12_262 = arith.constant 12 : index
    %460 = memref.load %arg3[%c6_261, %c12_262] : memref<8x36xf32, #tpu.memory_space<smem>>
    %461 = vector.broadcast %460 : f32 to vector<16x16xf32>
    %462 = arith.mulf %461, %435 : vector<16x16xf32>
    %463 = arith.addf %429, %462 : vector<16x16xf32>
    %c7_263 = arith.constant 7 : index
    %c12_264 = arith.constant 12 : index
    %464 = memref.load %arg3[%c7_263, %c12_264] : memref<8x36xf32, #tpu.memory_space<smem>>
    %465 = vector.broadcast %464 : f32 to vector<16x16xf32>
    %466 = arith.mulf %465, %435 : vector<16x16xf32>
    %467 = arith.addf %433, %466 : vector<16x16xf32>
    %c1_265 = arith.constant 1 : index
    %c1_266 = arith.constant 1 : index
    %c1_267 = arith.constant 1 : index
    %468 = vector.load %arg6[%c1_265, %c1_266, %c1_267] : memref<4x18x18xf32, #tpu.memory_space<vmem>>, vector<1x16x16xf32>
    %469 = vector.shape_cast %468 : vector<1x16x16xf32> to vector<16x16xf32>
    %c0_268 = arith.constant 0 : index
    %c13 = arith.constant 13 : index
    %470 = memref.load %arg3[%c0_268, %c13] : memref<8x36xf32, #tpu.memory_space<smem>>
    %471 = vector.broadcast %470 : f32 to vector<16x16xf32>
    %472 = arith.mulf %471, %469 : vector<16x16xf32>
    %473 = arith.addf %439, %472 : vector<16x16xf32>
    %c1_269 = arith.constant 1 : index
    %c13_270 = arith.constant 13 : index
    %474 = memref.load %arg3[%c1_269, %c13_270] : memref<8x36xf32, #tpu.memory_space<smem>>
    %475 = vector.broadcast %474 : f32 to vector<16x16xf32>
    %476 = arith.mulf %475, %469 : vector<16x16xf32>
    %477 = arith.addf %443, %476 : vector<16x16xf32>
    %c2_271 = arith.constant 2 : index
    %c13_272 = arith.constant 13 : index
    %478 = memref.load %arg3[%c2_271, %c13_272] : memref<8x36xf32, #tpu.memory_space<smem>>
    %479 = vector.broadcast %478 : f32 to vector<16x16xf32>
    %480 = arith.mulf %479, %469 : vector<16x16xf32>
    %481 = arith.addf %447, %480 : vector<16x16xf32>
    %c3_273 = arith.constant 3 : index
    %c13_274 = arith.constant 13 : index
    %482 = memref.load %arg3[%c3_273, %c13_274] : memref<8x36xf32, #tpu.memory_space<smem>>
    %483 = vector.broadcast %482 : f32 to vector<16x16xf32>
    %484 = arith.mulf %483, %469 : vector<16x16xf32>
    %485 = arith.addf %451, %484 : vector<16x16xf32>
    %c4_275 = arith.constant 4 : index
    %c13_276 = arith.constant 13 : index
    %486 = memref.load %arg3[%c4_275, %c13_276] : memref<8x36xf32, #tpu.memory_space<smem>>
    %487 = vector.broadcast %486 : f32 to vector<16x16xf32>
    %488 = arith.mulf %487, %469 : vector<16x16xf32>
    %489 = arith.addf %455, %488 : vector<16x16xf32>
    %c5_277 = arith.constant 5 : index
    %c13_278 = arith.constant 13 : index
    %490 = memref.load %arg3[%c5_277, %c13_278] : memref<8x36xf32, #tpu.memory_space<smem>>
    %491 = vector.broadcast %490 : f32 to vector<16x16xf32>
    %492 = arith.mulf %491, %469 : vector<16x16xf32>
    %493 = arith.addf %459, %492 : vector<16x16xf32>
    %c6_279 = arith.constant 6 : index
    %c13_280 = arith.constant 13 : index
    %494 = memref.load %arg3[%c6_279, %c13_280] : memref<8x36xf32, #tpu.memory_space<smem>>
    %495 = vector.broadcast %494 : f32 to vector<16x16xf32>
    %496 = arith.mulf %495, %469 : vector<16x16xf32>
    %497 = arith.addf %463, %496 : vector<16x16xf32>
    %c7_281 = arith.constant 7 : index
    %c13_282 = arith.constant 13 : index
    %498 = memref.load %arg3[%c7_281, %c13_282] : memref<8x36xf32, #tpu.memory_space<smem>>
    %499 = vector.broadcast %498 : f32 to vector<16x16xf32>
    %500 = arith.mulf %499, %469 : vector<16x16xf32>
    %501 = arith.addf %467, %500 : vector<16x16xf32>
    %c1_283 = arith.constant 1 : index
    %c1_284 = arith.constant 1 : index
    %c2_285 = arith.constant 2 : index
    %502 = vector.load %arg6[%c1_283, %c1_284, %c2_285] : memref<4x18x18xf32, #tpu.memory_space<vmem>>, vector<1x16x16xf32>
    %503 = vector.shape_cast %502 : vector<1x16x16xf32> to vector<16x16xf32>
    %c0_286 = arith.constant 0 : index
    %c14 = arith.constant 14 : index
    %504 = memref.load %arg3[%c0_286, %c14] : memref<8x36xf32, #tpu.memory_space<smem>>
    %505 = vector.broadcast %504 : f32 to vector<16x16xf32>
    %506 = arith.mulf %505, %503 : vector<16x16xf32>
    %507 = arith.addf %473, %506 : vector<16x16xf32>
    %c1_287 = arith.constant 1 : index
    %c14_288 = arith.constant 14 : index
    %508 = memref.load %arg3[%c1_287, %c14_288] : memref<8x36xf32, #tpu.memory_space<smem>>
    %509 = vector.broadcast %508 : f32 to vector<16x16xf32>
    %510 = arith.mulf %509, %503 : vector<16x16xf32>
    %511 = arith.addf %477, %510 : vector<16x16xf32>
    %c2_289 = arith.constant 2 : index
    %c14_290 = arith.constant 14 : index
    %512 = memref.load %arg3[%c2_289, %c14_290] : memref<8x36xf32, #tpu.memory_space<smem>>
    %513 = vector.broadcast %512 : f32 to vector<16x16xf32>
    %514 = arith.mulf %513, %503 : vector<16x16xf32>
    %515 = arith.addf %481, %514 : vector<16x16xf32>
    %c3_291 = arith.constant 3 : index
    %c14_292 = arith.constant 14 : index
    %516 = memref.load %arg3[%c3_291, %c14_292] : memref<8x36xf32, #tpu.memory_space<smem>>
    %517 = vector.broadcast %516 : f32 to vector<16x16xf32>
    %518 = arith.mulf %517, %503 : vector<16x16xf32>
    %519 = arith.addf %485, %518 : vector<16x16xf32>
    %c4_293 = arith.constant 4 : index
    %c14_294 = arith.constant 14 : index
    %520 = memref.load %arg3[%c4_293, %c14_294] : memref<8x36xf32, #tpu.memory_space<smem>>
    %521 = vector.broadcast %520 : f32 to vector<16x16xf32>
    %522 = arith.mulf %521, %503 : vector<16x16xf32>
    %523 = arith.addf %489, %522 : vector<16x16xf32>
    %c5_295 = arith.constant 5 : index
    %c14_296 = arith.constant 14 : index
    %524 = memref.load %arg3[%c5_295, %c14_296] : memref<8x36xf32, #tpu.memory_space<smem>>
    %525 = vector.broadcast %524 : f32 to vector<16x16xf32>
    %526 = arith.mulf %525, %503 : vector<16x16xf32>
    %527 = arith.addf %493, %526 : vector<16x16xf32>
    %c6_297 = arith.constant 6 : index
    %c14_298 = arith.constant 14 : index
    %528 = memref.load %arg3[%c6_297, %c14_298] : memref<8x36xf32, #tpu.memory_space<smem>>
    %529 = vector.broadcast %528 : f32 to vector<16x16xf32>
    %530 = arith.mulf %529, %503 : vector<16x16xf32>
    %531 = arith.addf %497, %530 : vector<16x16xf32>
    %c7_299 = arith.constant 7 : index
    %c14_300 = arith.constant 14 : index
    %532 = memref.load %arg3[%c7_299, %c14_300] : memref<8x36xf32, #tpu.memory_space<smem>>
    %533 = vector.broadcast %532 : f32 to vector<16x16xf32>
    %534 = arith.mulf %533, %503 : vector<16x16xf32>
    %535 = arith.addf %501, %534 : vector<16x16xf32>
    %c1_301 = arith.constant 1 : index
    %c2_302 = arith.constant 2 : index
    %c0_303 = arith.constant 0 : index
    %536 = vector.load %arg6[%c1_301, %c2_302, %c0_303] : memref<4x18x18xf32, #tpu.memory_space<vmem>>, vector<1x16x16xf32>
    %537 = vector.shape_cast %536 : vector<1x16x16xf32> to vector<16x16xf32>
    %c0_304 = arith.constant 0 : index
    %c15 = arith.constant 15 : index
    %538 = memref.load %arg3[%c0_304, %c15] : memref<8x36xf32, #tpu.memory_space<smem>>
    %539 = vector.broadcast %538 : f32 to vector<16x16xf32>
    %540 = arith.mulf %539, %537 : vector<16x16xf32>
    %541 = arith.addf %507, %540 : vector<16x16xf32>
    %c1_305 = arith.constant 1 : index
    %c15_306 = arith.constant 15 : index
    %542 = memref.load %arg3[%c1_305, %c15_306] : memref<8x36xf32, #tpu.memory_space<smem>>
    %543 = vector.broadcast %542 : f32 to vector<16x16xf32>
    %544 = arith.mulf %543, %537 : vector<16x16xf32>
    %545 = arith.addf %511, %544 : vector<16x16xf32>
    %c2_307 = arith.constant 2 : index
    %c15_308 = arith.constant 15 : index
    %546 = memref.load %arg3[%c2_307, %c15_308] : memref<8x36xf32, #tpu.memory_space<smem>>
    %547 = vector.broadcast %546 : f32 to vector<16x16xf32>
    %548 = arith.mulf %547, %537 : vector<16x16xf32>
    %549 = arith.addf %515, %548 : vector<16x16xf32>
    %c3_309 = arith.constant 3 : index
    %c15_310 = arith.constant 15 : index
    %550 = memref.load %arg3[%c3_309, %c15_310] : memref<8x36xf32, #tpu.memory_space<smem>>
    %551 = vector.broadcast %550 : f32 to vector<16x16xf32>
    %552 = arith.mulf %551, %537 : vector<16x16xf32>
    %553 = arith.addf %519, %552 : vector<16x16xf32>
    %c4_311 = arith.constant 4 : index
    %c15_312 = arith.constant 15 : index
    %554 = memref.load %arg3[%c4_311, %c15_312] : memref<8x36xf32, #tpu.memory_space<smem>>
    %555 = vector.broadcast %554 : f32 to vector<16x16xf32>
    %556 = arith.mulf %555, %537 : vector<16x16xf32>
    %557 = arith.addf %523, %556 : vector<16x16xf32>
    %c5_313 = arith.constant 5 : index
    %c15_314 = arith.constant 15 : index
    %558 = memref.load %arg3[%c5_313, %c15_314] : memref<8x36xf32, #tpu.memory_space<smem>>
    %559 = vector.broadcast %558 : f32 to vector<16x16xf32>
    %560 = arith.mulf %559, %537 : vector<16x16xf32>
    %561 = arith.addf %527, %560 : vector<16x16xf32>
    %c6_315 = arith.constant 6 : index
    %c15_316 = arith.constant 15 : index
    %562 = memref.load %arg3[%c6_315, %c15_316] : memref<8x36xf32, #tpu.memory_space<smem>>
    %563 = vector.broadcast %562 : f32 to vector<16x16xf32>
    %564 = arith.mulf %563, %537 : vector<16x16xf32>
    %565 = arith.addf %531, %564 : vector<16x16xf32>
    %c7_317 = arith.constant 7 : index
    %c15_318 = arith.constant 15 : index
    %566 = memref.load %arg3[%c7_317, %c15_318] : memref<8x36xf32, #tpu.memory_space<smem>>
    %567 = vector.broadcast %566 : f32 to vector<16x16xf32>
    %568 = arith.mulf %567, %537 : vector<16x16xf32>
    %569 = arith.addf %535, %568 : vector<16x16xf32>
    %c1_319 = arith.constant 1 : index
    %c2_320 = arith.constant 2 : index
    %c1_321 = arith.constant 1 : index
    %570 = vector.load %arg6[%c1_319, %c2_320, %c1_321] : memref<4x18x18xf32, #tpu.memory_space<vmem>>, vector<1x16x16xf32>
    %571 = vector.shape_cast %570 : vector<1x16x16xf32> to vector<16x16xf32>
    %c0_322 = arith.constant 0 : index
    %c16 = arith.constant 16 : index
    %572 = memref.load %arg3[%c0_322, %c16] : memref<8x36xf32, #tpu.memory_space<smem>>
    %573 = vector.broadcast %572 : f32 to vector<16x16xf32>
    %574 = arith.mulf %573, %571 : vector<16x16xf32>
    %575 = arith.addf %541, %574 : vector<16x16xf32>
    %c1_323 = arith.constant 1 : index
    %c16_324 = arith.constant 16 : index
    %576 = memref.load %arg3[%c1_323, %c16_324] : memref<8x36xf32, #tpu.memory_space<smem>>
    %577 = vector.broadcast %576 : f32 to vector<16x16xf32>
    %578 = arith.mulf %577, %571 : vector<16x16xf32>
    %579 = arith.addf %545, %578 : vector<16x16xf32>
    %c2_325 = arith.constant 2 : index
    %c16_326 = arith.constant 16 : index
    %580 = memref.load %arg3[%c2_325, %c16_326] : memref<8x36xf32, #tpu.memory_space<smem>>
    %581 = vector.broadcast %580 : f32 to vector<16x16xf32>
    %582 = arith.mulf %581, %571 : vector<16x16xf32>
    %583 = arith.addf %549, %582 : vector<16x16xf32>
    %c3_327 = arith.constant 3 : index
    %c16_328 = arith.constant 16 : index
    %584 = memref.load %arg3[%c3_327, %c16_328] : memref<8x36xf32, #tpu.memory_space<smem>>
    %585 = vector.broadcast %584 : f32 to vector<16x16xf32>
    %586 = arith.mulf %585, %571 : vector<16x16xf32>
    %587 = arith.addf %553, %586 : vector<16x16xf32>
    %c4_329 = arith.constant 4 : index
    %c16_330 = arith.constant 16 : index
    %588 = memref.load %arg3[%c4_329, %c16_330] : memref<8x36xf32, #tpu.memory_space<smem>>
    %589 = vector.broadcast %588 : f32 to vector<16x16xf32>
    %590 = arith.mulf %589, %571 : vector<16x16xf32>
    %591 = arith.addf %557, %590 : vector<16x16xf32>
    %c5_331 = arith.constant 5 : index
    %c16_332 = arith.constant 16 : index
    %592 = memref.load %arg3[%c5_331, %c16_332] : memref<8x36xf32, #tpu.memory_space<smem>>
    %593 = vector.broadcast %592 : f32 to vector<16x16xf32>
    %594 = arith.mulf %593, %571 : vector<16x16xf32>
    %595 = arith.addf %561, %594 : vector<16x16xf32>
    %c6_333 = arith.constant 6 : index
    %c16_334 = arith.constant 16 : index
    %596 = memref.load %arg3[%c6_333, %c16_334] : memref<8x36xf32, #tpu.memory_space<smem>>
    %597 = vector.broadcast %596 : f32 to vector<16x16xf32>
    %598 = arith.mulf %597, %571 : vector<16x16xf32>
    %599 = arith.addf %565, %598 : vector<16x16xf32>
    %c7_335 = arith.constant 7 : index
    %c16_336 = arith.constant 16 : index
    %600 = memref.load %arg3[%c7_335, %c16_336] : memref<8x36xf32, #tpu.memory_space<smem>>
    %601 = vector.broadcast %600 : f32 to vector<16x16xf32>
    %602 = arith.mulf %601, %571 : vector<16x16xf32>
    %603 = arith.addf %569, %602 : vector<16x16xf32>
    %c1_337 = arith.constant 1 : index
    %c2_338 = arith.constant 2 : index
    %c2_339 = arith.constant 2 : index
    %604 = vector.load %arg6[%c1_337, %c2_338, %c2_339] : memref<4x18x18xf32, #tpu.memory_space<vmem>>, vector<1x16x16xf32>
    %605 = vector.shape_cast %604 : vector<1x16x16xf32> to vector<16x16xf32>
    %c0_340 = arith.constant 0 : index
    %c17 = arith.constant 17 : index
    %606 = memref.load %arg3[%c0_340, %c17] : memref<8x36xf32, #tpu.memory_space<smem>>
    %607 = vector.broadcast %606 : f32 to vector<16x16xf32>
    %608 = arith.mulf %607, %605 : vector<16x16xf32>
    %609 = arith.addf %575, %608 : vector<16x16xf32>
    %c1_341 = arith.constant 1 : index
    %c17_342 = arith.constant 17 : index
    %610 = memref.load %arg3[%c1_341, %c17_342] : memref<8x36xf32, #tpu.memory_space<smem>>
    %611 = vector.broadcast %610 : f32 to vector<16x16xf32>
    %612 = arith.mulf %611, %605 : vector<16x16xf32>
    %613 = arith.addf %579, %612 : vector<16x16xf32>
    %c2_343 = arith.constant 2 : index
    %c17_344 = arith.constant 17 : index
    %614 = memref.load %arg3[%c2_343, %c17_344] : memref<8x36xf32, #tpu.memory_space<smem>>
    %615 = vector.broadcast %614 : f32 to vector<16x16xf32>
    %616 = arith.mulf %615, %605 : vector<16x16xf32>
    %617 = arith.addf %583, %616 : vector<16x16xf32>
    %c3_345 = arith.constant 3 : index
    %c17_346 = arith.constant 17 : index
    %618 = memref.load %arg3[%c3_345, %c17_346] : memref<8x36xf32, #tpu.memory_space<smem>>
    %619 = vector.broadcast %618 : f32 to vector<16x16xf32>
    %620 = arith.mulf %619, %605 : vector<16x16xf32>
    %621 = arith.addf %587, %620 : vector<16x16xf32>
    %c4_347 = arith.constant 4 : index
    %c17_348 = arith.constant 17 : index
    %622 = memref.load %arg3[%c4_347, %c17_348] : memref<8x36xf32, #tpu.memory_space<smem>>
    %623 = vector.broadcast %622 : f32 to vector<16x16xf32>
    %624 = arith.mulf %623, %605 : vector<16x16xf32>
    %625 = arith.addf %591, %624 : vector<16x16xf32>
    %c5_349 = arith.constant 5 : index
    %c17_350 = arith.constant 17 : index
    %626 = memref.load %arg3[%c5_349, %c17_350] : memref<8x36xf32, #tpu.memory_space<smem>>
    %627 = vector.broadcast %626 : f32 to vector<16x16xf32>
    %628 = arith.mulf %627, %605 : vector<16x16xf32>
    %629 = arith.addf %595, %628 : vector<16x16xf32>
    %c6_351 = arith.constant 6 : index
    %c17_352 = arith.constant 17 : index
    %630 = memref.load %arg3[%c6_351, %c17_352] : memref<8x36xf32, #tpu.memory_space<smem>>
    %631 = vector.broadcast %630 : f32 to vector<16x16xf32>
    %632 = arith.mulf %631, %605 : vector<16x16xf32>
    %633 = arith.addf %599, %632 : vector<16x16xf32>
    %c7_353 = arith.constant 7 : index
    %c17_354 = arith.constant 17 : index
    %634 = memref.load %arg3[%c7_353, %c17_354] : memref<8x36xf32, #tpu.memory_space<smem>>
    %635 = vector.broadcast %634 : f32 to vector<16x16xf32>
    %636 = arith.mulf %635, %605 : vector<16x16xf32>
    %637 = arith.addf %603, %636 : vector<16x16xf32>
    %c2_355 = arith.constant 2 : index
    %c0_356 = arith.constant 0 : index
    %c0_357 = arith.constant 0 : index
    %638 = vector.load %arg6[%c2_355, %c0_356, %c0_357] : memref<4x18x18xf32, #tpu.memory_space<vmem>>, vector<1x16x16xf32>
    %639 = vector.shape_cast %638 : vector<1x16x16xf32> to vector<16x16xf32>
    %c0_358 = arith.constant 0 : index
    %c18 = arith.constant 18 : index
    %640 = memref.load %arg3[%c0_358, %c18] : memref<8x36xf32, #tpu.memory_space<smem>>
    %641 = vector.broadcast %640 : f32 to vector<16x16xf32>
    %642 = arith.mulf %641, %639 : vector<16x16xf32>
    %643 = arith.addf %609, %642 : vector<16x16xf32>
    %c1_359 = arith.constant 1 : index
    %c18_360 = arith.constant 18 : index
    %644 = memref.load %arg3[%c1_359, %c18_360] : memref<8x36xf32, #tpu.memory_space<smem>>
    %645 = vector.broadcast %644 : f32 to vector<16x16xf32>
    %646 = arith.mulf %645, %639 : vector<16x16xf32>
    %647 = arith.addf %613, %646 : vector<16x16xf32>
    %c2_361 = arith.constant 2 : index
    %c18_362 = arith.constant 18 : index
    %648 = memref.load %arg3[%c2_361, %c18_362] : memref<8x36xf32, #tpu.memory_space<smem>>
    %649 = vector.broadcast %648 : f32 to vector<16x16xf32>
    %650 = arith.mulf %649, %639 : vector<16x16xf32>
    %651 = arith.addf %617, %650 : vector<16x16xf32>
    %c3_363 = arith.constant 3 : index
    %c18_364 = arith.constant 18 : index
    %652 = memref.load %arg3[%c3_363, %c18_364] : memref<8x36xf32, #tpu.memory_space<smem>>
    %653 = vector.broadcast %652 : f32 to vector<16x16xf32>
    %654 = arith.mulf %653, %639 : vector<16x16xf32>
    %655 = arith.addf %621, %654 : vector<16x16xf32>
    %c4_365 = arith.constant 4 : index
    %c18_366 = arith.constant 18 : index
    %656 = memref.load %arg3[%c4_365, %c18_366] : memref<8x36xf32, #tpu.memory_space<smem>>
    %657 = vector.broadcast %656 : f32 to vector<16x16xf32>
    %658 = arith.mulf %657, %639 : vector<16x16xf32>
    %659 = arith.addf %625, %658 : vector<16x16xf32>
    %c5_367 = arith.constant 5 : index
    %c18_368 = arith.constant 18 : index
    %660 = memref.load %arg3[%c5_367, %c18_368] : memref<8x36xf32, #tpu.memory_space<smem>>
    %661 = vector.broadcast %660 : f32 to vector<16x16xf32>
    %662 = arith.mulf %661, %639 : vector<16x16xf32>
    %663 = arith.addf %629, %662 : vector<16x16xf32>
    %c6_369 = arith.constant 6 : index
    %c18_370 = arith.constant 18 : index
    %664 = memref.load %arg3[%c6_369, %c18_370] : memref<8x36xf32, #tpu.memory_space<smem>>
    %665 = vector.broadcast %664 : f32 to vector<16x16xf32>
    %666 = arith.mulf %665, %639 : vector<16x16xf32>
    %667 = arith.addf %633, %666 : vector<16x16xf32>
    %c7_371 = arith.constant 7 : index
    %c18_372 = arith.constant 18 : index
    %668 = memref.load %arg3[%c7_371, %c18_372] : memref<8x36xf32, #tpu.memory_space<smem>>
    %669 = vector.broadcast %668 : f32 to vector<16x16xf32>
    %670 = arith.mulf %669, %639 : vector<16x16xf32>
    %671 = arith.addf %637, %670 : vector<16x16xf32>
    %c2_373 = arith.constant 2 : index
    %c0_374 = arith.constant 0 : index
    %c1_375 = arith.constant 1 : index
    %672 = vector.load %arg6[%c2_373, %c0_374, %c1_375] : memref<4x18x18xf32, #tpu.memory_space<vmem>>, vector<1x16x16xf32>
    %673 = vector.shape_cast %672 : vector<1x16x16xf32> to vector<16x16xf32>
    %c0_376 = arith.constant 0 : index
    %c19 = arith.constant 19 : index
    %674 = memref.load %arg3[%c0_376, %c19] : memref<8x36xf32, #tpu.memory_space<smem>>
    %675 = vector.broadcast %674 : f32 to vector<16x16xf32>
    %676 = arith.mulf %675, %673 : vector<16x16xf32>
    %677 = arith.addf %643, %676 : vector<16x16xf32>
    %c1_377 = arith.constant 1 : index
    %c19_378 = arith.constant 19 : index
    %678 = memref.load %arg3[%c1_377, %c19_378] : memref<8x36xf32, #tpu.memory_space<smem>>
    %679 = vector.broadcast %678 : f32 to vector<16x16xf32>
    %680 = arith.mulf %679, %673 : vector<16x16xf32>
    %681 = arith.addf %647, %680 : vector<16x16xf32>
    %c2_379 = arith.constant 2 : index
    %c19_380 = arith.constant 19 : index
    %682 = memref.load %arg3[%c2_379, %c19_380] : memref<8x36xf32, #tpu.memory_space<smem>>
    %683 = vector.broadcast %682 : f32 to vector<16x16xf32>
    %684 = arith.mulf %683, %673 : vector<16x16xf32>
    %685 = arith.addf %651, %684 : vector<16x16xf32>
    %c3_381 = arith.constant 3 : index
    %c19_382 = arith.constant 19 : index
    %686 = memref.load %arg3[%c3_381, %c19_382] : memref<8x36xf32, #tpu.memory_space<smem>>
    %687 = vector.broadcast %686 : f32 to vector<16x16xf32>
    %688 = arith.mulf %687, %673 : vector<16x16xf32>
    %689 = arith.addf %655, %688 : vector<16x16xf32>
    %c4_383 = arith.constant 4 : index
    %c19_384 = arith.constant 19 : index
    %690 = memref.load %arg3[%c4_383, %c19_384] : memref<8x36xf32, #tpu.memory_space<smem>>
    %691 = vector.broadcast %690 : f32 to vector<16x16xf32>
    %692 = arith.mulf %691, %673 : vector<16x16xf32>
    %693 = arith.addf %659, %692 : vector<16x16xf32>
    %c5_385 = arith.constant 5 : index
    %c19_386 = arith.constant 19 : index
    %694 = memref.load %arg3[%c5_385, %c19_386] : memref<8x36xf32, #tpu.memory_space<smem>>
    %695 = vector.broadcast %694 : f32 to vector<16x16xf32>
    %696 = arith.mulf %695, %673 : vector<16x16xf32>
    %697 = arith.addf %663, %696 : vector<16x16xf32>
    %c6_387 = arith.constant 6 : index
    %c19_388 = arith.constant 19 : index
    %698 = memref.load %arg3[%c6_387, %c19_388] : memref<8x36xf32, #tpu.memory_space<smem>>
    %699 = vector.broadcast %698 : f32 to vector<16x16xf32>
    %700 = arith.mulf %699, %673 : vector<16x16xf32>
    %701 = arith.addf %667, %700 : vector<16x16xf32>
    %c7_389 = arith.constant 7 : index
    %c19_390 = arith.constant 19 : index
    %702 = memref.load %arg3[%c7_389, %c19_390] : memref<8x36xf32, #tpu.memory_space<smem>>
    %703 = vector.broadcast %702 : f32 to vector<16x16xf32>
    %704 = arith.mulf %703, %673 : vector<16x16xf32>
    %705 = arith.addf %671, %704 : vector<16x16xf32>
    %c2_391 = arith.constant 2 : index
    %c0_392 = arith.constant 0 : index
    %c2_393 = arith.constant 2 : index
    %706 = vector.load %arg6[%c2_391, %c0_392, %c2_393] : memref<4x18x18xf32, #tpu.memory_space<vmem>>, vector<1x16x16xf32>
    %707 = vector.shape_cast %706 : vector<1x16x16xf32> to vector<16x16xf32>
    %c0_394 = arith.constant 0 : index
    %c20 = arith.constant 20 : index
    %708 = memref.load %arg3[%c0_394, %c20] : memref<8x36xf32, #tpu.memory_space<smem>>
    %709 = vector.broadcast %708 : f32 to vector<16x16xf32>
    %710 = arith.mulf %709, %707 : vector<16x16xf32>
    %711 = arith.addf %677, %710 : vector<16x16xf32>
    %c1_395 = arith.constant 1 : index
    %c20_396 = arith.constant 20 : index
    %712 = memref.load %arg3[%c1_395, %c20_396] : memref<8x36xf32, #tpu.memory_space<smem>>
    %713 = vector.broadcast %712 : f32 to vector<16x16xf32>
    %714 = arith.mulf %713, %707 : vector<16x16xf32>
    %715 = arith.addf %681, %714 : vector<16x16xf32>
    %c2_397 = arith.constant 2 : index
    %c20_398 = arith.constant 20 : index
    %716 = memref.load %arg3[%c2_397, %c20_398] : memref<8x36xf32, #tpu.memory_space<smem>>
    %717 = vector.broadcast %716 : f32 to vector<16x16xf32>
    %718 = arith.mulf %717, %707 : vector<16x16xf32>
    %719 = arith.addf %685, %718 : vector<16x16xf32>
    %c3_399 = arith.constant 3 : index
    %c20_400 = arith.constant 20 : index
    %720 = memref.load %arg3[%c3_399, %c20_400] : memref<8x36xf32, #tpu.memory_space<smem>>
    %721 = vector.broadcast %720 : f32 to vector<16x16xf32>
    %722 = arith.mulf %721, %707 : vector<16x16xf32>
    %723 = arith.addf %689, %722 : vector<16x16xf32>
    %c4_401 = arith.constant 4 : index
    %c20_402 = arith.constant 20 : index
    %724 = memref.load %arg3[%c4_401, %c20_402] : memref<8x36xf32, #tpu.memory_space<smem>>
    %725 = vector.broadcast %724 : f32 to vector<16x16xf32>
    %726 = arith.mulf %725, %707 : vector<16x16xf32>
    %727 = arith.addf %693, %726 : vector<16x16xf32>
    %c5_403 = arith.constant 5 : index
    %c20_404 = arith.constant 20 : index
    %728 = memref.load %arg3[%c5_403, %c20_404] : memref<8x36xf32, #tpu.memory_space<smem>>
    %729 = vector.broadcast %728 : f32 to vector<16x16xf32>
    %730 = arith.mulf %729, %707 : vector<16x16xf32>
    %731 = arith.addf %697, %730 : vector<16x16xf32>
    %c6_405 = arith.constant 6 : index
    %c20_406 = arith.constant 20 : index
    %732 = memref.load %arg3[%c6_405, %c20_406] : memref<8x36xf32, #tpu.memory_space<smem>>
    %733 = vector.broadcast %732 : f32 to vector<16x16xf32>
    %734 = arith.mulf %733, %707 : vector<16x16xf32>
    %735 = arith.addf %701, %734 : vector<16x16xf32>
    %c7_407 = arith.constant 7 : index
    %c20_408 = arith.constant 20 : index
    %736 = memref.load %arg3[%c7_407, %c20_408] : memref<8x36xf32, #tpu.memory_space<smem>>
    %737 = vector.broadcast %736 : f32 to vector<16x16xf32>
    %738 = arith.mulf %737, %707 : vector<16x16xf32>
    %739 = arith.addf %705, %738 : vector<16x16xf32>
    %c2_409 = arith.constant 2 : index
    %c1_410 = arith.constant 1 : index
    %c0_411 = arith.constant 0 : index
    %740 = vector.load %arg6[%c2_409, %c1_410, %c0_411] : memref<4x18x18xf32, #tpu.memory_space<vmem>>, vector<1x16x16xf32>
    %741 = vector.shape_cast %740 : vector<1x16x16xf32> to vector<16x16xf32>
    %c0_412 = arith.constant 0 : index
    %c21 = arith.constant 21 : index
    %742 = memref.load %arg3[%c0_412, %c21] : memref<8x36xf32, #tpu.memory_space<smem>>
    %743 = vector.broadcast %742 : f32 to vector<16x16xf32>
    %744 = arith.mulf %743, %741 : vector<16x16xf32>
    %745 = arith.addf %711, %744 : vector<16x16xf32>
    %c1_413 = arith.constant 1 : index
    %c21_414 = arith.constant 21 : index
    %746 = memref.load %arg3[%c1_413, %c21_414] : memref<8x36xf32, #tpu.memory_space<smem>>
    %747 = vector.broadcast %746 : f32 to vector<16x16xf32>
    %748 = arith.mulf %747, %741 : vector<16x16xf32>
    %749 = arith.addf %715, %748 : vector<16x16xf32>
    %c2_415 = arith.constant 2 : index
    %c21_416 = arith.constant 21 : index
    %750 = memref.load %arg3[%c2_415, %c21_416] : memref<8x36xf32, #tpu.memory_space<smem>>
    %751 = vector.broadcast %750 : f32 to vector<16x16xf32>
    %752 = arith.mulf %751, %741 : vector<16x16xf32>
    %753 = arith.addf %719, %752 : vector<16x16xf32>
    %c3_417 = arith.constant 3 : index
    %c21_418 = arith.constant 21 : index
    %754 = memref.load %arg3[%c3_417, %c21_418] : memref<8x36xf32, #tpu.memory_space<smem>>
    %755 = vector.broadcast %754 : f32 to vector<16x16xf32>
    %756 = arith.mulf %755, %741 : vector<16x16xf32>
    %757 = arith.addf %723, %756 : vector<16x16xf32>
    %c4_419 = arith.constant 4 : index
    %c21_420 = arith.constant 21 : index
    %758 = memref.load %arg3[%c4_419, %c21_420] : memref<8x36xf32, #tpu.memory_space<smem>>
    %759 = vector.broadcast %758 : f32 to vector<16x16xf32>
    %760 = arith.mulf %759, %741 : vector<16x16xf32>
    %761 = arith.addf %727, %760 : vector<16x16xf32>
    %c5_421 = arith.constant 5 : index
    %c21_422 = arith.constant 21 : index
    %762 = memref.load %arg3[%c5_421, %c21_422] : memref<8x36xf32, #tpu.memory_space<smem>>
    %763 = vector.broadcast %762 : f32 to vector<16x16xf32>
    %764 = arith.mulf %763, %741 : vector<16x16xf32>
    %765 = arith.addf %731, %764 : vector<16x16xf32>
    %c6_423 = arith.constant 6 : index
    %c21_424 = arith.constant 21 : index
    %766 = memref.load %arg3[%c6_423, %c21_424] : memref<8x36xf32, #tpu.memory_space<smem>>
    %767 = vector.broadcast %766 : f32 to vector<16x16xf32>
    %768 = arith.mulf %767, %741 : vector<16x16xf32>
    %769 = arith.addf %735, %768 : vector<16x16xf32>
    %c7_425 = arith.constant 7 : index
    %c21_426 = arith.constant 21 : index
    %770 = memref.load %arg3[%c7_425, %c21_426] : memref<8x36xf32, #tpu.memory_space<smem>>
    %771 = vector.broadcast %770 : f32 to vector<16x16xf32>
    %772 = arith.mulf %771, %741 : vector<16x16xf32>
    %773 = arith.addf %739, %772 : vector<16x16xf32>
    %c2_427 = arith.constant 2 : index
    %c1_428 = arith.constant 1 : index
    %c1_429 = arith.constant 1 : index
    %774 = vector.load %arg6[%c2_427, %c1_428, %c1_429] : memref<4x18x18xf32, #tpu.memory_space<vmem>>, vector<1x16x16xf32>
    %775 = vector.shape_cast %774 : vector<1x16x16xf32> to vector<16x16xf32>
    %c0_430 = arith.constant 0 : index
    %c22 = arith.constant 22 : index
    %776 = memref.load %arg3[%c0_430, %c22] : memref<8x36xf32, #tpu.memory_space<smem>>
    %777 = vector.broadcast %776 : f32 to vector<16x16xf32>
    %778 = arith.mulf %777, %775 : vector<16x16xf32>
    %779 = arith.addf %745, %778 : vector<16x16xf32>
    %c1_431 = arith.constant 1 : index
    %c22_432 = arith.constant 22 : index
    %780 = memref.load %arg3[%c1_431, %c22_432] : memref<8x36xf32, #tpu.memory_space<smem>>
    %781 = vector.broadcast %780 : f32 to vector<16x16xf32>
    %782 = arith.mulf %781, %775 : vector<16x16xf32>
    %783 = arith.addf %749, %782 : vector<16x16xf32>
    %c2_433 = arith.constant 2 : index
    %c22_434 = arith.constant 22 : index
    %784 = memref.load %arg3[%c2_433, %c22_434] : memref<8x36xf32, #tpu.memory_space<smem>>
    %785 = vector.broadcast %784 : f32 to vector<16x16xf32>
    %786 = arith.mulf %785, %775 : vector<16x16xf32>
    %787 = arith.addf %753, %786 : vector<16x16xf32>
    %c3_435 = arith.constant 3 : index
    %c22_436 = arith.constant 22 : index
    %788 = memref.load %arg3[%c3_435, %c22_436] : memref<8x36xf32, #tpu.memory_space<smem>>
    %789 = vector.broadcast %788 : f32 to vector<16x16xf32>
    %790 = arith.mulf %789, %775 : vector<16x16xf32>
    %791 = arith.addf %757, %790 : vector<16x16xf32>
    %c4_437 = arith.constant 4 : index
    %c22_438 = arith.constant 22 : index
    %792 = memref.load %arg3[%c4_437, %c22_438] : memref<8x36xf32, #tpu.memory_space<smem>>
    %793 = vector.broadcast %792 : f32 to vector<16x16xf32>
    %794 = arith.mulf %793, %775 : vector<16x16xf32>
    %795 = arith.addf %761, %794 : vector<16x16xf32>
    %c5_439 = arith.constant 5 : index
    %c22_440 = arith.constant 22 : index
    %796 = memref.load %arg3[%c5_439, %c22_440] : memref<8x36xf32, #tpu.memory_space<smem>>
    %797 = vector.broadcast %796 : f32 to vector<16x16xf32>
    %798 = arith.mulf %797, %775 : vector<16x16xf32>
    %799 = arith.addf %765, %798 : vector<16x16xf32>
    %c6_441 = arith.constant 6 : index
    %c22_442 = arith.constant 22 : index
    %800 = memref.load %arg3[%c6_441, %c22_442] : memref<8x36xf32, #tpu.memory_space<smem>>
    %801 = vector.broadcast %800 : f32 to vector<16x16xf32>
    %802 = arith.mulf %801, %775 : vector<16x16xf32>
    %803 = arith.addf %769, %802 : vector<16x16xf32>
    %c7_443 = arith.constant 7 : index
    %c22_444 = arith.constant 22 : index
    %804 = memref.load %arg3[%c7_443, %c22_444] : memref<8x36xf32, #tpu.memory_space<smem>>
    %805 = vector.broadcast %804 : f32 to vector<16x16xf32>
    %806 = arith.mulf %805, %775 : vector<16x16xf32>
    %807 = arith.addf %773, %806 : vector<16x16xf32>
    %c2_445 = arith.constant 2 : index
    %c1_446 = arith.constant 1 : index
    %c2_447 = arith.constant 2 : index
    %808 = vector.load %arg6[%c2_445, %c1_446, %c2_447] : memref<4x18x18xf32, #tpu.memory_space<vmem>>, vector<1x16x16xf32>
    %809 = vector.shape_cast %808 : vector<1x16x16xf32> to vector<16x16xf32>
    %c0_448 = arith.constant 0 : index
    %c23 = arith.constant 23 : index
    %810 = memref.load %arg3[%c0_448, %c23] : memref<8x36xf32, #tpu.memory_space<smem>>
    %811 = vector.broadcast %810 : f32 to vector<16x16xf32>
    %812 = arith.mulf %811, %809 : vector<16x16xf32>
    %813 = arith.addf %779, %812 : vector<16x16xf32>
    %c1_449 = arith.constant 1 : index
    %c23_450 = arith.constant 23 : index
    %814 = memref.load %arg3[%c1_449, %c23_450] : memref<8x36xf32, #tpu.memory_space<smem>>
    %815 = vector.broadcast %814 : f32 to vector<16x16xf32>
    %816 = arith.mulf %815, %809 : vector<16x16xf32>
    %817 = arith.addf %783, %816 : vector<16x16xf32>
    %c2_451 = arith.constant 2 : index
    %c23_452 = arith.constant 23 : index
    %818 = memref.load %arg3[%c2_451, %c23_452] : memref<8x36xf32, #tpu.memory_space<smem>>
    %819 = vector.broadcast %818 : f32 to vector<16x16xf32>
    %820 = arith.mulf %819, %809 : vector<16x16xf32>
    %821 = arith.addf %787, %820 : vector<16x16xf32>
    %c3_453 = arith.constant 3 : index
    %c23_454 = arith.constant 23 : index
    %822 = memref.load %arg3[%c3_453, %c23_454] : memref<8x36xf32, #tpu.memory_space<smem>>
    %823 = vector.broadcast %822 : f32 to vector<16x16xf32>
    %824 = arith.mulf %823, %809 : vector<16x16xf32>
    %825 = arith.addf %791, %824 : vector<16x16xf32>
    %c4_455 = arith.constant 4 : index
    %c23_456 = arith.constant 23 : index
    %826 = memref.load %arg3[%c4_455, %c23_456] : memref<8x36xf32, #tpu.memory_space<smem>>
    %827 = vector.broadcast %826 : f32 to vector<16x16xf32>
    %828 = arith.mulf %827, %809 : vector<16x16xf32>
    %829 = arith.addf %795, %828 : vector<16x16xf32>
    %c5_457 = arith.constant 5 : index
    %c23_458 = arith.constant 23 : index
    %830 = memref.load %arg3[%c5_457, %c23_458] : memref<8x36xf32, #tpu.memory_space<smem>>
    %831 = vector.broadcast %830 : f32 to vector<16x16xf32>
    %832 = arith.mulf %831, %809 : vector<16x16xf32>
    %833 = arith.addf %799, %832 : vector<16x16xf32>
    %c6_459 = arith.constant 6 : index
    %c23_460 = arith.constant 23 : index
    %834 = memref.load %arg3[%c6_459, %c23_460] : memref<8x36xf32, #tpu.memory_space<smem>>
    %835 = vector.broadcast %834 : f32 to vector<16x16xf32>
    %836 = arith.mulf %835, %809 : vector<16x16xf32>
    %837 = arith.addf %803, %836 : vector<16x16xf32>
    %c7_461 = arith.constant 7 : index
    %c23_462 = arith.constant 23 : index
    %838 = memref.load %arg3[%c7_461, %c23_462] : memref<8x36xf32, #tpu.memory_space<smem>>
    %839 = vector.broadcast %838 : f32 to vector<16x16xf32>
    %840 = arith.mulf %839, %809 : vector<16x16xf32>
    %841 = arith.addf %807, %840 : vector<16x16xf32>
    %c2_463 = arith.constant 2 : index
    %c2_464 = arith.constant 2 : index
    %c0_465 = arith.constant 0 : index
    %842 = vector.load %arg6[%c2_463, %c2_464, %c0_465] : memref<4x18x18xf32, #tpu.memory_space<vmem>>, vector<1x16x16xf32>
    %843 = vector.shape_cast %842 : vector<1x16x16xf32> to vector<16x16xf32>
    %c0_466 = arith.constant 0 : index
    %c24 = arith.constant 24 : index
    %844 = memref.load %arg3[%c0_466, %c24] : memref<8x36xf32, #tpu.memory_space<smem>>
    %845 = vector.broadcast %844 : f32 to vector<16x16xf32>
    %846 = arith.mulf %845, %843 : vector<16x16xf32>
    %847 = arith.addf %813, %846 : vector<16x16xf32>
    %c1_467 = arith.constant 1 : index
    %c24_468 = arith.constant 24 : index
    %848 = memref.load %arg3[%c1_467, %c24_468] : memref<8x36xf32, #tpu.memory_space<smem>>
    %849 = vector.broadcast %848 : f32 to vector<16x16xf32>
    %850 = arith.mulf %849, %843 : vector<16x16xf32>
    %851 = arith.addf %817, %850 : vector<16x16xf32>
    %c2_469 = arith.constant 2 : index
    %c24_470 = arith.constant 24 : index
    %852 = memref.load %arg3[%c2_469, %c24_470] : memref<8x36xf32, #tpu.memory_space<smem>>
    %853 = vector.broadcast %852 : f32 to vector<16x16xf32>
    %854 = arith.mulf %853, %843 : vector<16x16xf32>
    %855 = arith.addf %821, %854 : vector<16x16xf32>
    %c3_471 = arith.constant 3 : index
    %c24_472 = arith.constant 24 : index
    %856 = memref.load %arg3[%c3_471, %c24_472] : memref<8x36xf32, #tpu.memory_space<smem>>
    %857 = vector.broadcast %856 : f32 to vector<16x16xf32>
    %858 = arith.mulf %857, %843 : vector<16x16xf32>
    %859 = arith.addf %825, %858 : vector<16x16xf32>
    %c4_473 = arith.constant 4 : index
    %c24_474 = arith.constant 24 : index
    %860 = memref.load %arg3[%c4_473, %c24_474] : memref<8x36xf32, #tpu.memory_space<smem>>
    %861 = vector.broadcast %860 : f32 to vector<16x16xf32>
    %862 = arith.mulf %861, %843 : vector<16x16xf32>
    %863 = arith.addf %829, %862 : vector<16x16xf32>
    %c5_475 = arith.constant 5 : index
    %c24_476 = arith.constant 24 : index
    %864 = memref.load %arg3[%c5_475, %c24_476] : memref<8x36xf32, #tpu.memory_space<smem>>
    %865 = vector.broadcast %864 : f32 to vector<16x16xf32>
    %866 = arith.mulf %865, %843 : vector<16x16xf32>
    %867 = arith.addf %833, %866 : vector<16x16xf32>
    %c6_477 = arith.constant 6 : index
    %c24_478 = arith.constant 24 : index
    %868 = memref.load %arg3[%c6_477, %c24_478] : memref<8x36xf32, #tpu.memory_space<smem>>
    %869 = vector.broadcast %868 : f32 to vector<16x16xf32>
    %870 = arith.mulf %869, %843 : vector<16x16xf32>
    %871 = arith.addf %837, %870 : vector<16x16xf32>
    %c7_479 = arith.constant 7 : index
    %c24_480 = arith.constant 24 : index
    %872 = memref.load %arg3[%c7_479, %c24_480] : memref<8x36xf32, #tpu.memory_space<smem>>
    %873 = vector.broadcast %872 : f32 to vector<16x16xf32>
    %874 = arith.mulf %873, %843 : vector<16x16xf32>
    %875 = arith.addf %841, %874 : vector<16x16xf32>
    %c2_481 = arith.constant 2 : index
    %c2_482 = arith.constant 2 : index
    %c1_483 = arith.constant 1 : index
    %876 = vector.load %arg6[%c2_481, %c2_482, %c1_483] : memref<4x18x18xf32, #tpu.memory_space<vmem>>, vector<1x16x16xf32>
    %877 = vector.shape_cast %876 : vector<1x16x16xf32> to vector<16x16xf32>
    %c0_484 = arith.constant 0 : index
    %c25 = arith.constant 25 : index
    %878 = memref.load %arg3[%c0_484, %c25] : memref<8x36xf32, #tpu.memory_space<smem>>
    %879 = vector.broadcast %878 : f32 to vector<16x16xf32>
    %880 = arith.mulf %879, %877 : vector<16x16xf32>
    %881 = arith.addf %847, %880 : vector<16x16xf32>
    %c1_485 = arith.constant 1 : index
    %c25_486 = arith.constant 25 : index
    %882 = memref.load %arg3[%c1_485, %c25_486] : memref<8x36xf32, #tpu.memory_space<smem>>
    %883 = vector.broadcast %882 : f32 to vector<16x16xf32>
    %884 = arith.mulf %883, %877 : vector<16x16xf32>
    %885 = arith.addf %851, %884 : vector<16x16xf32>
    %c2_487 = arith.constant 2 : index
    %c25_488 = arith.constant 25 : index
    %886 = memref.load %arg3[%c2_487, %c25_488] : memref<8x36xf32, #tpu.memory_space<smem>>
    %887 = vector.broadcast %886 : f32 to vector<16x16xf32>
    %888 = arith.mulf %887, %877 : vector<16x16xf32>
    %889 = arith.addf %855, %888 : vector<16x16xf32>
    %c3_489 = arith.constant 3 : index
    %c25_490 = arith.constant 25 : index
    %890 = memref.load %arg3[%c3_489, %c25_490] : memref<8x36xf32, #tpu.memory_space<smem>>
    %891 = vector.broadcast %890 : f32 to vector<16x16xf32>
    %892 = arith.mulf %891, %877 : vector<16x16xf32>
    %893 = arith.addf %859, %892 : vector<16x16xf32>
    %c4_491 = arith.constant 4 : index
    %c25_492 = arith.constant 25 : index
    %894 = memref.load %arg3[%c4_491, %c25_492] : memref<8x36xf32, #tpu.memory_space<smem>>
    %895 = vector.broadcast %894 : f32 to vector<16x16xf32>
    %896 = arith.mulf %895, %877 : vector<16x16xf32>
    %897 = arith.addf %863, %896 : vector<16x16xf32>
    %c5_493 = arith.constant 5 : index
    %c25_494 = arith.constant 25 : index
    %898 = memref.load %arg3[%c5_493, %c25_494] : memref<8x36xf32, #tpu.memory_space<smem>>
    %899 = vector.broadcast %898 : f32 to vector<16x16xf32>
    %900 = arith.mulf %899, %877 : vector<16x16xf32>
    %901 = arith.addf %867, %900 : vector<16x16xf32>
    %c6_495 = arith.constant 6 : index
    %c25_496 = arith.constant 25 : index
    %902 = memref.load %arg3[%c6_495, %c25_496] : memref<8x36xf32, #tpu.memory_space<smem>>
    %903 = vector.broadcast %902 : f32 to vector<16x16xf32>
    %904 = arith.mulf %903, %877 : vector<16x16xf32>
    %905 = arith.addf %871, %904 : vector<16x16xf32>
    %c7_497 = arith.constant 7 : index
    %c25_498 = arith.constant 25 : index
    %906 = memref.load %arg3[%c7_497, %c25_498] : memref<8x36xf32, #tpu.memory_space<smem>>
    %907 = vector.broadcast %906 : f32 to vector<16x16xf32>
    %908 = arith.mulf %907, %877 : vector<16x16xf32>
    %909 = arith.addf %875, %908 : vector<16x16xf32>
    %c2_499 = arith.constant 2 : index
    %c2_500 = arith.constant 2 : index
    %c2_501 = arith.constant 2 : index
    %910 = vector.load %arg6[%c2_499, %c2_500, %c2_501] : memref<4x18x18xf32, #tpu.memory_space<vmem>>, vector<1x16x16xf32>
    %911 = vector.shape_cast %910 : vector<1x16x16xf32> to vector<16x16xf32>
    %c0_502 = arith.constant 0 : index
    %c26 = arith.constant 26 : index
    %912 = memref.load %arg3[%c0_502, %c26] : memref<8x36xf32, #tpu.memory_space<smem>>
    %913 = vector.broadcast %912 : f32 to vector<16x16xf32>
    %914 = arith.mulf %913, %911 : vector<16x16xf32>
    %915 = arith.addf %881, %914 : vector<16x16xf32>
    %c1_503 = arith.constant 1 : index
    %c26_504 = arith.constant 26 : index
    %916 = memref.load %arg3[%c1_503, %c26_504] : memref<8x36xf32, #tpu.memory_space<smem>>
    %917 = vector.broadcast %916 : f32 to vector<16x16xf32>
    %918 = arith.mulf %917, %911 : vector<16x16xf32>
    %919 = arith.addf %885, %918 : vector<16x16xf32>
    %c2_505 = arith.constant 2 : index
    %c26_506 = arith.constant 26 : index
    %920 = memref.load %arg3[%c2_505, %c26_506] : memref<8x36xf32, #tpu.memory_space<smem>>
    %921 = vector.broadcast %920 : f32 to vector<16x16xf32>
    %922 = arith.mulf %921, %911 : vector<16x16xf32>
    %923 = arith.addf %889, %922 : vector<16x16xf32>
    %c3_507 = arith.constant 3 : index
    %c26_508 = arith.constant 26 : index
    %924 = memref.load %arg3[%c3_507, %c26_508] : memref<8x36xf32, #tpu.memory_space<smem>>
    %925 = vector.broadcast %924 : f32 to vector<16x16xf32>
    %926 = arith.mulf %925, %911 : vector<16x16xf32>
    %927 = arith.addf %893, %926 : vector<16x16xf32>
    %c4_509 = arith.constant 4 : index
    %c26_510 = arith.constant 26 : index
    %928 = memref.load %arg3[%c4_509, %c26_510] : memref<8x36xf32, #tpu.memory_space<smem>>
    %929 = vector.broadcast %928 : f32 to vector<16x16xf32>
    %930 = arith.mulf %929, %911 : vector<16x16xf32>
    %931 = arith.addf %897, %930 : vector<16x16xf32>
    %c5_511 = arith.constant 5 : index
    %c26_512 = arith.constant 26 : index
    %932 = memref.load %arg3[%c5_511, %c26_512] : memref<8x36xf32, #tpu.memory_space<smem>>
    %933 = vector.broadcast %932 : f32 to vector<16x16xf32>
    %934 = arith.mulf %933, %911 : vector<16x16xf32>
    %935 = arith.addf %901, %934 : vector<16x16xf32>
    %c6_513 = arith.constant 6 : index
    %c26_514 = arith.constant 26 : index
    %936 = memref.load %arg3[%c6_513, %c26_514] : memref<8x36xf32, #tpu.memory_space<smem>>
    %937 = vector.broadcast %936 : f32 to vector<16x16xf32>
    %938 = arith.mulf %937, %911 : vector<16x16xf32>
    %939 = arith.addf %905, %938 : vector<16x16xf32>
    %c7_515 = arith.constant 7 : index
    %c26_516 = arith.constant 26 : index
    %940 = memref.load %arg3[%c7_515, %c26_516] : memref<8x36xf32, #tpu.memory_space<smem>>
    %941 = vector.broadcast %940 : f32 to vector<16x16xf32>
    %942 = arith.mulf %941, %911 : vector<16x16xf32>
    %943 = arith.addf %909, %942 : vector<16x16xf32>
    %c3_517 = arith.constant 3 : index
    %c0_518 = arith.constant 0 : index
    %c0_519 = arith.constant 0 : index
    %944 = vector.load %arg6[%c3_517, %c0_518, %c0_519] : memref<4x18x18xf32, #tpu.memory_space<vmem>>, vector<1x16x16xf32>
    %945 = vector.shape_cast %944 : vector<1x16x16xf32> to vector<16x16xf32>
    %c0_520 = arith.constant 0 : index
    %c27 = arith.constant 27 : index
    %946 = memref.load %arg3[%c0_520, %c27] : memref<8x36xf32, #tpu.memory_space<smem>>
    %947 = vector.broadcast %946 : f32 to vector<16x16xf32>
    %948 = arith.mulf %947, %945 : vector<16x16xf32>
    %949 = arith.addf %915, %948 : vector<16x16xf32>
    %c1_521 = arith.constant 1 : index
    %c27_522 = arith.constant 27 : index
    %950 = memref.load %arg3[%c1_521, %c27_522] : memref<8x36xf32, #tpu.memory_space<smem>>
    %951 = vector.broadcast %950 : f32 to vector<16x16xf32>
    %952 = arith.mulf %951, %945 : vector<16x16xf32>
    %953 = arith.addf %919, %952 : vector<16x16xf32>
    %c2_523 = arith.constant 2 : index
    %c27_524 = arith.constant 27 : index
    %954 = memref.load %arg3[%c2_523, %c27_524] : memref<8x36xf32, #tpu.memory_space<smem>>
    %955 = vector.broadcast %954 : f32 to vector<16x16xf32>
    %956 = arith.mulf %955, %945 : vector<16x16xf32>
    %957 = arith.addf %923, %956 : vector<16x16xf32>
    %c3_525 = arith.constant 3 : index
    %c27_526 = arith.constant 27 : index
    %958 = memref.load %arg3[%c3_525, %c27_526] : memref<8x36xf32, #tpu.memory_space<smem>>
    %959 = vector.broadcast %958 : f32 to vector<16x16xf32>
    %960 = arith.mulf %959, %945 : vector<16x16xf32>
    %961 = arith.addf %927, %960 : vector<16x16xf32>
    %c4_527 = arith.constant 4 : index
    %c27_528 = arith.constant 27 : index
    %962 = memref.load %arg3[%c4_527, %c27_528] : memref<8x36xf32, #tpu.memory_space<smem>>
    %963 = vector.broadcast %962 : f32 to vector<16x16xf32>
    %964 = arith.mulf %963, %945 : vector<16x16xf32>
    %965 = arith.addf %931, %964 : vector<16x16xf32>
    %c5_529 = arith.constant 5 : index
    %c27_530 = arith.constant 27 : index
    %966 = memref.load %arg3[%c5_529, %c27_530] : memref<8x36xf32, #tpu.memory_space<smem>>
    %967 = vector.broadcast %966 : f32 to vector<16x16xf32>
    %968 = arith.mulf %967, %945 : vector<16x16xf32>
    %969 = arith.addf %935, %968 : vector<16x16xf32>
    %c6_531 = arith.constant 6 : index
    %c27_532 = arith.constant 27 : index
    %970 = memref.load %arg3[%c6_531, %c27_532] : memref<8x36xf32, #tpu.memory_space<smem>>
    %971 = vector.broadcast %970 : f32 to vector<16x16xf32>
    %972 = arith.mulf %971, %945 : vector<16x16xf32>
    %973 = arith.addf %939, %972 : vector<16x16xf32>
    %c7_533 = arith.constant 7 : index
    %c27_534 = arith.constant 27 : index
    %974 = memref.load %arg3[%c7_533, %c27_534] : memref<8x36xf32, #tpu.memory_space<smem>>
    %975 = vector.broadcast %974 : f32 to vector<16x16xf32>
    %976 = arith.mulf %975, %945 : vector<16x16xf32>
    %977 = arith.addf %943, %976 : vector<16x16xf32>
    %c3_535 = arith.constant 3 : index
    %c0_536 = arith.constant 0 : index
    %c1_537 = arith.constant 1 : index
    %978 = vector.load %arg6[%c3_535, %c0_536, %c1_537] : memref<4x18x18xf32, #tpu.memory_space<vmem>>, vector<1x16x16xf32>
    %979 = vector.shape_cast %978 : vector<1x16x16xf32> to vector<16x16xf32>
    %c0_538 = arith.constant 0 : index
    %c28 = arith.constant 28 : index
    %980 = memref.load %arg3[%c0_538, %c28] : memref<8x36xf32, #tpu.memory_space<smem>>
    %981 = vector.broadcast %980 : f32 to vector<16x16xf32>
    %982 = arith.mulf %981, %979 : vector<16x16xf32>
    %983 = arith.addf %949, %982 : vector<16x16xf32>
    %c1_539 = arith.constant 1 : index
    %c28_540 = arith.constant 28 : index
    %984 = memref.load %arg3[%c1_539, %c28_540] : memref<8x36xf32, #tpu.memory_space<smem>>
    %985 = vector.broadcast %984 : f32 to vector<16x16xf32>
    %986 = arith.mulf %985, %979 : vector<16x16xf32>
    %987 = arith.addf %953, %986 : vector<16x16xf32>
    %c2_541 = arith.constant 2 : index
    %c28_542 = arith.constant 28 : index
    %988 = memref.load %arg3[%c2_541, %c28_542] : memref<8x36xf32, #tpu.memory_space<smem>>
    %989 = vector.broadcast %988 : f32 to vector<16x16xf32>
    %990 = arith.mulf %989, %979 : vector<16x16xf32>
    %991 = arith.addf %957, %990 : vector<16x16xf32>
    %c3_543 = arith.constant 3 : index
    %c28_544 = arith.constant 28 : index
    %992 = memref.load %arg3[%c3_543, %c28_544] : memref<8x36xf32, #tpu.memory_space<smem>>
    %993 = vector.broadcast %992 : f32 to vector<16x16xf32>
    %994 = arith.mulf %993, %979 : vector<16x16xf32>
    %995 = arith.addf %961, %994 : vector<16x16xf32>
    %c4_545 = arith.constant 4 : index
    %c28_546 = arith.constant 28 : index
    %996 = memref.load %arg3[%c4_545, %c28_546] : memref<8x36xf32, #tpu.memory_space<smem>>
    %997 = vector.broadcast %996 : f32 to vector<16x16xf32>
    %998 = arith.mulf %997, %979 : vector<16x16xf32>
    %999 = arith.addf %965, %998 : vector<16x16xf32>
    %c5_547 = arith.constant 5 : index
    %c28_548 = arith.constant 28 : index
    %1000 = memref.load %arg3[%c5_547, %c28_548] : memref<8x36xf32, #tpu.memory_space<smem>>
    %1001 = vector.broadcast %1000 : f32 to vector<16x16xf32>
    %1002 = arith.mulf %1001, %979 : vector<16x16xf32>
    %1003 = arith.addf %969, %1002 : vector<16x16xf32>
    %c6_549 = arith.constant 6 : index
    %c28_550 = arith.constant 28 : index
    %1004 = memref.load %arg3[%c6_549, %c28_550] : memref<8x36xf32, #tpu.memory_space<smem>>
    %1005 = vector.broadcast %1004 : f32 to vector<16x16xf32>
    %1006 = arith.mulf %1005, %979 : vector<16x16xf32>
    %1007 = arith.addf %973, %1006 : vector<16x16xf32>
    %c7_551 = arith.constant 7 : index
    %c28_552 = arith.constant 28 : index
    %1008 = memref.load %arg3[%c7_551, %c28_552] : memref<8x36xf32, #tpu.memory_space<smem>>
    %1009 = vector.broadcast %1008 : f32 to vector<16x16xf32>
    %1010 = arith.mulf %1009, %979 : vector<16x16xf32>
    %1011 = arith.addf %977, %1010 : vector<16x16xf32>
    %c3_553 = arith.constant 3 : index
    %c0_554 = arith.constant 0 : index
    %c2_555 = arith.constant 2 : index
    %1012 = vector.load %arg6[%c3_553, %c0_554, %c2_555] : memref<4x18x18xf32, #tpu.memory_space<vmem>>, vector<1x16x16xf32>
    %1013 = vector.shape_cast %1012 : vector<1x16x16xf32> to vector<16x16xf32>
    %c0_556 = arith.constant 0 : index
    %c29 = arith.constant 29 : index
    %1014 = memref.load %arg3[%c0_556, %c29] : memref<8x36xf32, #tpu.memory_space<smem>>
    %1015 = vector.broadcast %1014 : f32 to vector<16x16xf32>
    %1016 = arith.mulf %1015, %1013 : vector<16x16xf32>
    %1017 = arith.addf %983, %1016 : vector<16x16xf32>
    %c1_557 = arith.constant 1 : index
    %c29_558 = arith.constant 29 : index
    %1018 = memref.load %arg3[%c1_557, %c29_558] : memref<8x36xf32, #tpu.memory_space<smem>>
    %1019 = vector.broadcast %1018 : f32 to vector<16x16xf32>
    %1020 = arith.mulf %1019, %1013 : vector<16x16xf32>
    %1021 = arith.addf %987, %1020 : vector<16x16xf32>
    %c2_559 = arith.constant 2 : index
    %c29_560 = arith.constant 29 : index
    %1022 = memref.load %arg3[%c2_559, %c29_560] : memref<8x36xf32, #tpu.memory_space<smem>>
    %1023 = vector.broadcast %1022 : f32 to vector<16x16xf32>
    %1024 = arith.mulf %1023, %1013 : vector<16x16xf32>
    %1025 = arith.addf %991, %1024 : vector<16x16xf32>
    %c3_561 = arith.constant 3 : index
    %c29_562 = arith.constant 29 : index
    %1026 = memref.load %arg3[%c3_561, %c29_562] : memref<8x36xf32, #tpu.memory_space<smem>>
    %1027 = vector.broadcast %1026 : f32 to vector<16x16xf32>
    %1028 = arith.mulf %1027, %1013 : vector<16x16xf32>
    %1029 = arith.addf %995, %1028 : vector<16x16xf32>
    %c4_563 = arith.constant 4 : index
    %c29_564 = arith.constant 29 : index
    %1030 = memref.load %arg3[%c4_563, %c29_564] : memref<8x36xf32, #tpu.memory_space<smem>>
    %1031 = vector.broadcast %1030 : f32 to vector<16x16xf32>
    %1032 = arith.mulf %1031, %1013 : vector<16x16xf32>
    %1033 = arith.addf %999, %1032 : vector<16x16xf32>
    %c5_565 = arith.constant 5 : index
    %c29_566 = arith.constant 29 : index
    %1034 = memref.load %arg3[%c5_565, %c29_566] : memref<8x36xf32, #tpu.memory_space<smem>>
    %1035 = vector.broadcast %1034 : f32 to vector<16x16xf32>
    %1036 = arith.mulf %1035, %1013 : vector<16x16xf32>
    %1037 = arith.addf %1003, %1036 : vector<16x16xf32>
    %c6_567 = arith.constant 6 : index
    %c29_568 = arith.constant 29 : index
    %1038 = memref.load %arg3[%c6_567, %c29_568] : memref<8x36xf32, #tpu.memory_space<smem>>
    %1039 = vector.broadcast %1038 : f32 to vector<16x16xf32>
    %1040 = arith.mulf %1039, %1013 : vector<16x16xf32>
    %1041 = arith.addf %1007, %1040 : vector<16x16xf32>
    %c7_569 = arith.constant 7 : index
    %c29_570 = arith.constant 29 : index
    %1042 = memref.load %arg3[%c7_569, %c29_570] : memref<8x36xf32, #tpu.memory_space<smem>>
    %1043 = vector.broadcast %1042 : f32 to vector<16x16xf32>
    %1044 = arith.mulf %1043, %1013 : vector<16x16xf32>
    %1045 = arith.addf %1011, %1044 : vector<16x16xf32>
    %c3_571 = arith.constant 3 : index
    %c1_572 = arith.constant 1 : index
    %c0_573 = arith.constant 0 : index
    %1046 = vector.load %arg6[%c3_571, %c1_572, %c0_573] : memref<4x18x18xf32, #tpu.memory_space<vmem>>, vector<1x16x16xf32>
    %1047 = vector.shape_cast %1046 : vector<1x16x16xf32> to vector<16x16xf32>
    %c0_574 = arith.constant 0 : index
    %c30 = arith.constant 30 : index
    %1048 = memref.load %arg3[%c0_574, %c30] : memref<8x36xf32, #tpu.memory_space<smem>>
    %1049 = vector.broadcast %1048 : f32 to vector<16x16xf32>
    %1050 = arith.mulf %1049, %1047 : vector<16x16xf32>
    %1051 = arith.addf %1017, %1050 : vector<16x16xf32>
    %c1_575 = arith.constant 1 : index
    %c30_576 = arith.constant 30 : index
    %1052 = memref.load %arg3[%c1_575, %c30_576] : memref<8x36xf32, #tpu.memory_space<smem>>
    %1053 = vector.broadcast %1052 : f32 to vector<16x16xf32>
    %1054 = arith.mulf %1053, %1047 : vector<16x16xf32>
    %1055 = arith.addf %1021, %1054 : vector<16x16xf32>
    %c2_577 = arith.constant 2 : index
    %c30_578 = arith.constant 30 : index
    %1056 = memref.load %arg3[%c2_577, %c30_578] : memref<8x36xf32, #tpu.memory_space<smem>>
    %1057 = vector.broadcast %1056 : f32 to vector<16x16xf32>
    %1058 = arith.mulf %1057, %1047 : vector<16x16xf32>
    %1059 = arith.addf %1025, %1058 : vector<16x16xf32>
    %c3_579 = arith.constant 3 : index
    %c30_580 = arith.constant 30 : index
    %1060 = memref.load %arg3[%c3_579, %c30_580] : memref<8x36xf32, #tpu.memory_space<smem>>
    %1061 = vector.broadcast %1060 : f32 to vector<16x16xf32>
    %1062 = arith.mulf %1061, %1047 : vector<16x16xf32>
    %1063 = arith.addf %1029, %1062 : vector<16x16xf32>
    %c4_581 = arith.constant 4 : index
    %c30_582 = arith.constant 30 : index
    %1064 = memref.load %arg3[%c4_581, %c30_582] : memref<8x36xf32, #tpu.memory_space<smem>>
    %1065 = vector.broadcast %1064 : f32 to vector<16x16xf32>
    %1066 = arith.mulf %1065, %1047 : vector<16x16xf32>
    %1067 = arith.addf %1033, %1066 : vector<16x16xf32>
    %c5_583 = arith.constant 5 : index
    %c30_584 = arith.constant 30 : index
    %1068 = memref.load %arg3[%c5_583, %c30_584] : memref<8x36xf32, #tpu.memory_space<smem>>
    %1069 = vector.broadcast %1068 : f32 to vector<16x16xf32>
    %1070 = arith.mulf %1069, %1047 : vector<16x16xf32>
    %1071 = arith.addf %1037, %1070 : vector<16x16xf32>
    %c6_585 = arith.constant 6 : index
    %c30_586 = arith.constant 30 : index
    %1072 = memref.load %arg3[%c6_585, %c30_586] : memref<8x36xf32, #tpu.memory_space<smem>>
    %1073 = vector.broadcast %1072 : f32 to vector<16x16xf32>
    %1074 = arith.mulf %1073, %1047 : vector<16x16xf32>
    %1075 = arith.addf %1041, %1074 : vector<16x16xf32>
    %c7_587 = arith.constant 7 : index
    %c30_588 = arith.constant 30 : index
    %1076 = memref.load %arg3[%c7_587, %c30_588] : memref<8x36xf32, #tpu.memory_space<smem>>
    %1077 = vector.broadcast %1076 : f32 to vector<16x16xf32>
    %1078 = arith.mulf %1077, %1047 : vector<16x16xf32>
    %1079 = arith.addf %1045, %1078 : vector<16x16xf32>
    %c3_589 = arith.constant 3 : index
    %c1_590 = arith.constant 1 : index
    %c1_591 = arith.constant 1 : index
    %1080 = vector.load %arg6[%c3_589, %c1_590, %c1_591] : memref<4x18x18xf32, #tpu.memory_space<vmem>>, vector<1x16x16xf32>
    %1081 = vector.shape_cast %1080 : vector<1x16x16xf32> to vector<16x16xf32>
    %c0_592 = arith.constant 0 : index
    %c31 = arith.constant 31 : index
    %1082 = memref.load %arg3[%c0_592, %c31] : memref<8x36xf32, #tpu.memory_space<smem>>
    %1083 = vector.broadcast %1082 : f32 to vector<16x16xf32>
    %1084 = arith.mulf %1083, %1081 : vector<16x16xf32>
    %1085 = arith.addf %1051, %1084 : vector<16x16xf32>
    %c1_593 = arith.constant 1 : index
    %c31_594 = arith.constant 31 : index
    %1086 = memref.load %arg3[%c1_593, %c31_594] : memref<8x36xf32, #tpu.memory_space<smem>>
    %1087 = vector.broadcast %1086 : f32 to vector<16x16xf32>
    %1088 = arith.mulf %1087, %1081 : vector<16x16xf32>
    %1089 = arith.addf %1055, %1088 : vector<16x16xf32>
    %c2_595 = arith.constant 2 : index
    %c31_596 = arith.constant 31 : index
    %1090 = memref.load %arg3[%c2_595, %c31_596] : memref<8x36xf32, #tpu.memory_space<smem>>
    %1091 = vector.broadcast %1090 : f32 to vector<16x16xf32>
    %1092 = arith.mulf %1091, %1081 : vector<16x16xf32>
    %1093 = arith.addf %1059, %1092 : vector<16x16xf32>
    %c3_597 = arith.constant 3 : index
    %c31_598 = arith.constant 31 : index
    %1094 = memref.load %arg3[%c3_597, %c31_598] : memref<8x36xf32, #tpu.memory_space<smem>>
    %1095 = vector.broadcast %1094 : f32 to vector<16x16xf32>
    %1096 = arith.mulf %1095, %1081 : vector<16x16xf32>
    %1097 = arith.addf %1063, %1096 : vector<16x16xf32>
    %c4_599 = arith.constant 4 : index
    %c31_600 = arith.constant 31 : index
    %1098 = memref.load %arg3[%c4_599, %c31_600] : memref<8x36xf32, #tpu.memory_space<smem>>
    %1099 = vector.broadcast %1098 : f32 to vector<16x16xf32>
    %1100 = arith.mulf %1099, %1081 : vector<16x16xf32>
    %1101 = arith.addf %1067, %1100 : vector<16x16xf32>
    %c5_601 = arith.constant 5 : index
    %c31_602 = arith.constant 31 : index
    %1102 = memref.load %arg3[%c5_601, %c31_602] : memref<8x36xf32, #tpu.memory_space<smem>>
    %1103 = vector.broadcast %1102 : f32 to vector<16x16xf32>
    %1104 = arith.mulf %1103, %1081 : vector<16x16xf32>
    %1105 = arith.addf %1071, %1104 : vector<16x16xf32>
    %c6_603 = arith.constant 6 : index
    %c31_604 = arith.constant 31 : index
    %1106 = memref.load %arg3[%c6_603, %c31_604] : memref<8x36xf32, #tpu.memory_space<smem>>
    %1107 = vector.broadcast %1106 : f32 to vector<16x16xf32>
    %1108 = arith.mulf %1107, %1081 : vector<16x16xf32>
    %1109 = arith.addf %1075, %1108 : vector<16x16xf32>
    %c7_605 = arith.constant 7 : index
    %c31_606 = arith.constant 31 : index
    %1110 = memref.load %arg3[%c7_605, %c31_606] : memref<8x36xf32, #tpu.memory_space<smem>>
    %1111 = vector.broadcast %1110 : f32 to vector<16x16xf32>
    %1112 = arith.mulf %1111, %1081 : vector<16x16xf32>
    %1113 = arith.addf %1079, %1112 : vector<16x16xf32>
    %c3_607 = arith.constant 3 : index
    %c1_608 = arith.constant 1 : index
    %c2_609 = arith.constant 2 : index
    %1114 = vector.load %arg6[%c3_607, %c1_608, %c2_609] : memref<4x18x18xf32, #tpu.memory_space<vmem>>, vector<1x16x16xf32>
    %1115 = vector.shape_cast %1114 : vector<1x16x16xf32> to vector<16x16xf32>
    %c0_610 = arith.constant 0 : index
    %c32 = arith.constant 32 : index
    %1116 = memref.load %arg3[%c0_610, %c32] : memref<8x36xf32, #tpu.memory_space<smem>>
    %1117 = vector.broadcast %1116 : f32 to vector<16x16xf32>
    %1118 = arith.mulf %1117, %1115 : vector<16x16xf32>
    %1119 = arith.addf %1085, %1118 : vector<16x16xf32>
    %c1_611 = arith.constant 1 : index
    %c32_612 = arith.constant 32 : index
    %1120 = memref.load %arg3[%c1_611, %c32_612] : memref<8x36xf32, #tpu.memory_space<smem>>
    %1121 = vector.broadcast %1120 : f32 to vector<16x16xf32>
    %1122 = arith.mulf %1121, %1115 : vector<16x16xf32>
    %1123 = arith.addf %1089, %1122 : vector<16x16xf32>
    %c2_613 = arith.constant 2 : index
    %c32_614 = arith.constant 32 : index
    %1124 = memref.load %arg3[%c2_613, %c32_614] : memref<8x36xf32, #tpu.memory_space<smem>>
    %1125 = vector.broadcast %1124 : f32 to vector<16x16xf32>
    %1126 = arith.mulf %1125, %1115 : vector<16x16xf32>
    %1127 = arith.addf %1093, %1126 : vector<16x16xf32>
    %c3_615 = arith.constant 3 : index
    %c32_616 = arith.constant 32 : index
    %1128 = memref.load %arg3[%c3_615, %c32_616] : memref<8x36xf32, #tpu.memory_space<smem>>
    %1129 = vector.broadcast %1128 : f32 to vector<16x16xf32>
    %1130 = arith.mulf %1129, %1115 : vector<16x16xf32>
    %1131 = arith.addf %1097, %1130 : vector<16x16xf32>
    %c4_617 = arith.constant 4 : index
    %c32_618 = arith.constant 32 : index
    %1132 = memref.load %arg3[%c4_617, %c32_618] : memref<8x36xf32, #tpu.memory_space<smem>>
    %1133 = vector.broadcast %1132 : f32 to vector<16x16xf32>
    %1134 = arith.mulf %1133, %1115 : vector<16x16xf32>
    %1135 = arith.addf %1101, %1134 : vector<16x16xf32>
    %c5_619 = arith.constant 5 : index
    %c32_620 = arith.constant 32 : index
    %1136 = memref.load %arg3[%c5_619, %c32_620] : memref<8x36xf32, #tpu.memory_space<smem>>
    %1137 = vector.broadcast %1136 : f32 to vector<16x16xf32>
    %1138 = arith.mulf %1137, %1115 : vector<16x16xf32>
    %1139 = arith.addf %1105, %1138 : vector<16x16xf32>
    %c6_621 = arith.constant 6 : index
    %c32_622 = arith.constant 32 : index
    %1140 = memref.load %arg3[%c6_621, %c32_622] : memref<8x36xf32, #tpu.memory_space<smem>>
    %1141 = vector.broadcast %1140 : f32 to vector<16x16xf32>
    %1142 = arith.mulf %1141, %1115 : vector<16x16xf32>
    %1143 = arith.addf %1109, %1142 : vector<16x16xf32>
    %c7_623 = arith.constant 7 : index
    %c32_624 = arith.constant 32 : index
    %1144 = memref.load %arg3[%c7_623, %c32_624] : memref<8x36xf32, #tpu.memory_space<smem>>
    %1145 = vector.broadcast %1144 : f32 to vector<16x16xf32>
    %1146 = arith.mulf %1145, %1115 : vector<16x16xf32>
    %1147 = arith.addf %1113, %1146 : vector<16x16xf32>
    %c3_625 = arith.constant 3 : index
    %c2_626 = arith.constant 2 : index
    %c0_627 = arith.constant 0 : index
    %1148 = vector.load %arg6[%c3_625, %c2_626, %c0_627] : memref<4x18x18xf32, #tpu.memory_space<vmem>>, vector<1x16x16xf32>
    %1149 = vector.shape_cast %1148 : vector<1x16x16xf32> to vector<16x16xf32>
    %c0_628 = arith.constant 0 : index
    %c33 = arith.constant 33 : index
    %1150 = memref.load %arg3[%c0_628, %c33] : memref<8x36xf32, #tpu.memory_space<smem>>
    %1151 = vector.broadcast %1150 : f32 to vector<16x16xf32>
    %1152 = arith.mulf %1151, %1149 : vector<16x16xf32>
    %1153 = arith.addf %1119, %1152 : vector<16x16xf32>
    %c1_629 = arith.constant 1 : index
    %c33_630 = arith.constant 33 : index
    %1154 = memref.load %arg3[%c1_629, %c33_630] : memref<8x36xf32, #tpu.memory_space<smem>>
    %1155 = vector.broadcast %1154 : f32 to vector<16x16xf32>
    %1156 = arith.mulf %1155, %1149 : vector<16x16xf32>
    %1157 = arith.addf %1123, %1156 : vector<16x16xf32>
    %c2_631 = arith.constant 2 : index
    %c33_632 = arith.constant 33 : index
    %1158 = memref.load %arg3[%c2_631, %c33_632] : memref<8x36xf32, #tpu.memory_space<smem>>
    %1159 = vector.broadcast %1158 : f32 to vector<16x16xf32>
    %1160 = arith.mulf %1159, %1149 : vector<16x16xf32>
    %1161 = arith.addf %1127, %1160 : vector<16x16xf32>
    %c3_633 = arith.constant 3 : index
    %c33_634 = arith.constant 33 : index
    %1162 = memref.load %arg3[%c3_633, %c33_634] : memref<8x36xf32, #tpu.memory_space<smem>>
    %1163 = vector.broadcast %1162 : f32 to vector<16x16xf32>
    %1164 = arith.mulf %1163, %1149 : vector<16x16xf32>
    %1165 = arith.addf %1131, %1164 : vector<16x16xf32>
    %c4_635 = arith.constant 4 : index
    %c33_636 = arith.constant 33 : index
    %1166 = memref.load %arg3[%c4_635, %c33_636] : memref<8x36xf32, #tpu.memory_space<smem>>
    %1167 = vector.broadcast %1166 : f32 to vector<16x16xf32>
    %1168 = arith.mulf %1167, %1149 : vector<16x16xf32>
    %1169 = arith.addf %1135, %1168 : vector<16x16xf32>
    %c5_637 = arith.constant 5 : index
    %c33_638 = arith.constant 33 : index
    %1170 = memref.load %arg3[%c5_637, %c33_638] : memref<8x36xf32, #tpu.memory_space<smem>>
    %1171 = vector.broadcast %1170 : f32 to vector<16x16xf32>
    %1172 = arith.mulf %1171, %1149 : vector<16x16xf32>
    %1173 = arith.addf %1139, %1172 : vector<16x16xf32>
    %c6_639 = arith.constant 6 : index
    %c33_640 = arith.constant 33 : index
    %1174 = memref.load %arg3[%c6_639, %c33_640] : memref<8x36xf32, #tpu.memory_space<smem>>
    %1175 = vector.broadcast %1174 : f32 to vector<16x16xf32>
    %1176 = arith.mulf %1175, %1149 : vector<16x16xf32>
    %1177 = arith.addf %1143, %1176 : vector<16x16xf32>
    %c7_641 = arith.constant 7 : index
    %c33_642 = arith.constant 33 : index
    %1178 = memref.load %arg3[%c7_641, %c33_642] : memref<8x36xf32, #tpu.memory_space<smem>>
    %1179 = vector.broadcast %1178 : f32 to vector<16x16xf32>
    %1180 = arith.mulf %1179, %1149 : vector<16x16xf32>
    %1181 = arith.addf %1147, %1180 : vector<16x16xf32>
    %c3_643 = arith.constant 3 : index
    %c2_644 = arith.constant 2 : index
    %c1_645 = arith.constant 1 : index
    %1182 = vector.load %arg6[%c3_643, %c2_644, %c1_645] : memref<4x18x18xf32, #tpu.memory_space<vmem>>, vector<1x16x16xf32>
    %1183 = vector.shape_cast %1182 : vector<1x16x16xf32> to vector<16x16xf32>
    %c0_646 = arith.constant 0 : index
    %c34 = arith.constant 34 : index
    %1184 = memref.load %arg3[%c0_646, %c34] : memref<8x36xf32, #tpu.memory_space<smem>>
    %1185 = vector.broadcast %1184 : f32 to vector<16x16xf32>
    %1186 = arith.mulf %1185, %1183 : vector<16x16xf32>
    %1187 = arith.addf %1153, %1186 : vector<16x16xf32>
    %c1_647 = arith.constant 1 : index
    %c34_648 = arith.constant 34 : index
    %1188 = memref.load %arg3[%c1_647, %c34_648] : memref<8x36xf32, #tpu.memory_space<smem>>
    %1189 = vector.broadcast %1188 : f32 to vector<16x16xf32>
    %1190 = arith.mulf %1189, %1183 : vector<16x16xf32>
    %1191 = arith.addf %1157, %1190 : vector<16x16xf32>
    %c2_649 = arith.constant 2 : index
    %c34_650 = arith.constant 34 : index
    %1192 = memref.load %arg3[%c2_649, %c34_650] : memref<8x36xf32, #tpu.memory_space<smem>>
    %1193 = vector.broadcast %1192 : f32 to vector<16x16xf32>
    %1194 = arith.mulf %1193, %1183 : vector<16x16xf32>
    %1195 = arith.addf %1161, %1194 : vector<16x16xf32>
    %c3_651 = arith.constant 3 : index
    %c34_652 = arith.constant 34 : index
    %1196 = memref.load %arg3[%c3_651, %c34_652] : memref<8x36xf32, #tpu.memory_space<smem>>
    %1197 = vector.broadcast %1196 : f32 to vector<16x16xf32>
    %1198 = arith.mulf %1197, %1183 : vector<16x16xf32>
    %1199 = arith.addf %1165, %1198 : vector<16x16xf32>
    %c4_653 = arith.constant 4 : index
    %c34_654 = arith.constant 34 : index
    %1200 = memref.load %arg3[%c4_653, %c34_654] : memref<8x36xf32, #tpu.memory_space<smem>>
    %1201 = vector.broadcast %1200 : f32 to vector<16x16xf32>
    %1202 = arith.mulf %1201, %1183 : vector<16x16xf32>
    %1203 = arith.addf %1169, %1202 : vector<16x16xf32>
    %c5_655 = arith.constant 5 : index
    %c34_656 = arith.constant 34 : index
    %1204 = memref.load %arg3[%c5_655, %c34_656] : memref<8x36xf32, #tpu.memory_space<smem>>
    %1205 = vector.broadcast %1204 : f32 to vector<16x16xf32>
    %1206 = arith.mulf %1205, %1183 : vector<16x16xf32>
    %1207 = arith.addf %1173, %1206 : vector<16x16xf32>
    %c6_657 = arith.constant 6 : index
    %c34_658 = arith.constant 34 : index
    %1208 = memref.load %arg3[%c6_657, %c34_658] : memref<8x36xf32, #tpu.memory_space<smem>>
    %1209 = vector.broadcast %1208 : f32 to vector<16x16xf32>
    %1210 = arith.mulf %1209, %1183 : vector<16x16xf32>
    %1211 = arith.addf %1177, %1210 : vector<16x16xf32>
    %c7_659 = arith.constant 7 : index
    %c34_660 = arith.constant 34 : index
    %1212 = memref.load %arg3[%c7_659, %c34_660] : memref<8x36xf32, #tpu.memory_space<smem>>
    %1213 = vector.broadcast %1212 : f32 to vector<16x16xf32>
    %1214 = arith.mulf %1213, %1183 : vector<16x16xf32>
    %1215 = arith.addf %1181, %1214 : vector<16x16xf32>
    %c3_661 = arith.constant 3 : index
    %c2_662 = arith.constant 2 : index
    %c2_663 = arith.constant 2 : index
    %1216 = vector.load %arg6[%c3_661, %c2_662, %c2_663] : memref<4x18x18xf32, #tpu.memory_space<vmem>>, vector<1x16x16xf32>
    %1217 = vector.shape_cast %1216 : vector<1x16x16xf32> to vector<16x16xf32>
    %c0_664 = arith.constant 0 : index
    %c35 = arith.constant 35 : index
    %1218 = memref.load %arg3[%c0_664, %c35] : memref<8x36xf32, #tpu.memory_space<smem>>
    %1219 = vector.broadcast %1218 : f32 to vector<16x16xf32>
    %1220 = arith.mulf %1219, %1217 : vector<16x16xf32>
    %1221 = arith.addf %1187, %1220 : vector<16x16xf32>
    %c1_665 = arith.constant 1 : index
    %c35_666 = arith.constant 35 : index
    %1222 = memref.load %arg3[%c1_665, %c35_666] : memref<8x36xf32, #tpu.memory_space<smem>>
    %1223 = vector.broadcast %1222 : f32 to vector<16x16xf32>
    %1224 = arith.mulf %1223, %1217 : vector<16x16xf32>
    %1225 = arith.addf %1191, %1224 : vector<16x16xf32>
    %c2_667 = arith.constant 2 : index
    %c35_668 = arith.constant 35 : index
    %1226 = memref.load %arg3[%c2_667, %c35_668] : memref<8x36xf32, #tpu.memory_space<smem>>
    %1227 = vector.broadcast %1226 : f32 to vector<16x16xf32>
    %1228 = arith.mulf %1227, %1217 : vector<16x16xf32>
    %1229 = arith.addf %1195, %1228 : vector<16x16xf32>
    %c3_669 = arith.constant 3 : index
    %c35_670 = arith.constant 35 : index
    %1230 = memref.load %arg3[%c3_669, %c35_670] : memref<8x36xf32, #tpu.memory_space<smem>>
    %1231 = vector.broadcast %1230 : f32 to vector<16x16xf32>
    %1232 = arith.mulf %1231, %1217 : vector<16x16xf32>
    %1233 = arith.addf %1199, %1232 : vector<16x16xf32>
    %c4_671 = arith.constant 4 : index
    %c35_672 = arith.constant 35 : index
    %1234 = memref.load %arg3[%c4_671, %c35_672] : memref<8x36xf32, #tpu.memory_space<smem>>
    %1235 = vector.broadcast %1234 : f32 to vector<16x16xf32>
    %1236 = arith.mulf %1235, %1217 : vector<16x16xf32>
    %1237 = arith.addf %1203, %1236 : vector<16x16xf32>
    %c5_673 = arith.constant 5 : index
    %c35_674 = arith.constant 35 : index
    %1238 = memref.load %arg3[%c5_673, %c35_674] : memref<8x36xf32, #tpu.memory_space<smem>>
    %1239 = vector.broadcast %1238 : f32 to vector<16x16xf32>
    %1240 = arith.mulf %1239, %1217 : vector<16x16xf32>
    %1241 = arith.addf %1207, %1240 : vector<16x16xf32>
    %c6_675 = arith.constant 6 : index
    %c35_676 = arith.constant 35 : index
    %1242 = memref.load %arg3[%c6_675, %c35_676] : memref<8x36xf32, #tpu.memory_space<smem>>
    %1243 = vector.broadcast %1242 : f32 to vector<16x16xf32>
    %1244 = arith.mulf %1243, %1217 : vector<16x16xf32>
    %1245 = arith.addf %1211, %1244 : vector<16x16xf32>
    %c7_677 = arith.constant 7 : index
    %c35_678 = arith.constant 35 : index
    %1246 = memref.load %arg3[%c7_677, %c35_678] : memref<8x36xf32, #tpu.memory_space<smem>>
    %1247 = vector.broadcast %1246 : f32 to vector<16x16xf32>
    %1248 = arith.mulf %1247, %1217 : vector<16x16xf32>
    %1249 = arith.addf %1215, %1248 : vector<16x16xf32>
    %c0_679 = arith.constant 0 : index
    %1250 = memref.load %arg4[%c0_679] : memref<8xf32, #tpu.memory_space<smem>>
    %1251 = vector.broadcast %1250 : f32 to vector<16x16xf32>
    %1252 = arith.addf %1221, %1251 : vector<16x16xf32>
    %c1_680 = arith.constant 1 : index
    %1253 = memref.load %arg4[%c1_680] : memref<8xf32, #tpu.memory_space<smem>>
    %1254 = vector.broadcast %1253 : f32 to vector<16x16xf32>
    %1255 = arith.addf %1225, %1254 : vector<16x16xf32>
    %c2_681 = arith.constant 2 : index
    %1256 = memref.load %arg4[%c2_681] : memref<8xf32, #tpu.memory_space<smem>>
    %1257 = vector.broadcast %1256 : f32 to vector<16x16xf32>
    %1258 = arith.addf %1229, %1257 : vector<16x16xf32>
    %c3_682 = arith.constant 3 : index
    %1259 = memref.load %arg4[%c3_682] : memref<8xf32, #tpu.memory_space<smem>>
    %1260 = vector.broadcast %1259 : f32 to vector<16x16xf32>
    %1261 = arith.addf %1233, %1260 : vector<16x16xf32>
    %c4_683 = arith.constant 4 : index
    %1262 = memref.load %arg4[%c4_683] : memref<8xf32, #tpu.memory_space<smem>>
    %1263 = vector.broadcast %1262 : f32 to vector<16x16xf32>
    %1264 = arith.addf %1237, %1263 : vector<16x16xf32>
    %c5_684 = arith.constant 5 : index
    %1265 = memref.load %arg4[%c5_684] : memref<8xf32, #tpu.memory_space<smem>>
    %1266 = vector.broadcast %1265 : f32 to vector<16x16xf32>
    %1267 = arith.addf %1241, %1266 : vector<16x16xf32>
    %c6_685 = arith.constant 6 : index
    %1268 = memref.load %arg4[%c6_685] : memref<8xf32, #tpu.memory_space<smem>>
    %1269 = vector.broadcast %1268 : f32 to vector<16x16xf32>
    %1270 = arith.addf %1245, %1269 : vector<16x16xf32>
    %c7_686 = arith.constant 7 : index
    %1271 = memref.load %arg4[%c7_686] : memref<8xf32, #tpu.memory_space<smem>>
    %1272 = vector.broadcast %1271 : f32 to vector<16x16xf32>
    %1273 = arith.addf %1249, %1272 : vector<16x16xf32>
    %1274 = math.absf %1252 : vector<16x16xf32>
    %1275 = math.absf %1255 : vector<16x16xf32>
    %1276 = arith.addf %1274, %1275 : vector<16x16xf32>
    %1277 = arith.addf %1252, %1255 : vector<16x16xf32>
    %1278 = math.absf %1258 : vector<16x16xf32>
    %1279 = arith.addf %1276, %1278 : vector<16x16xf32>
    %1280 = arith.addf %1277, %1258 : vector<16x16xf32>
    %1281 = math.absf %1261 : vector<16x16xf32>
    %1282 = arith.addf %1279, %1281 : vector<16x16xf32>
    %1283 = arith.addf %1280, %1261 : vector<16x16xf32>
    %1284 = math.absf %1264 : vector<16x16xf32>
    %1285 = arith.addf %1282, %1284 : vector<16x16xf32>
    %1286 = arith.addf %1283, %1264 : vector<16x16xf32>
    %1287 = math.absf %1267 : vector<16x16xf32>
    %1288 = arith.addf %1285, %1287 : vector<16x16xf32>
    %1289 = arith.addf %1286, %1267 : vector<16x16xf32>
    %1290 = math.absf %1270 : vector<16x16xf32>
    %1291 = arith.addf %1288, %1290 : vector<16x16xf32>
    %1292 = arith.addf %1289, %1270 : vector<16x16xf32>
    %1293 = math.absf %1273 : vector<16x16xf32>
    %1294 = arith.addf %1291, %1293 : vector<16x16xf32>
    %1295 = arith.addf %1292, %1273 : vector<16x16xf32>
    %1296 = tpu.reciprocal %1294 : vector<16x16xf32> -> vector<16x16xf32>
    %1297 = arith.mulf %1295, %1296 : vector<16x16xf32>
    %cst_687 = arith.constant 1.000000e+00 : f32
    %1298 = vector.broadcast %cst_687 : f32 to vector<16x16xf32>
    %1299 = arith.subf %1298, %1297 : vector<16x16xf32>
    %1300 = arith.mulf %1252, %1296 : vector<16x16xf32>
    %c0_688 = arith.constant 0 : index
    %c0_689 = arith.constant 0 : index
    %c0_690 = arith.constant 0 : index
    %c0_691 = arith.constant 0 : index
    %1301 = vector.load %arg5[%c0_688, %c0_689, %c0_690, %c0_691] : memref<1x9x16x16xf32, #tpu.memory_space<vmem>>, vector<1x1x16x16xf32>
    %1302 = vector.shape_cast %1301 : vector<1x1x16x16xf32> to vector<16x16xf32>
    %1303 = vector.shape_cast %1300 : vector<16x16xf32> to vector<1x1x16x16xf32>
    tpu.vector_store %arg5[%c0_688, %c0_689, %c0_690, %c0_691], %1303 {strides = array<i32>} : memref<1x9x16x16xf32, #tpu.memory_space<vmem>>, vector<1x1x16x16xf32>,
    %1304 = arith.mulf %1255, %1296 : vector<16x16xf32>
    %c0_692 = arith.constant 0 : index
    %c1_693 = arith.constant 1 : index
    %c0_694 = arith.constant 0 : index
    %c0_695 = arith.constant 0 : index
    %1305 = vector.load %arg5[%c0_692, %c1_693, %c0_694, %c0_695] : memref<1x9x16x16xf32, #tpu.memory_space<vmem>>, vector<1x1x16x16xf32>
    %1306 = vector.shape_cast %1305 : vector<1x1x16x16xf32> to vector<16x16xf32>
    %1307 = vector.shape_cast %1304 : vector<16x16xf32> to vector<1x1x16x16xf32>
    tpu.vector_store %arg5[%c0_692, %c1_693, %c0_694, %c0_695], %1307 {strides = array<i32>} : memref<1x9x16x16xf32, #tpu.memory_space<vmem>>, vector<1x1x16x16xf32>,
    %1308 = arith.mulf %1258, %1296 : vector<16x16xf32>
    %c0_696 = arith.constant 0 : index
    %c2_697 = arith.constant 2 : index
    %c0_698 = arith.constant 0 : index
    %c0_699 = arith.constant 0 : index
    %1309 = vector.load %arg5[%c0_696, %c2_697, %c0_698, %c0_699] : memref<1x9x16x16xf32, #tpu.memory_space<vmem>>, vector<1x1x16x16xf32>
    %1310 = vector.shape_cast %1309 : vector<1x1x16x16xf32> to vector<16x16xf32>
    %1311 = vector.shape_cast %1308 : vector<16x16xf32> to vector<1x1x16x16xf32>
    tpu.vector_store %arg5[%c0_696, %c2_697, %c0_698, %c0_699], %1311 {strides = array<i32>} : memref<1x9x16x16xf32, #tpu.memory_space<vmem>>, vector<1x1x16x16xf32>,
    %1312 = arith.mulf %1261, %1296 : vector<16x16xf32>
    %c0_700 = arith.constant 0 : index
    %c3_701 = arith.constant 3 : index
    %c0_702 = arith.constant 0 : index
    %c0_703 = arith.constant 0 : index
    %1313 = vector.load %arg5[%c0_700, %c3_701, %c0_702, %c0_703] : memref<1x9x16x16xf32, #tpu.memory_space<vmem>>, vector<1x1x16x16xf32>
    %1314 = vector.shape_cast %1313 : vector<1x1x16x16xf32> to vector<16x16xf32>
    %1315 = vector.shape_cast %1312 : vector<16x16xf32> to vector<1x1x16x16xf32>
    tpu.vector_store %arg5[%c0_700, %c3_701, %c0_702, %c0_703], %1315 {strides = array<i32>} : memref<1x9x16x16xf32, #tpu.memory_space<vmem>>, vector<1x1x16x16xf32>,
    %c0_704 = arith.constant 0 : index
    %c4_705 = arith.constant 4 : index
    %c0_706 = arith.constant 0 : index
    %c0_707 = arith.constant 0 : index
    %1316 = vector.load %arg5[%c0_704, %c4_705, %c0_706, %c0_707] : memref<1x9x16x16xf32, #tpu.memory_space<vmem>>, vector<1x1x16x16xf32>
    %1317 = vector.shape_cast %1316 : vector<1x1x16x16xf32> to vector<16x16xf32>
    %1318 = vector.shape_cast %1299 : vector<16x16xf32> to vector<1x1x16x16xf32>
    tpu.vector_store %arg5[%c0_704, %c4_705, %c0_706, %c0_707], %1318 {strides = array<i32>} : memref<1x9x16x16xf32, #tpu.memory_space<vmem>>, vector<1x1x16x16xf32>,
    %1319 = arith.mulf %1264, %1296 : vector<16x16xf32>
    %c0_708 = arith.constant 0 : index
    %c5_709 = arith.constant 5 : index
    %c0_710 = arith.constant 0 : index
    %c0_711 = arith.constant 0 : index
    %1320 = vector.load %arg5[%c0_708, %c5_709, %c0_710, %c0_711] : memref<1x9x16x16xf32, #tpu.memory_space<vmem>>, vector<1x1x16x16xf32>
    %1321 = vector.shape_cast %1320 : vector<1x1x16x16xf32> to vector<16x16xf32>
    %1322 = vector.shape_cast %1319 : vector<16x16xf32> to vector<1x1x16x16xf32>
    tpu.vector_store %arg5[%c0_708, %c5_709, %c0_710, %c0_711], %1322 {strides = array<i32>} : memref<1x9x16x16xf32, #tpu.memory_space<vmem>>, vector<1x1x16x16xf32>,
    %1323 = arith.mulf %1267, %1296 : vector<16x16xf32>
    %c0_712 = arith.constant 0 : index
    %c6_713 = arith.constant 6 : index
    %c0_714 = arith.constant 0 : index
    %c0_715 = arith.constant 0 : index
    %1324 = vector.load %arg5[%c0_712, %c6_713, %c0_714, %c0_715] : memref<1x9x16x16xf32, #tpu.memory_space<vmem>>, vector<1x1x16x16xf32>
    %1325 = vector.shape_cast %1324 : vector<1x1x16x16xf32> to vector<16x16xf32>
    %1326 = vector.shape_cast %1323 : vector<16x16xf32> to vector<1x1x16x16xf32>
    tpu.vector_store %arg5[%c0_712, %c6_713, %c0_714, %c0_715], %1326 {strides = array<i32>} : memref<1x9x16x16xf32, #tpu.memory_space<vmem>>, vector<1x1x16x16xf32>,
    %1327 = arith.mulf %1270, %1296 : vector<16x16xf32>
    %c0_716 = arith.constant 0 : index
    %c7_717 = arith.constant 7 : index
    %c0_718 = arith.constant 0 : index
    %c0_719 = arith.constant 0 : index
    %1328 = vector.load %arg5[%c0_716, %c7_717, %c0_718, %c0_719] : memref<1x9x16x16xf32, #tpu.memory_space<vmem>>, vector<1x1x16x16xf32>
    %1329 = vector.shape_cast %1328 : vector<1x1x16x16xf32> to vector<16x16xf32>
    %1330 = vector.shape_cast %1327 : vector<16x16xf32> to vector<1x1x16x16xf32>
    tpu.vector_store %arg5[%c0_716, %c7_717, %c0_718, %c0_719], %1330 {strides = array<i32>} : memref<1x9x16x16xf32, #tpu.memory_space<vmem>>, vector<1x1x16x16xf32>,
    %1331 = arith.mulf %1273, %1296 : vector<16x16xf32>
    %c0_720 = arith.constant 0 : index
    %c8_721 = arith.constant 8 : index
    %c0_722 = arith.constant 0 : index
    %c0_723 = arith.constant 0 : index
    %1332 = vector.load %arg5[%c0_720, %c8_721, %c0_722, %c0_723] : memref<1x9x16x16xf32, #tpu.memory_space<vmem>>, vector<1x1x16x16xf32>
    %1333 = vector.shape_cast %1332 : vector<1x1x16x16xf32> to vector<16x16xf32>
    %1334 = vector.shape_cast %1331 : vector<16x16xf32> to vector<1x1x16x16xf32>
    tpu.vector_store %arg5[%c0_720, %c8_721, %c0_722, %c0_723], %1334 {strides = array<i32>} : memref<1x9x16x16xf32, #tpu.memory_space<vmem>>, vector<1x1x16x16xf32>,
    return
  }
  func.func @transform_0(%arg0: i32, %arg1: i32) -> (i32, i32, i32, i32) {
    %c0_i32 = arith.constant 0 : i32
    %c0_i32_0 = arith.constant 0 : i32
    %c0_i32_1 = arith.constant 0 : i32
    %c0_i32_2 = arith.constant 0 : i32
    return %arg0, %c0_i32, %c0_i32_0, %c0_i32_1 : i32, i32, i32, i32
  }
  func.func @transform_1(%arg0: i32, %arg1: i32) -> (i32, i32) {
    %c0_i32 = arith.constant 0 : i32
    %c0_i32_0 = arith.constant 0 : i32
    %c0_i32_1 = arith.constant 0 : i32
    return %c0_i32, %c0_i32_0 : i32, i32
  }
  func.func @transform_2(%arg0: i32, %arg1: i32) -> i32 {
    %c0_i32 = arith.constant 0 : i32
    %c0_i32_0 = arith.constant 0 : i32
    return %c0_i32 : i32
  }
  func.func @transform_3(%arg0: i32, %arg1: i32) -> (i32, i32, i32, i32) {
    %c0_i32 = arith.constant 0 : i32
    %c0_i32_0 = arith.constant 0 : i32
    %c0_i32_1 = arith.constant 0 : i32
    return %arg0, %c0_i32, %arg1, %c0_i32_0 : i32, i32, i32, i32
  }
}

</mosaic_0001>

<llo_original>
// kernel: cspn_generate_accelerate.1
$region0: #{cspn_generate_accelerate.1}
  #allocation0 [shape = 'u32[]', space=smem, size = 0x4, offset = 0x4, fixed_abs, tag = 'smem constant byte address 0x4 - core index']
  #allocation1 [shape = 'u32[144,128]{1,0:T(1,128)}', space=vmem, size = 0x12000, scoped, tag = 'internal scratch']
  #allocation2 [shape = 'f32[4,18,18]{2,1,0:T(8,128)}', space=vmem, size = 0xc000, scoped, tag = 'scratch operand']
  %s0 = inlined_call_operand.vmem [shape: f32[2,4,16,16], index: 0, kind: input, shape index: {}]
  %s1 = inlined_call_operand.vmem [shape: f32[8,36], index: 1, kind: input, shape index: {}]
  %s2 = inlined_call_operand.vmem [shape: f32[8], index: 2, kind: input, shape index: {}]
  %s3 = inlined_call_operand.hbm [shape: f32[2,9,16,16], index: 3, kind: output, shape index: {}]
  %s4 = sld [smem:[#allocation0]]
  $region61: #{cspn_generate_accelerate.1} parent=0
    _
  %s6 = ssub.s32 1, %s4
  %s7 = scalar_select 0, %s6, %s4
  $region1: #{cspn_generate_accelerate.1} parent=0
    #allocation3 [shape = 'u8[4096]{0}', space=smem, size = 0x1000, scoped, tag = 'input window, operand 1, single buffered']
    #allocation4 [shape = 's32[2]{0}', space=sflag, size = 0x8, scoped, tag = 'scoped memory for cspn_generate_accelerate.1']
    #allocation5 [shape = 's32[2]{0}', space=sflag, size = 0x8, scoped, tag = 'scoped memory for cspn_generate_accelerate.1']
    #allocation6 [shape = 'u8[512]{0}', space=smem, size = 0x200, scoped, tag = 'input window, operand 2, single buffered']
    #allocation7 [shape = 's32[1]{0}', space=sflag, size = 0x4, scoped, tag = 'scoped memory for cspn_generate_accelerate.1']
    #allocation8 [shape = 'u8[147456]{0}', space=vmem, size = 0x24000, scoped, tag = 'output window, operand 0']
    %8 = vsyncpa [#allocation5], 0
    %9 = vsyncpa [#allocation7], 0
    %10 = vsyncpa [#allocation4], 0
    %s11 = scalar_lea.sflag [#allocation4], 1
    %12 = vsyncpa %s11, 0
    loop: start=0, step=1, limit=4
    $region2: #{cspn_generate_accelerate.1} parent=1 // loop_pre_header
      _
    $region3: #{cspn_generate_accelerate.1} parent=1 // loop_header
      %s14 = sphi 0, %s18
      %p15 = scmp.ge.s32.totalorder %s14, 4
      %s21 = sphi 0, %s33
      %s22 = sphi 0, %s29
      %s23 = sphi 0, %s21
      %s24 = sphi 0, %s22
      %s25 = sphi 0, %s23
      %s26 = sphi 0, %s24
      %s36 = sphi 0, %s38
      %s39 = sphi 0, %s36
      %s40 = sphi 0, %s39
      %s56 = sphi 0, %s40
      %s60 = sphi 0, %s60
      %s62 = sphi 0, %s60
      %s63 = sphi 0, %s62
      %s77 = sphi 0, %s63
      %s81 = sphi 0, %s81
      %s83 = sphi 0, %s81
      %s84 = sphi 0, %s83
      %s98 = sphi 0, %s84
      %s106 = sphi 0, %s108
      %s109 = sphi 0, %s106
      %s110 = sphi 0, %s109
      %s126 = sphi 0, %s110
    $region4: #{cspn_generate_accelerate.1} parent=1 // loop_header_branch
      %17 = sbr.rel (%p15) target = $region8
    $region5: #{cspn_generate_accelerate.1} parent=1 // loop_body
      %s19 = ssub.s32 %s14, 1
      %s20 = ssub.s32 %s14, 2
      %s27 = sadd.s32 1, %s22
      %p28 = scmp.ge.s32.totalorder %s27, 1
      %s29 = scalar_select %p28, 0, %s27
      %s30 = sadd.s32 1, %s21
      %s31 = scalar_select %p28, %s30, %s21
      %p32 = scmp.ge.s32.totalorder %s31, 2
      %s33 = scalar_select %p32, 0, %s31
      %s34 = ssub.s32 %s21, %s33
      %p35 = scmp.eq.s32.totalorder %s34, 0
      %s37 = sadd.s32 %s36, 1
      %s38 = scalar_select %p35, %s36, %s37
      %p41 = pneg %p35
      %p42 = scmp.eq.s32.totalorder %s14, 1
      %p43 = por %p41, %p42
      %p44 = scmp.ne.s32.totalorder %s36, %s39
      %p45 = scmp.eq.s32.totalorder %s14, 0
      %p46 = por %p44, %p45
      %p47 = scmp.ne.s32.totalorder %s36, %s39
      %p48 = scmp.eq.s32.totalorder %s19, 1
      %p49 = por %p47, %p48
      %p50 = scmp.ne.s32.totalorder %s39, %s40
      %p51 = scmp.eq.s32.totalorder %s19, 0
      %p52 = por %p50, %p51
      %p53 = scmp.ne.s32.totalorder %s39, %s40
      %p54 = scmp.eq.s32.totalorder %s20, 1
      %p55 = por %p53, %p54
      %p57 = scmp.ne.s32.totalorder %s40, %s56
      %p58 = scmp.eq.s32.totalorder %s20, 0
      %p59 = por %p57, %p58
      %s61 = sadd.s32 %s60, 1
      %p64 = scmp.eq.s32.totalorder %s14, 1
      %p65 = scmp.ne.s32.totalorder %s60, %s62
      %p66 = scmp.eq.s32.totalorder %s14, 0
      %p67 = por %p65, %p66
      %p68 = scmp.ne.s32.totalorder %s60, %s62
      %p69 = scmp.eq.s32.totalorder %s19, 1
      %p70 = por %p68, %p69
      %p71 = scmp.ne.s32.totalorder %s62, %s63
      %p72 = scmp.eq.s32.totalorder %s19, 0
      %p73 = por %p71, %p72
      %p74 = scmp.ne.s32.totalorder %s62, %s63
      %p75 = scmp.eq.s32.totalorder %s20, 1
      %p76 = por %p74, %p75
      %p78 = scmp.ne.s32.totalorder %s63, %s77
      %p79 = scmp.eq.s32.totalorder %s20, 0
      %p80 = por %p78, %p79
      %s82 = sadd.s32 %s81, 1
      %p85 = scmp.eq.s32.totalorder %s14, 1
      %p86 = scmp.ne.s32.totalorder %s81, %s83
      %p87 = scmp.eq.s32.totalorder %s14, 0
      %p88 = por %p86, %p87
      %p89 = scmp.ne.s32.totalorder %s81, %s83
      %p90 = scmp.eq.s32.totalorder %s19, 1
      %p91 = por %p89, %p90
      %p92 = scmp.ne.s32.totalorder %s83, %s84
      %p93 = scmp.eq.s32.totalorder %s19, 0
      %p94 = por %p92, %p93
      %p95 = scmp.ne.s32.totalorder %s83, %s84
      %p96 = scmp.eq.s32.totalorder %s20, 1
      %p97 = por %p95, %p96
      %p99 = scmp.ne.s32.totalorder %s84, %s98
      %p100 = scmp.eq.s32.totalorder %s20, 0
      %p101 = por %p99, %p100
      %s102 = ssub.s32 %s21, %s33
      %s103 = ssub.s32 %s22, %s29
      %s104 = sor.u32 %s102, %s103
      %p105 = scmp.eq.s32.totalorder %s104, 0
      %s107 = sadd.s32 %s106, 1
      %s108 = scalar_select %p105, %s106, %s107
      %p111 = pneg %p105
      %p112 = scmp.eq.s32.totalorder %s14, 1
      %p113 = por %p111, %p112
      %p114 = scmp.ne.s32.totalorder %s106, %s109
      %p115 = scmp.eq.s32.totalorder %s14, 0
      %p116 = por %p114, %p115
      %p117 = scmp.ne.s32.totalorder %s106, %s109
      %p118 = scmp.eq.s32.totalorder %s19, 1
      %p119 = por %p117, %p118
      %p120 = scmp.ne.s32.totalorder %s109, %s110
      %p121 = scmp.eq.s32.totalorder %s19, 0
      %p122 = por %p120, %p121
      %p123 = scmp.ne.s32.totalorder %s109, %s110
      %p124 = scmp.eq.s32.totalorder %s20, 1
      %p125 = por %p123, %p124
      %p127 = scmp.ne.s32.totalorder %s110, %s126
      %p128 = scmp.eq.s32.totalorder %s20, 0
      %p129 = por %p127, %p128
      %p130 = scmp.le.s32.totalorder 1, %s14
      %p131 = scmp.lt.s32.totalorder %s14, 3
      %p132 = pnand %p130, %p131
      %p133 = pneg %p132
      // Predicated region
      $region9: #{cspn_generate_accelerate.1} parent=5 // pred_check
        _
      $region10: #{cspn_generate_accelerate.1} parent=5 // pred_check_branch
        %135 = sbr.rel (%p132) target = $region12
      $region11: #{cspn_generate_accelerate.1} parent=5 // pred_region
        %s136 = ssub.s32 %s14, 1
        // Predicated region
        $region13: #{cspn_generate_accelerate.1} parent=11 // pred_check
          %p137 = pneg %p73
        $region14: #{cspn_generate_accelerate.1} parent=11 // pred_check_branch
          %139 = sbr.rel (%p137) target = $region16
        $region15: #{cspn_generate_accelerate.1} parent=11 // pred_region
          %s141 = ssub.s32 128, 128
          %142 = vsyncadd [#allocation5], %s141
          %s144 = sshll.u32 %s1, 4
          %s145 = int_to_ptr.vmem [resolvable:$true] %s144
          %147 = dma.vmem_to_smem %s145, 128, [#allocation3], [#allocation5]
        $region16: #{cspn_generate_accelerate.1} parent=11 // pred_fallthru
          _
        // Predicated region
        $region17: #{cspn_generate_accelerate.1} parent=11 // pred_check
          %p148 = pneg %p94
        $region18: #{cspn_generate_accelerate.1} parent=11 // pred_check_branch
          %150 = sbr.rel (%p148) target = $region20
        $region19: #{cspn_generate_accelerate.1} parent=11 // pred_region
          %s152 = ssub.s32 16, 16
          %153 = vsyncadd [#allocation7], %s152
          %s155 = sshll.u32 %s2, 4
          %s156 = int_to_ptr.vmem [resolvable:$true] %s155
          %158 = dma.vmem_to_smem %s156, 16, [#allocation6], [#allocation7]
        $region20: #{cspn_generate_accelerate.1} parent=11 // pred_fallthru
          _
      $region12: #{cspn_generate_accelerate.1} parent=5 // pred_fallthru
        _
      %p159 = scmp.lt.s32.totalorder %s14, 2
      // Predicated region
      $region21: #{cspn_generate_accelerate.1} parent=5 // pred_check
        %p160 = pneg %p159
      $region22: #{cspn_generate_accelerate.1} parent=5 // pred_check_branch
        %162 = sbr.rel (%p160) target = $region24
      $region23: #{cspn_generate_accelerate.1} parent=5 // pred_region
        // Predicated region
        $region25: #{cspn_generate_accelerate.1} parent=23 // pred_check
          %p163 = pneg %p46
        $region26: #{cspn_generate_accelerate.1} parent=23 // pred_check_branch
          %165 = sbr.rel (%p163) target = $region28
        $region27: #{cspn_generate_accelerate.1} parent=23 // pred_region
          %p166 = scmp.lt.s32.totalorder %s21, 1
          %s167 = scalar_select %p166, %s21, 1
          %s168 = smul.addr %s167, 8
          %s169 = smul.addr %s168, 8
          %s170 = scalar_lea.vmem %s0, %s169
        $region28: #{cspn_generate_accelerate.1} parent=23 // pred_fallthru
          _
      $region24: #{cspn_generate_accelerate.1} parent=5 // pred_fallthru
        _
      %p171 = scmp.le.s32.totalorder 1, %s14
      %p172 = scmp.lt.s32.totalorder %s14, 3
      %p173 = pnand %p171, %p172
      %p174 = pneg %p173
      // Predicated region
      $region29: #{cspn_generate_accelerate.1} parent=5 // pred_check
        _
      $region30: #{cspn_generate_accelerate.1} parent=5 // pred_check_branch
        %176 = sbr.rel (%p173) target = $region32
      $region31: #{cspn_generate_accelerate.1} parent=5 // pred_region
        %s177 = ssub.s32 %s14, 1
        // Predicated region
        $region33: #{cspn_generate_accelerate.1} parent=31 // pred_check
          %p178 = pneg %p73
        $region34: #{cspn_generate_accelerate.1} parent=31 // pred_check_branch
          %180 = sbr.rel (%p178) target = $region36
        $region35: #{cspn_generate_accelerate.1} parent=31 // pred_region
          %181 = dma.done [#allocation5], 128
        $region36: #{cspn_generate_accelerate.1} parent=31 // pred_fallthru
          _
        // Predicated region
        $region37: #{cspn_generate_accelerate.1} parent=31 // pred_check
          %p182 = pneg %p94
        $region38: #{cspn_generate_accelerate.1} parent=31 // pred_check_branch
          %184 = sbr.rel (%p182) target = $region40
        $region39: #{cspn_generate_accelerate.1} parent=31 // pred_region
          %185 = dma.done [#allocation7], 16
        $region40: #{cspn_generate_accelerate.1} parent=31 // pred_fallthru
          _
        %186 = sfence
        %p187 = scmp.lt.s32.totalorder %s23, 1
        %s188 = scalar_select %p187, %s23, 1
        %s189 = smul.addr %s188, 8
        %s190 = smul.addr %s189, 8
        %s191 = scalar_lea.vmem %s0, %s190
        %p192 = pneg %p52
        %p193 = pneg %p49
        %p194 = pneg %p73
        %p195 = pneg %p70
        %p196 = pneg %p94
        %p197 = pneg %p91
        %p198 = pneg %p122
        %p199 = pneg %p119
        %s200 = sand.u32 %s109, 1
        %s201 = scalar_lea.sflag [#allocation4], %s200
        %s202 = sand.u32 %s109, 1
        %s203 = smul.addr %s202, 144
        %s204 = scalar_lea.vmem [#allocation8], %s203
        %p205 = scmp.lt.s32.totalorder %s23, 1
        %s206 = scalar_select %p205, %s23, 1
        %s207 = smul.addr %s206, 8
        %s208 = smul.addr %s207, 8
        %s209 = scalar_lea.vmem %s0, %s208
        %s210 = smul.u32 2, %s24
        %s211 = smul.u32 %s24, 16
        %vm212 = vcmask 146432
        %213 = vst.msk [vmem:[#allocation2] sm:$0xff] %vm212, 0.0
        %214 = vst.msk [vmem:[#allocation2 + $0x8] sm:$0xff] %vm212, 0.0
        %vm215 = vcmask 140288
        %216 = vst.msk [vmem:[#allocation2 + $0x10] sm:$0x3] %vm215, 0.0
        %217 = vst.msk [vmem:[#allocation2 + $0x18] sm:$0xff] %vm212, 0.0
        %218 = vst.msk [vmem:[#allocation2 + $0x20] sm:$0xff] %vm212, 0.0
        %219 = vst.msk [vmem:[#allocation2 + $0x28] sm:$0x3] %vm215, 0.0
        %220 = vst.msk [vmem:[#allocation2 + $0x30] sm:$0xff] %vm212, 0.0
        %221 = vst.msk [vmem:[#allocation2 + $0x38] sm:$0xff] %vm212, 0.0
        %222 = vst.msk [vmem:[#allocation2 + $0x40] sm:$0x3] %vm215, 0.0
        %223 = vst.msk [vmem:[#allocation2 + $0x48] sm:$0xff] %vm212, 0.0
        %224 = vst.msk [vmem:[#allocation2 + $0x50] sm:$0xff] %vm212, 0.0
        %225 = vst.msk [vmem:[#allocation2 + $0x58] sm:$0x3] %vm215, 0.0
        %s226 = scalar_lea.vmem %s209, %s211
        %v227 = vld [vmem:[%s226] sm:$0xff]
        %v228 = vld [vmem:[%s226 + $0x8] sm:$0xff]
        %231 = vrot.lane.b32.xlu0 %v227, 1
        %v232 = vpop.permute.xlu0 %231
        %233 = vrot.lane.b32.xlu0 %v228, 1
        %v234 = vpop.permute.xlu0 %233
        %vm237 = vcmask 138248
        %238 = vst.msk [vmem:[#allocation2 + $0x1] sm:$0xff] %vm237, %v232
        %239 = vst.msk [vmem:[#allocation2 + $0x9] sm:$0xff] %vm237, %v234
        %s240 = sadd.s32 %s211, 16
        %s241 = scalar_lea.vmem %s209, %s240
        %v242 = vld [vmem:[%s241] sm:$0xff]
        %v243 = vld [vmem:[%s241 + $0x8] sm:$0xff]
        %246 = vrot.lane.b32.xlu0 %v242, 1
        %v247 = vpop.permute.xlu0 %246
        %248 = vrot.lane.b32.xlu0 %v243, 1
        %v249 = vpop.permute.xlu0 %248
        %s252 = scalar_lea.vmem [#allocation2], 24
        %253 = vst.msk [vmem:[%s252 + $0x1] sm:$0xff] %vm237, %v247
        %254 = vst.msk [vmem:[%s252 + $0x9] sm:$0xff] %vm237, %v249
        %s255 = sadd.s32 %s211, 32
        %s256 = scalar_lea.vmem %s209, %s255
        %v257 = vld [vmem:[%s256] sm:$0xff]
        %v258 = vld [vmem:[%s256 + $0x8] sm:$0xff]
        %261 = vrot.lane.b32.xlu0 %v257, 1
        %v262 = vpop.permute.xlu0 %261
        %263 = vrot.lane.b32.xlu0 %v258, 1
        %v264 = vpop.permute.xlu0 %263
        %s267 = scalar_lea.vmem [#allocation2], 48
        %268 = vst.msk [vmem:[%s267 + $0x1] sm:$0xff] %vm237, %v262
        %269 = vst.msk [vmem:[%s267 + $0x9] sm:$0xff] %vm237, %v264
        %s270 = sadd.s32 %s211, 48
        %s271 = scalar_lea.vmem %s209, %s270
        %v272 = vld [vmem:[%s271] sm:$0xff]
        %v273 = vld [vmem:[%s271 + $0x8] sm:$0xff]
        %276 = vrot.lane.b32.xlu0 %v272, 1
        %v277 = vpop.permute.xlu0 %276
        %278 = vrot.lane.b32.xlu0 %v273, 1
        %v279 = vpop.permute.xlu0 %278
        %s282 = scalar_lea.vmem [#allocation2], 72
        %283 = vst.msk [vmem:[%s282 + $0x1] sm:$0xff] %vm237, %v277
        %284 = vst.msk [vmem:[%s282 + $0x9] sm:$0xff] %vm237, %v279
        %p285 = scmp.gt.s32.totalorder %s211, 0
        // Predicated region
        $region41: #{cspn_generate_accelerate.1} parent=31 // pred_check
          %p286 = pneg %p285
        $region42: #{cspn_generate_accelerate.1} parent=31 // pred_check_branch
          %288 = sbr.rel (%p286) target = $region44
        $region43: #{cspn_generate_accelerate.1} parent=31 // pred_region
          %s289 = ssub.s32 %s211, 1
          %s290 = scalar_lea.vmem %s209, %s289
          %v291 = vld [vmem:[%s290] sm:$0x1]
          %293 = vrot.lane.b32.xlu0 %v291, 1
          %v294 = vpop.permute.xlu0 %293
          %vm296 = vcmask 131080
          %297 = vst.msk [vmem:[#allocation2] sm:$0x1] %vm296, %v294
          %s298 = sadd.s32 %s289, 16
          %s299 = scalar_lea.vmem %s209, %s298
          %v300 = vld [vmem:[%s299] sm:$0x1]
          %302 = vrot.lane.b32.xlu0 %v300, 1
          %v303 = vpop.permute.xlu0 %302
          %305 = vst.msk [vmem:[%s252] sm:$0x1] %vm296, %v303
          %s306 = sadd.s32 %s289, 32
          %s307 = scalar_lea.vmem %s209, %s306
          %v308 = vld [vmem:[%s307] sm:$0x1]
          %310 = vrot.lane.b32.xlu0 %v308, 1
          %v311 = vpop.permute.xlu0 %310
          %313 = vst.msk [vmem:[%s267] sm:$0x1] %vm296, %v311
          %s314 = sadd.s32 %s289, 48
          %s315 = scalar_lea.vmem %s209, %s314
          %v316 = vld [vmem:[%s315] sm:$0x1]
          %318 = vrot.lane.b32.xlu0 %v316, 1
          %v319 = vpop.permute.xlu0 %318
          %321 = vst.msk [vmem:[%s282] sm:$0x1] %vm296, %v319
        $region44: #{cspn_generate_accelerate.1} parent=31 // pred_fallthru
          _
        %p322 = scmp.lt.s32.totalorder %s240, 16
        // Predicated region
        $region45: #{cspn_generate_accelerate.1} parent=31 // pred_check
          %p323 = pneg %p322
        $region46: #{cspn_generate_accelerate.1} parent=31 // pred_check_branch
          %325 = sbr.rel (%p323) target = $region48
        $region47: #{cspn_generate_accelerate.1} parent=31 // pred_region
          %v326 = vld [vmem:[%s241] sm:$0x1]
          %328 = vrot.lane.b32.xlu0 %v326, 1
          %v329 = vpop.permute.xlu0 %328
          %vm331 = vcmask 131080
          %332 = vst.msk [vmem:[#allocation2 + $0x11] sm:$0x1] %vm331, %v329
          %s333 = sadd.s32 %s240, 16
          %s334 = scalar_lea.vmem %s209, %s333
          %v335 = vld [vmem:[%s334] sm:$0x1]
          %337 = vrot.lane.b32.xlu0 %v335, 1
          %v338 = vpop.permute.xlu0 %337
          %340 = vst.msk [vmem:[%s252 + $0x11] sm:$0x1] %vm331, %v338
          %s341 = sadd.s32 %s240, 32
          %s342 = scalar_lea.vmem %s209, %s341
          %v343 = vld [vmem:[%s342] sm:$0x1]
          %345 = vrot.lane.b32.xlu0 %v343, 1
          %v346 = vpop.permute.xlu0 %345
          %348 = vst.msk [vmem:[%s267 + $0x11] sm:$0x1] %vm331, %v346
          %s349 = sadd.s32 %s240, 48
          %s350 = scalar_lea.vmem %s209, %s349
          %v351 = vld [vmem:[%s350] sm:$0x1]
          %353 = vrot.lane.b32.xlu0 %v351, 1
          %v354 = vpop.permute.xlu0 %353
          %356 = vst.msk [vmem:[%s282 + $0x11] sm:$0x1] %vm331, %v354
        $region48: #{cspn_generate_accelerate.1} parent=31 // pred_fallthru
          _
        %v357 = vld [vmem:[#allocation2] sm:$0xff]
        %v358 = vld [vmem:[#allocation2 + $0x8] sm:$0xff]
        %s359 = sld [smem:[#allocation3]]
        %v360 = vstv %s359
        %v361 = vmul.f32 %v360, %v357
        %v362 = vmul.f32 %v360, %v358
        %s363 = sld [smem:[#allocation3 + $0x80]]
        %v364 = vstv %s363
        %v365 = vmul.f32 %v364, %v357
        %v366 = vmul.f32 %v364, %v358
        %s367 = sld [smem:[#allocation3 + $0x100]]
        %v368 = vstv %s367
        %v369 = vmul.f32 %v368, %v357
        %v370 = vmul.f32 %v368, %v358
        %s371 = sld [smem:[#allocation3 + $0x180]]
        %v372 = vstv %s371
        %v373 = vmul.f32 %v372, %v357
        %v374 = vmul.f32 %v372, %v358
        %s375 = sld [smem:[#allocation3 + $0x200]]
        %v376 = vstv %s375
        %v377 = vmul.f32 %v376, %v357
        %v378 = vmul.f32 %v376, %v358
        %s379 = sld [smem:[#allocation3 + $0x280]]
        %v380 = vstv %s379
        %v381 = vmul.f32 %v380, %v357
        %v382 = vmul.f32 %v380, %v358
        %s383 = sld [smem:[#allocation3 + $0x300]]
        %v384 = vstv %s383
        %v385 = vmul.f32 %v384, %v357
        %v386 = vmul.f32 %v384, %v358
        %s387 = sld [smem:[#allocation3 + $0x380]]
        %v388 = vstv %s387
        %v389 = vmul.f32 %v388, %v357
        %v390 = vmul.f32 %v388, %v358
        %s391 = sld [smem:[#allocation3 + $0x1]]
        %v392 = vstv %s391
        %v393 = vmul.f32 %v392, %v357
        %v394 = vmul.f32 %v392, %v358
        %397 = vrot.lane.b32.xlu0 %v393, 127
        %v398 = vpop.permute.xlu0 %397
        %399 = vrot.lane.b32.xlu0 %v394, 127
        %v400 = vpop.permute.xlu0 %399
        %v403 = vadd.f32 %v361, %v398
        %v404 = vadd.f32 %v362, %v400
        %s405 = sld [smem:[#allocation3 + $0x81]]
        %v406 = vstv %s405
        %v407 = vmul.f32 %v406, %v357
        %v408 = vmul.f32 %v406, %v358
        %411 = vrot.lane.b32.xlu0 %v407, 127
        %v412 = vpop.permute.xlu0 %411
        %413 = vrot.lane.b32.xlu0 %v408, 127
        %v414 = vpop.permute.xlu0 %413
        %v417 = vadd.f32 %v365, %v412
        %v418 = vadd.f32 %v366, %v414
        %s419 = sld [smem:[#allocation3 + $0x101]]
        %v420 = vstv %s419
        %v421 = vmul.f32 %v420, %v357
        %v422 = vmul.f32 %v420, %v358
        %425 = vrot.lane.b32.xlu0 %v421, 127
        %v426 = vpop.permute.xlu0 %425
        %427 = vrot.lane.b32.xlu0 %v422, 127
        %v428 = vpop.permute.xlu0 %427
        %v431 = vadd.f32 %v369, %v426
        %v432 = vadd.f32 %v370, %v428
        %s433 = sld [smem:[#allocation3 + $0x181]]
        %v434 = vstv %s433
        %v435 = vmul.f32 %v434, %v357
        %v436 = vmul.f32 %v434, %v358
        %439 = vrot.lane.b32.xlu0 %v435, 127
        %v440 = vpop.permute.xlu0 %439
        %441 = vrot.lane.b32.xlu0 %v436, 127
        %v442 = vpop.permute.xlu0 %441
        %v445 = vadd.f32 %v373, %v440
        %v446 = vadd.f32 %v374, %v442
        %s447 = sld [smem:[#allocation3 + $0x201]]
        %v448 = vstv %s447
        %v449 = vmul.f32 %v448, %v357
        %v450 = vmul.f32 %v448, %v358
        %453 = vrot.lane.b32.xlu0 %v449, 127
        %v454 = vpop.permute.xlu0 %453
        %455 = vrot.lane.b32.xlu0 %v450, 127
        %v456 = vpop.permute.xlu0 %455
        %v459 = vadd.f32 %v377, %v454
        %v460 = vadd.f32 %v378, %v456
        %s461 = sld [smem:[#allocation3 + $0x281]]
        %v462 = vstv %s461
        %v463 = vmul.f32 %v462, %v357
        %v464 = vmul.f32 %v462, %v358
        %467 = vrot.lane.b32.xlu0 %v463, 127
        %v468 = vpop.permute.xlu0 %467
        %469 = vrot.lane.b32.xlu0 %v464, 127
        %v470 = vpop.permute.xlu0 %469
        %v473 = vadd.f32 %v381, %v468
        %v474 = vadd.f32 %v382, %v470
        %s475 = sld [smem:[#allocation3 + $0x301]]
        %v476 = vstv %s475
        %v477 = vmul.f32 %v476, %v357
        %v478 = vmul.f32 %v476, %v358
        %481 = vrot.lane.b32.xlu0 %v477, 127
        %v482 = vpop.permute.xlu0 %481
        %483 = vrot.lane.b32.xlu0 %v478, 127
        %v484 = vpop.permute.xlu0 %483
        %v487 = vadd.f32 %v385, %v482
        %v488 = vadd.f32 %v386, %v484
        %s489 = sld [smem:[#allocation3 + $0x381]]
        %v490 = vstv %s489
        %v491 = vmul.f32 %v490, %v357
        %v492 = vmul.f32 %v490, %v358
        %495 = vrot.lane.b32.xlu0 %v491, 127
        %v496 = vpop.permute.xlu0 %495
        %497 = vrot.lane.b32.xlu0 %v492, 127
        %v498 = vpop.permute.xlu0 %497
        %v501 = vadd.f32 %v389, %v496
        %v502 = vadd.f32 %v390, %v498
        %s503 = sld [smem:[#allocation3 + $0x2]]
        %v504 = vstv %s503
        %v505 = vmul.f32 %v504, %v357
        %v506 = vmul.f32 %v504, %v358
        %509 = vrot.lane.b32.xlu0 %v505, 126
        %v510 = vpop.permute.xlu0 %509
        %511 = vrot.lane.b32.xlu0 %v506, 126
        %v512 = vpop.permute.xlu0 %511
        %v515 = vadd.f32 %v403, %v510
        %v516 = vadd.f32 %v404, %v512
        %s517 = sld [smem:[#allocation3 + $0x82]]
        %v518 = vstv %s517
        %v519 = vmul.f32 %v518, %v357
        %v520 = vmul.f32 %v518, %v358
        %523 = vrot.lane.b32.xlu0 %v519, 126
        %v524 = vpop.permute.xlu0 %523
        %525 = vrot.lane.b32.xlu0 %v520, 126
        %v526 = vpop.permute.xlu0 %525
        %v529 = vadd.f32 %v417, %v524
        %v530 = vadd.f32 %v418, %v526
        %s531 = sld [smem:[#allocation3 + $0x102]]
        %v532 = vstv %s531
        %v533 = vmul.f32 %v532, %v357
        %v534 = vmul.f32 %v532, %v358
        %537 = vrot.lane.b32.xlu0 %v533, 126
        %v538 = vpop.permute.xlu0 %537
        %539 = vrot.lane.b32.xlu0 %v534, 126
        %v540 = vpop.permute.xlu0 %539
        %v543 = vadd.f32 %v431, %v538
        %v544 = vadd.f32 %v432, %v540
        %s545 = sld [smem:[#allocation3 + $0x182]]
        %v546 = vstv %s545
        %v547 = vmul.f32 %v546, %v357
        %v548 = vmul.f32 %v546, %v358
        %551 = vrot.lane.b32.xlu0 %v547, 126
        %v552 = vpop.permute.xlu0 %551
        %553 = vrot.lane.b32.xlu0 %v548, 126
        %v554 = vpop.permute.xlu0 %553
        %v557 = vadd.f32 %v445, %v552
        %v558 = vadd.f32 %v446, %v554
        %s559 = sld [smem:[#allocation3 + $0x202]]
        %v560 = vstv %s559
        %v561 = vmul.f32 %v560, %v357
        %v562 = vmul.f32 %v560, %v358
        %565 = vrot.lane.b32.xlu0 %v561, 126
        %v566 = vpop.permute.xlu0 %565
        %567 = vrot.lane.b32.xlu0 %v562, 126
        %v568 = vpop.permute.xlu0 %567
        %v571 = vadd.f32 %v459, %v566
        %v572 = vadd.f32 %v460, %v568
        %s573 = sld [smem:[#allocation3 + $0x282]]
        %v574 = vstv %s573
        %v575 = vmul.f32 %v574, %v357
        %v576 = vmul.f32 %v574, %v358
        %579 = vrot.lane.b32.xlu0 %v575, 126
        %v580 = vpop.permute.xlu0 %579
        %581 = vrot.lane.b32.xlu0 %v576, 126
        %v582 = vpop.permute.xlu0 %581
        %v585 = vadd.f32 %v473, %v580
        %v586 = vadd.f32 %v474, %v582
        %s587 = sld [smem:[#allocation3 + $0x302]]
        %v588 = vstv %s587
        %v589 = vmul.f32 %v588, %v357
        %v590 = vmul.f32 %v588, %v358
        %593 = vrot.lane.b32.xlu0 %v589, 126
        %v594 = vpop.permute.xlu0 %593
        %595 = vrot.lane.b32.xlu0 %v590, 126
        %v596 = vpop.permute.xlu0 %595
        %v599 = vadd.f32 %v487, %v594
        %v600 = vadd.f32 %v488, %v596
        %s601 = sld [smem:[#allocation3 + $0x382]]
        %v602 = vstv %s601
        %v603 = vmul.f32 %v602, %v357
        %v604 = vmul.f32 %v602, %v358
        %607 = vrot.lane.b32.xlu0 %v603, 126
        %v608 = vpop.permute.xlu0 %607
        %609 = vrot.lane.b32.xlu0 %v604, 126
        %v610 = vpop.permute.xlu0 %609
        %v613 = vadd.f32 %v501, %v608
        %v614 = vadd.f32 %v502, %v610
        %v615 = vld [vmem:[#allocation2 + $0x1] sm:$0xff]
        %v616 = vld [vmem:[#allocation2 + $0x9] sm:$0xff]
        %s617 = sld [smem:[#allocation3 + $0x3]]
        %v618 = vstv %s617
        %v619 = vmul.f32 %v618, %v615
        %v620 = vmul.f32 %v618, %v616
        %v621 = vadd.f32 %v515, %v619
        %v622 = vadd.f32 %v516, %v620
        %s623 = sld [smem:[#allocation3 + $0x83]]
        %v624 = vstv %s623
        %v625 = vmul.f32 %v624, %v615
        %v626 = vmul.f32 %v624, %v616
        %v627 = vadd.f32 %v529, %v625
        %v628 = vadd.f32 %v530, %v626
        %s629 = sld [smem:[#allocation3 + $0x103]]
        %v630 = vstv %s629
        %v631 = vmul.f32 %v630, %v615
        %v632 = vmul.f32 %v630, %v616
        %v633 = vadd.f32 %v543, %v631
        %v634 = vadd.f32 %v544, %v632
        %s635 = sld [smem:[#allocation3 + $0x183]]
        %v636 = vstv %s635
        %v637 = vmul.f32 %v636, %v615
        %v638 = vmul.f32 %v636, %v616
        %v639 = vadd.f32 %v557, %v637
        %v640 = vadd.f32 %v558, %v638
        %s641 = sld [smem:[#allocation3 + $0x203]]
        %v642 = vstv %s641
        %v643 = vmul.f32 %v642, %v615
        %v644 = vmul.f32 %v642, %v616
        %v645 = vadd.f32 %v571, %v643
        %v646 = vadd.f32 %v572, %v644
        %s647 = sld [smem:[#allocation3 + $0x283]]
        %v648 = vstv %s647
        %v649 = vmul.f32 %v648, %v615
        %v650 = vmul.f32 %v648, %v616
        %v651 = vadd.f32 %v585, %v649
        %v652 = vadd.f32 %v586, %v650
        %s653 = sld [smem:[#allocation3 + $0x303]]
        %v654 = vstv %s653
        %v655 = vmul.f32 %v654, %v615
        %v656 = vmul.f32 %v654, %v616
        %v657 = vadd.f32 %v599, %v655
        %v658 = vadd.f32 %v600, %v656
        %s659 = sld [smem:[#allocation3 + $0x383]]
        %v660 = vstv %s659
        %v661 = vmul.f32 %v660, %v615
        %v662 = vmul.f32 %v660, %v616
        %v663 = vadd.f32 %v613, %v661
        %v664 = vadd.f32 %v614, %v662
        %s665 = sld [smem:[#allocation3 + $0x4]]
        %v666 = vstv %s665
        %v667 = vmul.f32 %v666, %v615
        %v668 = vmul.f32 %v666, %v616
        %671 = vrot.lane.b32.xlu0 %v667, 127
        %v672 = vpop.permute.xlu0 %671
        %673 = vrot.lane.b32.xlu0 %v668, 127
        %v674 = vpop.permute.xlu0 %673
        %v677 = vadd.f32 %v621, %v672
        %v678 = vadd.f32 %v622, %v674
        %s679 = sld [smem:[#allocation3 + $0x84]]
        %v680 = vstv %s679
        %v681 = vmul.f32 %v680, %v615
        %v682 = vmul.f32 %v680, %v616
        %685 = vrot.lane.b32.xlu0 %v681, 127
        %v686 = vpop.permute.xlu0 %685
        %687 = vrot.lane.b32.xlu0 %v682, 127
        %v688 = vpop.permute.xlu0 %687
        %v691 = vadd.f32 %v627, %v686
        %v692 = vadd.f32 %v628, %v688
        %s693 = sld [smem:[#allocation3 + $0x104]]
        %v694 = vstv %s693
        %v695 = vmul.f32 %v694, %v615
        %v696 = vmul.f32 %v694, %v616
        %699 = vrot.lane.b32.xlu0 %v695, 127
        %v700 = vpop.permute.xlu0 %699
        %701 = vrot.lane.b32.xlu0 %v696, 127
        %v702 = vpop.permute.xlu0 %701
        %v705 = vadd.f32 %v633, %v700
        %v706 = vadd.f32 %v634, %v702
        %s707 = sld [smem:[#allocation3 + $0x184]]
        %v708 = vstv %s707
        %v709 = vmul.f32 %v708, %v615
        %v710 = vmul.f32 %v708, %v616
        %713 = vrot.lane.b32.xlu0 %v709, 127
        %v714 = vpop.permute.xlu0 %713
        %715 = vrot.lane.b32.xlu0 %v710, 127
        %v716 = vpop.permute.xlu0 %715
        %v719 = vadd.f32 %v639, %v714
        %v720 = vadd.f32 %v640, %v716
        %s721 = sld [smem:[#allocation3 + $0x204]]
        %v722 = vstv %s721
        %v723 = vmul.f32 %v722, %v615
        %v724 = vmul.f32 %v722, %v616
        %727 = vrot.lane.b32.xlu0 %v723, 127
        %v728 = vpop.permute.xlu0 %727
        %729 = vrot.lane.b32.xlu0 %v724, 127
        %v730 = vpop.permute.xlu0 %729
        %v733 = vadd.f32 %v645, %v728
        %v734 = vadd.f32 %v646, %v730
        %s735 = sld [smem:[#allocation3 + $0x284]]
        %v736 = vstv %s735
        %v737 = vmul.f32 %v736, %v615
        %v738 = vmul.f32 %v736, %v616
        %741 = vrot.lane.b32.xlu0 %v737, 127
        %v742 = vpop.permute.xlu0 %741
        %743 = vrot.lane.b32.xlu0 %v738, 127
        %v744 = vpop.permute.xlu0 %743
        %v747 = vadd.f32 %v651, %v742
        %v748 = vadd.f32 %v652, %v744
        %s749 = sld [smem:[#allocation3 + $0x304]]
        %v750 = vstv %s749
        %v751 = vmul.f32 %v750, %v615
        %v752 = vmul.f32 %v750, %v616
        %755 = vrot.lane.b32.xlu0 %v751, 127
        %v756 = vpop.permute.xlu0 %755
        %757 = vrot.lane.b32.xlu0 %v752, 127
        %v758 = vpop.permute.xlu0 %757
        %v761 = vadd.f32 %v657, %v756
        %v762 = vadd.f32 %v658, %v758
        %s763 = sld [smem:[#allocation3 + $0x384]]
        %v764 = vstv %s763
        %v765 = vmul.f32 %v764, %v615
        %v766 = vmul.f32 %v764, %v616
        %769 = vrot.lane.b32.xlu0 %v765, 127
        %v770 = vpop.permute.xlu0 %769
        %771 = vrot.lane.b32.xlu0 %v766, 127
        %v772 = vpop.permute.xlu0 %771
        %v775 = vadd.f32 %v663, %v770
        %v776 = vadd.f32 %v664, %v772
        %s777 = sld [smem:[#allocation3 + $0x5]]
        %v778 = vstv %s777
        %v779 = vmul.f32 %v778, %v615
        %v780 = vmul.f32 %v778, %v616
        %783 = vrot.lane.b32.xlu0 %v779, 126
        %v784 = vpop.permute.xlu0 %783
        %785 = vrot.lane.b32.xlu0 %v780, 126
        %v786 = vpop.permute.xlu0 %785
        %v789 = vadd.f32 %v677, %v784
        %v790 = vadd.f32 %v678, %v786
        %s791 = sld [smem:[#allocation3 + $0x85]]
        %v792 = vstv %s791
        %v793 = vmul.f32 %v792, %v615
        %v794 = vmul.f32 %v792, %v616
        %797 = vrot.lane.b32.xlu0 %v793, 126
        %v798 = vpop.permute.xlu0 %797
        %799 = vrot.lane.b32.xlu0 %v794, 126
        %v800 = vpop.permute.xlu0 %799
        %v803 = vadd.f32 %v691, %v798
        %v804 = vadd.f32 %v692, %v800
        %s805 = sld [smem:[#allocation3 + $0x105]]
        %v806 = vstv %s805
        %v807 = vmul.f32 %v806, %v615
        %v808 = vmul.f32 %v806, %v616
        %811 = vrot.lane.b32.xlu0 %v807, 126
        %v812 = vpop.permute.xlu0 %811
        %813 = vrot.lane.b32.xlu0 %v808, 126
        %v814 = vpop.permute.xlu0 %813
        %v817 = vadd.f32 %v705, %v812
        %v818 = vadd.f32 %v706, %v814
        %s819 = sld [smem:[#allocation3 + $0x185]]
        %v820 = vstv %s819
        %v821 = vmul.f32 %v820, %v615
        %v822 = vmul.f32 %v820, %v616
        %825 = vrot.lane.b32.xlu0 %v821, 126
        %v826 = vpop.permute.xlu0 %825
        %827 = vrot.lane.b32.xlu0 %v822, 126
        %v828 = vpop.permute.xlu0 %827
        %v831 = vadd.f32 %v719, %v826
        %v832 = vadd.f32 %v720, %v828
        %s833 = sld [smem:[#allocation3 + $0x205]]
        %v834 = vstv %s833
        %v835 = vmul.f32 %v834, %v615
        %v836 = vmul.f32 %v834, %v616
        %839 = vrot.lane.b32.xlu0 %v835, 126
        %v840 = vpop.permute.xlu0 %839
        %841 = vrot.lane.b32.xlu0 %v836, 126
        %v842 = vpop.permute.xlu0 %841
        %v845 = vadd.f32 %v733, %v840
        %v846 = vadd.f32 %v734, %v842
        %s847 = sld [smem:[#allocation3 + $0x285]]
        %v848 = vstv %s847
        %v849 = vmul.f32 %v848, %v615
        %v850 = vmul.f32 %v848, %v616
        %853 = vrot.lane.b32.xlu0 %v849, 126
        %v854 = vpop.permute.xlu0 %853
        %855 = vrot.lane.b32.xlu0 %v850, 126
        %v856 = vpop.permute.xlu0 %855
        %v859 = vadd.f32 %v747, %v854
        %v860 = vadd.f32 %v748, %v856
        %s861 = sld [smem:[#allocation3 + $0x305]]
        %v862 = vstv %s861
        %v863 = vmul.f32 %v862, %v615
        %v864 = vmul.f32 %v862, %v616
        %867 = vrot.lane.b32.xlu0 %v863, 126
        %v868 = vpop.permute.xlu0 %867
        %869 = vrot.lane.b32.xlu0 %v864, 126
        %v870 = vpop.permute.xlu0 %869
        %v873 = vadd.f32 %v761, %v868
        %v874 = vadd.f32 %v762, %v870
        %s875 = sld [smem:[#allocation3 + $0x385]]
        %v876 = vstv %s875
        %v877 = vmul.f32 %v876, %v615
        %v878 = vmul.f32 %v876, %v616
        %881 = vrot.lane.b32.xlu0 %v877, 126
        %v882 = vpop.permute.xlu0 %881
        %883 = vrot.lane.b32.xlu0 %v878, 126
        %v884 = vpop.permute.xlu0 %883
        %v887 = vadd.f32 %v775, %v882
        %v888 = vadd.f32 %v776, %v884
        %v889 = vld [vmem:[#allocation2 + $0x2] sm:$0xff]
        %v890 = vld [vmem:[#allocation2 + $0xa] sm:$0xff]
        %s891 = sld [smem:[#allocation3 + $0x6]]
        %v892 = vstv %s891
        %v893 = vmul.f32 %v892, %v889
        %v894 = vmul.f32 %v892, %v890
        %v895 = vadd.f32 %v789, %v893
        %v896 = vadd.f32 %v790, %v894
        %s897 = sld [smem:[#allocation3 + $0x86]]
        %v898 = vstv %s897
        %v899 = vmul.f32 %v898, %v889
        %v900 = vmul.f32 %v898, %v890
        %v901 = vadd.f32 %v803, %v899
        %v902 = vadd.f32 %v804, %v900
        %s903 = sld [smem:[#allocation3 + $0x106]]
        %v904 = vstv %s903
        %v905 = vmul.f32 %v904, %v889
        %v906 = vmul.f32 %v904, %v890
        %v907 = vadd.f32 %v817, %v905
        %v908 = vadd.f32 %v818, %v906
        %s909 = sld [smem:[#allocation3 + $0x186]]
        %v910 = vstv %s909
        %v911 = vmul.f32 %v910, %v889
        %v912 = vmul.f32 %v910, %v890
        %v913 = vadd.f32 %v831, %v911
        %v914 = vadd.f32 %v832, %v912
        %s915 = sld [smem:[#allocation3 + $0x206]]
        %v916 = vstv %s915
        %v917 = vmul.f32 %v916, %v889
        %v918 = vmul.f32 %v916, %v890
        %v919 = vadd.f32 %v845, %v917
        %v920 = vadd.f32 %v846, %v918
        %s921 = sld [smem:[#allocation3 + $0x286]]
        %v922 = vstv %s921
        %v923 = vmul.f32 %v922, %v889
        %v924 = vmul.f32 %v922, %v890
        %v925 = vadd.f32 %v859, %v923
        %v926 = vadd.f32 %v860, %v924
        %s927 = sld [smem:[#allocation3 + $0x306]]
        %v928 = vstv %s927
        %v929 = vmul.f32 %v928, %v889
        %v930 = vmul.f32 %v928, %v890
        %v931 = vadd.f32 %v873, %v929
        %v932 = vadd.f32 %v874, %v930
        %s933 = sld [smem:[#allocation3 + $0x386]]
        %v934 = vstv %s933
        %v935 = vmul.f32 %v934, %v889
        %v936 = vmul.f32 %v934, %v890
        %v937 = vadd.f32 %v887, %v935
        %v938 = vadd.f32 %v888, %v936
        %s939 = sld [smem:[#allocation3 + $0x7]]
        %v940 = vstv %s939
        %v941 = vmul.f32 %v940, %v889
        %v942 = vmul.f32 %v940, %v890
        %945 = vrot.lane.b32.xlu0 %v941, 127
        %v946 = vpop.permute.xlu0 %945
        %947 = vrot.lane.b32.xlu0 %v942, 127
        %v948 = vpop.permute.xlu0 %947
        %v951 = vadd.f32 %v895, %v946
        %v952 = vadd.f32 %v896, %v948
        %s953 = sld [smem:[#allocation3 + $0x87]]
        %v954 = vstv %s953
        %v955 = vmul.f32 %v954, %v889
        %v956 = vmul.f32 %v954, %v890
        %959 = vrot.lane.b32.xlu0 %v955, 127
        %v960 = vpop.permute.xlu0 %959
        %961 = vrot.lane.b32.xlu0 %v956, 127
        %v962 = vpop.permute.xlu0 %961
        %v965 = vadd.f32 %v901, %v960
        %v966 = vadd.f32 %v902, %v962
        %s967 = sld [smem:[#allocation3 + $0x107]]
        %v968 = vstv %s967
        %v969 = vmul.f32 %v968, %v889
        %v970 = vmul.f32 %v968, %v890
        %973 = vrot.lane.b32.xlu0 %v969, 127
        %v974 = vpop.permute.xlu0 %973
        %975 = vrot.lane.b32.xlu0 %v970, 127
        %v976 = vpop.permute.xlu0 %975
        %v979 = vadd.f32 %v907, %v974
        %v980 = vadd.f32 %v908, %v976
        %s981 = sld [smem:[#allocation3 + $0x187]]
        %v982 = vstv %s981
        %v983 = vmul.f32 %v982, %v889
        %v984 = vmul.f32 %v982, %v890
        %987 = vrot.lane.b32.xlu0 %v983, 127
        %v988 = vpop.permute.xlu0 %987
        %989 = vrot.lane.b32.xlu0 %v984, 127
        %v990 = vpop.permute.xlu0 %989
        %v993 = vadd.f32 %v913, %v988
        %v994 = vadd.f32 %v914, %v990
        %s995 = sld [smem:[#allocation3 + $0x207]]
        %v996 = vstv %s995
        %v997 = vmul.f32 %v996, %v889
        %v998 = vmul.f32 %v996, %v890
        %1001 = vrot.lane.b32.xlu0 %v997, 127
        %v1002 = vpop.permute.xlu0 %1001
        %1003 = vrot.lane.b32.xlu0 %v998, 127
        %v1004 = vpop.permute.xlu0 %1003
        %v1007 = vadd.f32 %v919, %v1002
        %v1008 = vadd.f32 %v920, %v1004
        %s1009 = sld [smem:[#allocation3 + $0x287]]
        %v1010 = vstv %s1009
        %v1011 = vmul.f32 %v1010, %v889
        %v1012 = vmul.f32 %v1010, %v890
        %1015 = vrot.lane.b32.xlu0 %v1011, 127
        %v1016 = vpop.permute.xlu0 %1015
        %1017 = vrot.lane.b32.xlu0 %v1012, 127
        %v1018 = vpop.permute.xlu0 %1017
        %v1021 = vadd.f32 %v925, %v1016
        %v1022 = vadd.f32 %v926, %v1018
        %s1023 = sld [smem:[#allocation3 + $0x307]]
        %v1024 = vstv %s1023
        %v1025 = vmul.f32 %v1024, %v889
        %v1026 = vmul.f32 %v1024, %v890
        %1029 = vrot.lane.b32.xlu0 %v1025, 127
        %v1030 = vpop.permute.xlu0 %1029
        %1031 = vrot.lane.b32.xlu0 %v1026, 127
        %v1032 = vpop.permute.xlu0 %1031
        %v1035 = vadd.f32 %v931, %v1030
        %v1036 = vadd.f32 %v932, %v1032
        %s1037 = sld [smem:[#allocation3 + $0x387]]
        %v1038 = vstv %s1037
        %v1039 = vmul.f32 %v1038, %v889
        %v1040 = vmul.f32 %v1038, %v890
        %1043 = vrot.lane.b32.xlu0 %v1039, 127
        %v1044 = vpop.permute.xlu0 %1043
        %1045 = vrot.lane.b32.xlu0 %v1040, 127
        %v1046 = vpop.permute.xlu0 %1045
        %v1049 = vadd.f32 %v937, %v1044
        %v1050 = vadd.f32 %v938, %v1046
        %s1051 = sld [smem:[#allocation3 + $0x8]]
        %v1052 = vstv %s1051
        %v1053 = vmul.f32 %v1052, %v889
        %v1054 = vmul.f32 %v1052, %v890
        %1057 = vrot.lane.b32.xlu0 %v1053, 126
        %v1058 = vpop.permute.xlu0 %1057
        %1059 = vrot.lane.b32.xlu0 %v1054, 126
        %v1060 = vpop.permute.xlu0 %1059
        %v1063 = vadd.f32 %v951, %v1058
        %v1064 = vadd.f32 %v952, %v1060
        %s1065 = sld [smem:[#allocation3 + $0x88]]
        %v1066 = vstv %s1065
        %v1067 = vmul.f32 %v1066, %v889
        %v1068 = vmul.f32 %v1066, %v890
        %1071 = vrot.lane.b32.xlu0 %v1067, 126
        %v1072 = vpop.permute.xlu0 %1071
        %1073 = vrot.lane.b32.xlu0 %v1068, 126
        %v1074 = vpop.permute.xlu0 %1073
        %v1077 = vadd.f32 %v965, %v1072
        %v1078 = vadd.f32 %v966, %v1074
        %s1079 = sld [smem:[#allocation3 + $0x108]]
        %v1080 = vstv %s1079
        %v1081 = vmul.f32 %v1080, %v889
        %v1082 = vmul.f32 %v1080, %v890
        %1085 = vrot.lane.b32.xlu0 %v1081, 126
        %v1086 = vpop.permute.xlu0 %1085
        %1087 = vrot.lane.b32.xlu0 %v1082, 126
        %v1088 = vpop.permute.xlu0 %1087
        %v1091 = vadd.f32 %v979, %v1086
        %v1092 = vadd.f32 %v980, %v1088
        %s1093 = sld [smem:[#allocation3 + $0x188]]
        %v1094 = vstv %s1093
        %v1095 = vmul.f32 %v1094, %v889
        %v1096 = vmul.f32 %v1094, %v890
        %1099 = vrot.lane.b32.xlu0 %v1095, 126
        %v1100 = vpop.permute.xlu0 %1099
        %1101 = vrot.lane.b32.xlu0 %v1096, 126
        %v1102 = vpop.permute.xlu0 %1101
        %v1105 = vadd.f32 %v993, %v1100
        %v1106 = vadd.f32 %v994, %v1102
        %s1107 = sld [smem:[#allocation3 + $0x208]]
        %v1108 = vstv %s1107
        %v1109 = vmul.f32 %v1108, %v889
        %v1110 = vmul.f32 %v1108, %v890
        %1113 = vrot.lane.b32.xlu0 %v1109, 126
        %v1114 = vpop.permute.xlu0 %1113
        %1115 = vrot.lane.b32.xlu0 %v1110, 126
        %v1116 = vpop.permute.xlu0 %1115
        %v1119 = vadd.f32 %v1007, %v1114
        %v1120 = vadd.f32 %v1008, %v1116
        %s1121 = sld [smem:[#allocation3 + $0x288]]
        %v1122 = vstv %s1121
        %v1123 = vmul.f32 %v1122, %v889
        %v1124 = vmul.f32 %v1122, %v890
        %1127 = vrot.lane.b32.xlu0 %v1123, 126
        %v1128 = vpop.permute.xlu0 %1127
        %1129 = vrot.lane.b32.xlu0 %v1124, 126
        %v1130 = vpop.permute.xlu0 %1129
        %v1133 = vadd.f32 %v1021, %v1128
        %v1134 = vadd.f32 %v1022, %v1130
        %s1135 = sld [smem:[#allocation3 + $0x308]]
        %v1136 = vstv %s1135
        %v1137 = vmul.f32 %v1136, %v889
        %v1138 = vmul.f32 %v1136, %v890
        %1141 = vrot.lane.b32.xlu0 %v1137, 126
        %v1142 = vpop.permute.xlu0 %1141
        %1143 = vrot.lane.b32.xlu0 %v1138, 126
        %v1144 = vpop.permute.xlu0 %1143
        %v1147 = vadd.f32 %v1035, %v1142
        %v1148 = vadd.f32 %v1036, %v1144
        %s1149 = sld [smem:[#allocation3 + $0x388]]
        %v1150 = vstv %s1149
        %v1151 = vmul.f32 %v1150, %v889
        %v1152 = vmul.f32 %v1150, %v890
        %1155 = vrot.lane.b32.xlu0 %v1151, 126
        %v1156 = vpop.permute.xlu0 %1155
        %1157 = vrot.lane.b32.xlu0 %v1152, 126
        %v1158 = vpop.permute.xlu0 %1157
        %v1161 = vadd.f32 %v1049, %v1156
        %v1162 = vadd.f32 %v1050, %v1158
        %v1163 = vld [vmem:[%s252] sm:$0xff]
        %v1164 = vld [vmem:[%s252 + $0x8] sm:$0xff]
        %s1165 = sld [smem:[#allocation3 + $0x9]]
        %v1166 = vstv %s1165
        %v1167 = vmul.f32 %v1166, %v1163
        %v1168 = vmul.f32 %v1166, %v1164
        %v1169 = vadd.f32 %v1063, %v1167
        %v1170 = vadd.f32 %v1064, %v1168
        %s1171 = sld [smem:[#allocation3 + $0x89]]
        %v1172 = vstv %s1171
        %v1173 = vmul.f32 %v1172, %v1163
        %v1174 = vmul.f32 %v1172, %v1164
        %v1175 = vadd.f32 %v1077, %v1173
        %v1176 = vadd.f32 %v1078, %v1174
        %s1177 = sld [smem:[#allocation3 + $0x109]]
        %v1178 = vstv %s1177
        %v1179 = vmul.f32 %v1178, %v1163
        %v1180 = vmul.f32 %v1178, %v1164
        %v1181 = vadd.f32 %v1091, %v1179
        %v1182 = vadd.f32 %v1092, %v1180
        %s1183 = sld [smem:[#allocation3 + $0x189]]
        %v1184 = vstv %s1183
        %v1185 = vmul.f32 %v1184, %v1163
        %v1186 = vmul.f32 %v1184, %v1164
        %v1187 = vadd.f32 %v1105, %v1185
        %v1188 = vadd.f32 %v1106, %v1186
        %s1189 = sld [smem:[#allocation3 + $0x209]]
        %v1190 = vstv %s1189
        %v1191 = vmul.f32 %v1190, %v1163
        %v1192 = vmul.f32 %v1190, %v1164
        %v1193 = vadd.f32 %v1119, %v1191
        %v1194 = vadd.f32 %v1120, %v1192
        %s1195 = sld [smem:[#allocation3 + $0x289]]
        %v1196 = vstv %s1195
        %v1197 = vmul.f32 %v1196, %v1163
        %v1198 = vmul.f32 %v1196, %v1164
        %v1199 = vadd.f32 %v1133, %v1197
        %v1200 = vadd.f32 %v1134, %v1198
        %s1201 = sld [smem:[#allocation3 + $0x309]]
        %v1202 = vstv %s1201
        %v1203 = vmul.f32 %v1202, %v1163
        %v1204 = vmul.f32 %v1202, %v1164
        %v1205 = vadd.f32 %v1147, %v1203
        %v1206 = vadd.f32 %v1148, %v1204
        %s1207 = sld [smem:[#allocation3 + $0x389]]
        %v1208 = vstv %s1207
        %v1209 = vmul.f32 %v1208, %v1163
        %v1210 = vmul.f32 %v1208, %v1164
        %v1211 = vadd.f32 %v1161, %v1209
        %v1212 = vadd.f32 %v1162, %v1210
        %s1213 = sld [smem:[#allocation3 + $0xa]]
        %v1214 = vstv %s1213
        %v1215 = vmul.f32 %v1214, %v1163
        %v1216 = vmul.f32 %v1214, %v1164
        %1219 = vrot.lane.b32.xlu0 %v1215, 127
        %v1220 = vpop.permute.xlu0 %1219
        %1221 = vrot.lane.b32.xlu0 %v1216, 127
        %v1222 = vpop.permute.xlu0 %1221
        %v1225 = vadd.f32 %v1169, %v1220
        %v1226 = vadd.f32 %v1170, %v1222
        %s1227 = sld [smem:[#allocation3 + $0x8a]]
        %v1228 = vstv %s1227
        %v1229 = vmul.f32 %v1228, %v1163
        %v1230 = vmul.f32 %v1228, %v1164
        %1233 = vrot.lane.b32.xlu0 %v1229, 127
        %v1234 = vpop.permute.xlu0 %1233
        %1235 = vrot.lane.b32.xlu0 %v1230, 127
        %v1236 = vpop.permute.xlu0 %1235
        %v1239 = vadd.f32 %v1175, %v1234
        %v1240 = vadd.f32 %v1176, %v1236
        %s1241 = sld [smem:[#allocation3 + $0x10a]]
        %v1242 = vstv %s1241
        %v1243 = vmul.f32 %v1242, %v1163
        %v1244 = vmul.f32 %v1242, %v1164
        %1247 = vrot.lane.b32.xlu0 %v1243, 127
        %v1248 = vpop.permute.xlu0 %1247
        %1249 = vrot.lane.b32.xlu0 %v1244, 127
        %v1250 = vpop.permute.xlu0 %1249
        %v1253 = vadd.f32 %v1181, %v1248
        %v1254 = vadd.f32 %v1182, %v1250
        %s1255 = sld [smem:[#allocation3 + $0x18a]]
        %v1256 = vstv %s1255
        %v1257 = vmul.f32 %v1256, %v1163
        %v1258 = vmul.f32 %v1256, %v1164
        %1261 = vrot.lane.b32.xlu0 %v1257, 127
        %v1262 = vpop.permute.xlu0 %1261
        %1263 = vrot.lane.b32.xlu0 %v1258, 127
        %v1264 = vpop.permute.xlu0 %1263
        %v1267 = vadd.f32 %v1187, %v1262
        %v1268 = vadd.f32 %v1188, %v1264
        %s1269 = sld [smem:[#allocation3 + $0x20a]]
        %v1270 = vstv %s1269
        %v1271 = vmul.f32 %v1270, %v1163
        %v1272 = vmul.f32 %v1270, %v1164
        %1275 = vrot.lane.b32.xlu0 %v1271, 127
        %v1276 = vpop.permute.xlu0 %1275
        %1277 = vrot.lane.b32.xlu0 %v1272, 127
        %v1278 = vpop.permute.xlu0 %1277
        %v1281 = vadd.f32 %v1193, %v1276
        %v1282 = vadd.f32 %v1194, %v1278
        %s1283 = sld [smem:[#allocation3 + $0x28a]]
        %v1284 = vstv %s1283
        %v1285 = vmul.f32 %v1284, %v1163
        %v1286 = vmul.f32 %v1284, %v1164
        %1289 = vrot.lane.b32.xlu0 %v1285, 127
        %v1290 = vpop.permute.xlu0 %1289
        %1291 = vrot.lane.b32.xlu0 %v1286, 127
        %v1292 = vpop.permute.xlu0 %1291
        %v1295 = vadd.f32 %v1199, %v1290
        %v1296 = vadd.f32 %v1200, %v1292
        %s1297 = sld [smem:[#allocation3 + $0x30a]]
        %v1298 = vstv %s1297
        %v1299 = vmul.f32 %v1298, %v1163
        %v1300 = vmul.f32 %v1298, %v1164
        %1303 = vrot.lane.b32.xlu0 %v1299, 127
        %v1304 = vpop.permute.xlu0 %1303
        %1305 = vrot.lane.b32.xlu0 %v1300, 127
        %v1306 = vpop.permute.xlu0 %1305
        %v1309 = vadd.f32 %v1205, %v1304
        %v1310 = vadd.f32 %v1206, %v1306
        %s1311 = sld [smem:[#allocation3 + $0x38a]]
        %v1312 = vstv %s1311
        %v1313 = vmul.f32 %v1312, %v1163
        %v1314 = vmul.f32 %v1312, %v1164
        %1317 = vrot.lane.b32.xlu0 %v1313, 127
        %v1318 = vpop.permute.xlu0 %1317
        %1319 = vrot.lane.b32.xlu0 %v1314, 127
        %v1320 = vpop.permute.xlu0 %1319
        %v1323 = vadd.f32 %v1211, %v1318
        %v1324 = vadd.f32 %v1212, %v1320
        %s1325 = sld [smem:[#allocation3 + $0xb]]
        %v1326 = vstv %s1325
        %v1327 = vmul.f32 %v1326, %v1163
        %v1328 = vmul.f32 %v1326, %v1164
        %1331 = vrot.lane.b32.xlu0 %v1327, 126
        %v1332 = vpop.permute.xlu0 %1331
        %1333 = vrot.lane.b32.xlu0 %v1328, 126
        %v1334 = vpop.permute.xlu0 %1333
        %v1337 = vadd.f32 %v1225, %v1332
        %v1338 = vadd.f32 %v1226, %v1334
        %s1339 = sld [smem:[#allocation3 + $0x8b]]
        %v1340 = vstv %s1339
        %v1341 = vmul.f32 %v1340, %v1163
        %v1342 = vmul.f32 %v1340, %v1164
        %1345 = vrot.lane.b32.xlu0 %v1341, 126
        %v1346 = vpop.permute.xlu0 %1345
        %1347 = vrot.lane.b32.xlu0 %v1342, 126
        %v1348 = vpop.permute.xlu0 %1347
        %v1351 = vadd.f32 %v1239, %v1346
        %v1352 = vadd.f32 %v1240, %v1348
        %s1353 = sld [smem:[#allocation3 + $0x10b]]
        %v1354 = vstv %s1353
        %v1355 = vmul.f32 %v1354, %v1163
        %v1356 = vmul.f32 %v1354, %v1164
        %1359 = vrot.lane.b32.xlu0 %v1355, 126
        %v1360 = vpop.permute.xlu0 %1359
        %1361 = vrot.lane.b32.xlu0 %v1356, 126
        %v1362 = vpop.permute.xlu0 %1361
        %v1365 = vadd.f32 %v1253, %v1360
        %v1366 = vadd.f32 %v1254, %v1362
        %s1367 = sld [smem:[#allocation3 + $0x18b]]
        %v1368 = vstv %s1367
        %v1369 = vmul.f32 %v1368, %v1163
        %v1370 = vmul.f32 %v1368, %v1164
        %1373 = vrot.lane.b32.xlu0 %v1369, 126
        %v1374 = vpop.permute.xlu0 %1373
        %1375 = vrot.lane.b32.xlu0 %v1370, 126
        %v1376 = vpop.permute.xlu0 %1375
        %v1379 = vadd.f32 %v1267, %v1374
        %v1380 = vadd.f32 %v1268, %v1376
        %s1381 = sld [smem:[#allocation3 + $0x20b]]
        %v1382 = vstv %s1381
        %v1383 = vmul.f32 %v1382, %v1163
        %v1384 = vmul.f32 %v1382, %v1164
        %1387 = vrot.lane.b32.xlu0 %v1383, 126
        %v1388 = vpop.permute.xlu0 %1387
        %1389 = vrot.lane.b32.xlu0 %v1384, 126
        %v1390 = vpop.permute.xlu0 %1389
        %v1393 = vadd.f32 %v1281, %v1388
        %v1394 = vadd.f32 %v1282, %v1390
        %s1395 = sld [smem:[#allocation3 + $0x28b]]
        %v1396 = vstv %s1395
        %v1397 = vmul.f32 %v1396, %v1163
        %v1398 = vmul.f32 %v1396, %v1164
        %1401 = vrot.lane.b32.xlu0 %v1397, 126
        %v1402 = vpop.permute.xlu0 %1401
        %1403 = vrot.lane.b32.xlu0 %v1398, 126
        %v1404 = vpop.permute.xlu0 %1403
        %v1407 = vadd.f32 %v1295, %v1402
        %v1408 = vadd.f32 %v1296, %v1404
        %s1409 = sld [smem:[#allocation3 + $0x30b]]
        %v1410 = vstv %s1409
        %v1411 = vmul.f32 %v1410, %v1163
        %v1412 = vmul.f32 %v1410, %v1164
        %1415 = vrot.lane.b32.xlu0 %v1411, 126
        %v1416 = vpop.permute.xlu0 %1415
        %1417 = vrot.lane.b32.xlu0 %v1412, 126
        %v1418 = vpop.permute.xlu0 %1417
        %v1421 = vadd.f32 %v1309, %v1416
        %v1422 = vadd.f32 %v1310, %v1418
        %s1423 = sld [smem:[#allocation3 + $0x38b]]
        %v1424 = vstv %s1423
        %v1425 = vmul.f32 %v1424, %v1163
        %v1426 = vmul.f32 %v1424, %v1164
        %1429 = vrot.lane.b32.xlu0 %v1425, 126
        %v1430 = vpop.permute.xlu0 %1429
        %1431 = vrot.lane.b32.xlu0 %v1426, 126
        %v1432 = vpop.permute.xlu0 %1431
        %v1435 = vadd.f32 %v1323, %v1430
        %v1436 = vadd.f32 %v1324, %v1432
        %v1437 = vld [vmem:[%s252 + $0x1] sm:$0xff]
        %v1438 = vld [vmem:[%s252 + $0x9] sm:$0xff]
        %s1439 = sld [smem:[#allocation3 + $0xc]]
        %v1440 = vstv %s1439
        %v1441 = vmul.f32 %v1440, %v1437
        %v1442 = vmul.f32 %v1440, %v1438
        %v1443 = vadd.f32 %v1337, %v1441
        %v1444 = vadd.f32 %v1338, %v1442
        %s1445 = sld [smem:[#allocation3 + $0x8c]]
        %v1446 = vstv %s1445
        %v1447 = vmul.f32 %v1446, %v1437
        %v1448 = vmul.f32 %v1446, %v1438
        %v1449 = vadd.f32 %v1351, %v1447
        %v1450 = vadd.f32 %v1352, %v1448
        %s1451 = sld [smem:[#allocation3 + $0x10c]]
        %v1452 = vstv %s1451
        %v1453 = vmul.f32 %v1452, %v1437
        %v1454 = vmul.f32 %v1452, %v1438
        %v1455 = vadd.f32 %v1365, %v1453
        %v1456 = vadd.f32 %v1366, %v1454
        %s1457 = sld [smem:[#allocation3 + $0x18c]]
        %v1458 = vstv %s1457
        %v1459 = vmul.f32 %v1458, %v1437
        %v1460 = vmul.f32 %v1458, %v1438
        %v1461 = vadd.f32 %v1379, %v1459
        %v1462 = vadd.f32 %v1380, %v1460
        %s1463 = sld [smem:[#allocation3 + $0x20c]]
        %v1464 = vstv %s1463
        %v1465 = vmul.f32 %v1464, %v1437
        %v1466 = vmul.f32 %v1464, %v1438
        %v1467 = vadd.f32 %v1393, %v1465
        %v1468 = vadd.f32 %v1394, %v1466
        %s1469 = sld [smem:[#allocation3 + $0x28c]]
        %v1470 = vstv %s1469
        %v1471 = vmul.f32 %v1470, %v1437
        %v1472 = vmul.f32 %v1470, %v1438
        %v1473 = vadd.f32 %v1407, %v1471
        %v1474 = vadd.f32 %v1408, %v1472
        %s1475 = sld [smem:[#allocation3 + $0x30c]]
        %v1476 = vstv %s1475
        %v1477 = vmul.f32 %v1476, %v1437
        %v1478 = vmul.f32 %v1476, %v1438
        %v1479 = vadd.f32 %v1421, %v1477
        %v1480 = vadd.f32 %v1422, %v1478
        %s1481 = sld [smem:[#allocation3 + $0x38c]]
        %v1482 = vstv %s1481
        %v1483 = vmul.f32 %v1482, %v1437
        %v1484 = vmul.f32 %v1482, %v1438
        %v1485 = vadd.f32 %v1435, %v1483
        %v1486 = vadd.f32 %v1436, %v1484
        %s1487 = sld [smem:[#allocation3 + $0xd]]
        %v1488 = vstv %s1487
        %v1489 = vmul.f32 %v1488, %v1437
        %v1490 = vmul.f32 %v1488, %v1438
        %1493 = vrot.lane.b32.xlu0 %v1489, 127
        %v1494 = vpop.permute.xlu0 %1493
        %1495 = vrot.lane.b32.xlu0 %v1490, 127
        %v1496 = vpop.permute.xlu0 %1495
        %v1499 = vadd.f32 %v1443, %v1494
        %v1500 = vadd.f32 %v1444, %v1496
        %s1501 = sld [smem:[#allocation3 + $0x8d]]
        %v1502 = vstv %s1501
        %v1503 = vmul.f32 %v1502, %v1437
        %v1504 = vmul.f32 %v1502, %v1438
        %1507 = vrot.lane.b32.xlu0 %v1503, 127
        %v1508 = vpop.permute.xlu0 %1507
        %1509 = vrot.lane.b32.xlu0 %v1504, 127
        %v1510 = vpop.permute.xlu0 %1509
        %v1513 = vadd.f32 %v1449, %v1508
        %v1514 = vadd.f32 %v1450, %v1510
        %s1515 = sld [smem:[#allocation3 + $0x10d]]
        %v1516 = vstv %s1515
        %v1517 = vmul.f32 %v1516, %v1437
        %v1518 = vmul.f32 %v1516, %v1438
        %1521 = vrot.lane.b32.xlu0 %v1517, 127
        %v1522 = vpop.permute.xlu0 %1521
        %1523 = vrot.lane.b32.xlu0 %v1518, 127
        %v1524 = vpop.permute.xlu0 %1523
        %v1527 = vadd.f32 %v1455, %v1522
        %v1528 = vadd.f32 %v1456, %v1524
        %s1529 = sld [smem:[#allocation3 + $0x18d]]
        %v1530 = vstv %s1529
        %v1531 = vmul.f32 %v1530, %v1437
        %v1532 = vmul.f32 %v1530, %v1438
        %1535 = vrot.lane.b32.xlu0 %v1531, 127
        %v1536 = vpop.permute.xlu0 %1535
        %1537 = vrot.lane.b32.xlu0 %v1532, 127
        %v1538 = vpop.permute.xlu0 %1537
        %v1541 = vadd.f32 %v1461, %v1536
        %v1542 = vadd.f32 %v1462, %v1538
        %s1543 = sld [smem:[#allocation3 + $0x20d]]
        %v1544 = vstv %s1543
        %v1545 = vmul.f32 %v1544, %v1437
        %v1546 = vmul.f32 %v1544, %v1438
        %1549 = vrot.lane.b32.xlu0 %v1545, 127
        %v1550 = vpop.permute.xlu0 %1549
        %1551 = vrot.lane.b32.xlu0 %v1546, 127
        %v1552 = vpop.permute.xlu0 %1551
        %v1555 = vadd.f32 %v1467, %v1550
        %v1556 = vadd.f32 %v1468, %v1552
        %s1557 = sld [smem:[#allocation3 + $0x28d]]
        %v1558 = vstv %s1557
        %v1559 = vmul.f32 %v1558, %v1437
        %v1560 = vmul.f32 %v1558, %v1438
        %1563 = vrot.lane.b32.xlu0 %v1559, 127
        %v1564 = vpop.permute.xlu0 %1563
        %1565 = vrot.lane.b32.xlu0 %v1560, 127
        %v1566 = vpop.permute.xlu0 %1565
        %v1569 = vadd.f32 %v1473, %v1564
        %v1570 = vadd.f32 %v1474, %v1566
        %s1571 = sld [smem:[#allocation3 + $0x30d]]
        %v1572 = vstv %s1571
        %v1573 = vmul.f32 %v1572, %v1437
        %v1574 = vmul.f32 %v1572, %v1438
        %1577 = vrot.lane.b32.xlu0 %v1573, 127
        %v1578 = vpop.permute.xlu0 %1577
        %1579 = vrot.lane.b32.xlu0 %v1574, 127
        %v1580 = vpop.permute.xlu0 %1579
        %v1583 = vadd.f32 %v1479, %v1578
        %v1584 = vadd.f32 %v1480, %v1580
        %s1585 = sld [smem:[#allocation3 + $0x38d]]
        %v1586 = vstv %s1585
        %v1587 = vmul.f32 %v1586, %v1437
        %v1588 = vmul.f32 %v1586, %v1438
        %1591 = vrot.lane.b32.xlu0 %v1587, 127
        %v1592 = vpop.permute.xlu0 %1591
        %1593 = vrot.lane.b32.xlu0 %v1588, 127
        %v1594 = vpop.permute.xlu0 %1593
        %v1597 = vadd.f32 %v1485, %v1592
        %v1598 = vadd.f32 %v1486, %v1594
        %s1599 = sld [smem:[#allocation3 + $0xe]]
        %v1600 = vstv %s1599
        %v1601 = vmul.f32 %v1600, %v1437
        %v1602 = vmul.f32 %v1600, %v1438
        %1605 = vrot.lane.b32.xlu0 %v1601, 126
        %v1606 = vpop.permute.xlu0 %1605
        %1607 = vrot.lane.b32.xlu0 %v1602, 126
        %v1608 = vpop.permute.xlu0 %1607
        %v1611 = vadd.f32 %v1499, %v1606
        %v1612 = vadd.f32 %v1500, %v1608
        %s1613 = sld [smem:[#allocation3 + $0x8e]]
        %v1614 = vstv %s1613
        %v1615 = vmul.f32 %v1614, %v1437
        %v1616 = vmul.f32 %v1614, %v1438
        %1619 = vrot.lane.b32.xlu0 %v1615, 126
        %v1620 = vpop.permute.xlu0 %1619
        %1621 = vrot.lane.b32.xlu0 %v1616, 126
        %v1622 = vpop.permute.xlu0 %1621
        %v1625 = vadd.f32 %v1513, %v1620
        %v1626 = vadd.f32 %v1514, %v1622
        %s1627 = sld [smem:[#allocation3 + $0x10e]]
        %v1628 = vstv %s1627
        %v1629 = vmul.f32 %v1628, %v1437
        %v1630 = vmul.f32 %v1628, %v1438
        %1633 = vrot.lane.b32.xlu0 %v1629, 126
        %v1634 = vpop.permute.xlu0 %1633
        %1635 = vrot.lane.b32.xlu0 %v1630, 126
        %v1636 = vpop.permute.xlu0 %1635
        %v1639 = vadd.f32 %v1527, %v1634
        %v1640 = vadd.f32 %v1528, %v1636
        %s1641 = sld [smem:[#allocation3 + $0x18e]]
        %v1642 = vstv %s1641
        %v1643 = vmul.f32 %v1642, %v1437
        %v1644 = vmul.f32 %v1642, %v1438
        %1647 = vrot.lane.b32.xlu0 %v1643, 126
        %v1648 = vpop.permute.xlu0 %1647
        %1649 = vrot.lane.b32.xlu0 %v1644, 126
        %v1650 = vpop.permute.xlu0 %1649
        %v1653 = vadd.f32 %v1541, %v1648
        %v1654 = vadd.f32 %v1542, %v1650
        %s1655 = sld [smem:[#allocation3 + $0x20e]]
        %v1656 = vstv %s1655
        %v1657 = vmul.f32 %v1656, %v1437
        %v1658 = vmul.f32 %v1656, %v1438
        %1661 = vrot.lane.b32.xlu0 %v1657, 126
        %v1662 = vpop.permute.xlu0 %1661
        %1663 = vrot.lane.b32.xlu0 %v1658, 126
        %v1664 = vpop.permute.xlu0 %1663
        %v1667 = vadd.f32 %v1555, %v1662
        %v1668 = vadd.f32 %v1556, %v1664
        %s1669 = sld [smem:[#allocation3 + $0x28e]]
        %v1670 = vstv %s1669
        %v1671 = vmul.f32 %v1670, %v1437
        %v1672 = vmul.f32 %v1670, %v1438
        %1675 = vrot.lane.b32.xlu0 %v1671, 126
        %v1676 = vpop.permute.xlu0 %1675
        %1677 = vrot.lane.b32.xlu0 %v1672, 126
        %v1678 = vpop.permute.xlu0 %1677
        %v1681 = vadd.f32 %v1569, %v1676
        %v1682 = vadd.f32 %v1570, %v1678
        %s1683 = sld [smem:[#allocation3 + $0x30e]]
        %v1684 = vstv %s1683
        %v1685 = vmul.f32 %v1684, %v1437
        %v1686 = vmul.f32 %v1684, %v1438
        %1689 = vrot.lane.b32.xlu0 %v1685, 126
        %v1690 = vpop.permute.xlu0 %1689
        %1691 = vrot.lane.b32.xlu0 %v1686, 126
        %v1692 = vpop.permute.xlu0 %1691
        %v1695 = vadd.f32 %v1583, %v1690
        %v1696 = vadd.f32 %v1584, %v1692
        %s1697 = sld [smem:[#allocation3 + $0x38e]]
        %v1698 = vstv %s1697
        %v1699 = vmul.f32 %v1698, %v1437
        %v1700 = vmul.f32 %v1698, %v1438
        %1703 = vrot.lane.b32.xlu0 %v1699, 126
        %v1704 = vpop.permute.xlu0 %1703
        %1705 = vrot.lane.b32.xlu0 %v1700, 126
        %v1706 = vpop.permute.xlu0 %1705
        %v1709 = vadd.f32 %v1597, %v1704
        %v1710 = vadd.f32 %v1598, %v1706
        %v1711 = vld [vmem:[%s252 + $0x2] sm:$0xff]
        %v1712 = vld [vmem:[%s252 + $0xa] sm:$0xff]
        %s1713 = sld [smem:[#allocation3 + $0xf]]
        %v1714 = vstv %s1713
        %v1715 = vmul.f32 %v1714, %v1711
        %v1716 = vmul.f32 %v1714, %v1712
        %v1717 = vadd.f32 %v1611, %v1715
        %v1718 = vadd.f32 %v1612, %v1716
        %s1719 = sld [smem:[#allocation3 + $0x8f]]
        %v1720 = vstv %s1719
        %v1721 = vmul.f32 %v1720, %v1711
        %v1722 = vmul.f32 %v1720, %v1712
        %v1723 = vadd.f32 %v1625, %v1721
        %v1724 = vadd.f32 %v1626, %v1722
        %s1725 = sld [smem:[#allocation3 + $0x10f]]
        %v1726 = vstv %s1725
        %v1727 = vmul.f32 %v1726, %v1711
        %v1728 = vmul.f32 %v1726, %v1712
        %v1729 = vadd.f32 %v1639, %v1727
        %v1730 = vadd.f32 %v1640, %v1728
        %s1731 = sld [smem:[#allocation3 + $0x18f]]
        %v1732 = vstv %s1731
        %v1733 = vmul.f32 %v1732, %v1711
        %v1734 = vmul.f32 %v1732, %v1712
        %v1735 = vadd.f32 %v1653, %v1733
        %v1736 = vadd.f32 %v1654, %v1734
        %s1737 = sld [smem:[#allocation3 + $0x20f]]
        %v1738 = vstv %s1737
        %v1739 = vmul.f32 %v1738, %v1711
        %v1740 = vmul.f32 %v1738, %v1712
        %v1741 = vadd.f32 %v1667, %v1739
        %v1742 = vadd.f32 %v1668, %v1740
        %s1743 = sld [smem:[#allocation3 + $0x28f]]
        %v1744 = vstv %s1743
        %v1745 = vmul.f32 %v1744, %v1711
        %v1746 = vmul.f32 %v1744, %v1712
        %v1747 = vadd.f32 %v1681, %v1745
        %v1748 = vadd.f32 %v1682, %v1746
        %s1749 = sld [smem:[#allocation3 + $0x30f]]
        %v1750 = vstv %s1749
        %v1751 = vmul.f32 %v1750, %v1711
        %v1752 = vmul.f32 %v1750, %v1712
        %v1753 = vadd.f32 %v1695, %v1751
        %v1754 = vadd.f32 %v1696, %v1752
        %s1755 = sld [smem:[#allocation3 + $0x38f]]
        %v1756 = vstv %s1755
        %v1757 = vmul.f32 %v1756, %v1711
        %v1758 = vmul.f32 %v1756, %v1712
        %v1759 = vadd.f32 %v1709, %v1757
        %v1760 = vadd.f32 %v1710, %v1758
        %s1761 = sld [smem:[#allocation3 + $0x10]]
        %v1762 = vstv %s1761
        %v1763 = vmul.f32 %v1762, %v1711
        %v1764 = vmul.f32 %v1762, %v1712
        %1767 = vrot.lane.b32.xlu0 %v1763, 127
        %v1768 = vpop.permute.xlu0 %1767
        %1769 = vrot.lane.b32.xlu0 %v1764, 127
        %v1770 = vpop.permute.xlu0 %1769
        %v1773 = vadd.f32 %v1717, %v1768
        %v1774 = vadd.f32 %v1718, %v1770
        %s1775 = sld [smem:[#allocation3 + $0x90]]
        %v1776 = vstv %s1775
        %v1777 = vmul.f32 %v1776, %v1711
        %v1778 = vmul.f32 %v1776, %v1712
        %1781 = vrot.lane.b32.xlu0 %v1777, 127
        %v1782 = vpop.permute.xlu0 %1781
        %1783 = vrot.lane.b32.xlu0 %v1778, 127
        %v1784 = vpop.permute.xlu0 %1783
        %v1787 = vadd.f32 %v1723, %v1782
        %v1788 = vadd.f32 %v1724, %v1784
        %s1789 = sld [smem:[#allocation3 + $0x110]]
        %v1790 = vstv %s1789
        %v1791 = vmul.f32 %v1790, %v1711
        %v1792 = vmul.f32 %v1790, %v1712
        %1795 = vrot.lane.b32.xlu0 %v1791, 127
        %v1796 = vpop.permute.xlu0 %1795
        %1797 = vrot.lane.b32.xlu0 %v1792, 127
        %v1798 = vpop.permute.xlu0 %1797
        %v1801 = vadd.f32 %v1729, %v1796
        %v1802 = vadd.f32 %v1730, %v1798
        %s1803 = sld [smem:[#allocation3 + $0x190]]
        %v1804 = vstv %s1803
        %v1805 = vmul.f32 %v1804, %v1711
        %v1806 = vmul.f32 %v1804, %v1712
        %1809 = vrot.lane.b32.xlu0 %v1805, 127
        %v1810 = vpop.permute.xlu0 %1809
        %1811 = vrot.lane.b32.xlu0 %v1806, 127
        %v1812 = vpop.permute.xlu0 %1811
        %v1815 = vadd.f32 %v1735, %v1810
        %v1816 = vadd.f32 %v1736, %v1812
        %s1817 = sld [smem:[#allocation3 + $0x210]]
        %v1818 = vstv %s1817
        %v1819 = vmul.f32 %v1818, %v1711
        %v1820 = vmul.f32 %v1818, %v1712
        %1823 = vrot.lane.b32.xlu0 %v1819, 127
        %v1824 = vpop.permute.xlu0 %1823
        %1825 = vrot.lane.b32.xlu0 %v1820, 127
        %v1826 = vpop.permute.xlu0 %1825
        %v1829 = vadd.f32 %v1741, %v1824
        %v1830 = vadd.f32 %v1742, %v1826
        %s1831 = sld [smem:[#allocation3 + $0x290]]
        %v1832 = vstv %s1831
        %v1833 = vmul.f32 %v1832, %v1711
        %v1834 = vmul.f32 %v1832, %v1712
        %1837 = vrot.lane.b32.xlu0 %v1833, 127
        %v1838 = vpop.permute.xlu0 %1837
        %1839 = vrot.lane.b32.xlu0 %v1834, 127
        %v1840 = vpop.permute.xlu0 %1839
        %v1843 = vadd.f32 %v1747, %v1838
        %v1844 = vadd.f32 %v1748, %v1840
        %s1845 = sld [smem:[#allocation3 + $0x310]]
        %v1846 = vstv %s1845
        %v1847 = vmul.f32 %v1846, %v1711
        %v1848 = vmul.f32 %v1846, %v1712
        %1851 = vrot.lane.b32.xlu0 %v1847, 127
        %v1852 = vpop.permute.xlu0 %1851
        %1853 = vrot.lane.b32.xlu0 %v1848, 127
        %v1854 = vpop.permute.xlu0 %1853
        %v1857 = vadd.f32 %v1753, %v1852
        %v1858 = vadd.f32 %v1754, %v1854
        %s1859 = sld [smem:[#allocation3 + $0x390]]
        %v1860 = vstv %s1859
        %v1861 = vmul.f32 %v1860, %v1711
        %v1862 = vmul.f32 %v1860, %v1712
        %1865 = vrot.lane.b32.xlu0 %v1861, 127
        %v1866 = vpop.permute.xlu0 %1865
        %1867 = vrot.lane.b32.xlu0 %v1862, 127
        %v1868 = vpop.permute.xlu0 %1867
        %v1871 = vadd.f32 %v1759, %v1866
        %v1872 = vadd.f32 %v1760, %v1868
        %s1873 = sld [smem:[#allocation3 + $0x11]]
        %v1874 = vstv %s1873
        %v1875 = vmul.f32 %v1874, %v1711
        %v1876 = vmul.f32 %v1874, %v1712
        %1879 = vrot.lane.b32.xlu0 %v1875, 126
        %v1880 = vpop.permute.xlu0 %1879
        %1881 = vrot.lane.b32.xlu0 %v1876, 126
        %v1882 = vpop.permute.xlu0 %1881
        %v1885 = vadd.f32 %v1773, %v1880
        %v1886 = vadd.f32 %v1774, %v1882
        %s1887 = sld [smem:[#allocation3 + $0x91]]
        %v1888 = vstv %s1887
        %v1889 = vmul.f32 %v1888, %v1711
        %v1890 = vmul.f32 %v1888, %v1712
        %1893 = vrot.lane.b32.xlu0 %v1889, 126
        %v1894 = vpop.permute.xlu0 %1893
        %1895 = vrot.lane.b32.xlu0 %v1890, 126
        %v1896 = vpop.permute.xlu0 %1895
        %v1899 = vadd.f32 %v1787, %v1894
        %v1900 = vadd.f32 %v1788, %v1896
        %s1901 = sld [smem:[#allocation3 + $0x111]]
        %v1902 = vstv %s1901
        %v1903 = vmul.f32 %v1902, %v1711
        %v1904 = vmul.f32 %v1902, %v1712
        %1907 = vrot.lane.b32.xlu0 %v1903, 126
        %v1908 = vpop.permute.xlu0 %1907
        %1909 = vrot.lane.b32.xlu0 %v1904, 126
        %v1910 = vpop.permute.xlu0 %1909
        %v1913 = vadd.f32 %v1801, %v1908
        %v1914 = vadd.f32 %v1802, %v1910
        %s1915 = sld [smem:[#allocation3 + $0x191]]
        %v1916 = vstv %s1915
        %v1917 = vmul.f32 %v1916, %v1711
        %v1918 = vmul.f32 %v1916, %v1712
        %1921 = vrot.lane.b32.xlu0 %v1917, 126
        %v1922 = vpop.permute.xlu0 %1921
        %1923 = vrot.lane.b32.xlu0 %v1918, 126
        %v1924 = vpop.permute.xlu0 %1923
        %v1927 = vadd.f32 %v1815, %v1922
        %v1928 = vadd.f32 %v1816, %v1924
        %s1929 = sld [smem:[#allocation3 + $0x211]]
        %v1930 = vstv %s1929
        %v1931 = vmul.f32 %v1930, %v1711
        %v1932 = vmul.f32 %v1930, %v1712
        %1935 = vrot.lane.b32.xlu0 %v1931, 126
        %v1936 = vpop.permute.xlu0 %1935
        %1937 = vrot.lane.b32.xlu0 %v1932, 126
        %v1938 = vpop.permute.xlu0 %1937
        %v1941 = vadd.f32 %v1829, %v1936
        %v1942 = vadd.f32 %v1830, %v1938
        %s1943 = sld [smem:[#allocation3 + $0x291]]
        %v1944 = vstv %s1943
        %v1945 = vmul.f32 %v1944, %v1711
        %v1946 = vmul.f32 %v1944, %v1712
        %1949 = vrot.lane.b32.xlu0 %v1945, 126
        %v1950 = vpop.permute.xlu0 %1949
        %1951 = vrot.lane.b32.xlu0 %v1946, 126
        %v1952 = vpop.permute.xlu0 %1951
        %v1955 = vadd.f32 %v1843, %v1950
        %v1956 = vadd.f32 %v1844, %v1952
        %s1957 = sld [smem:[#allocation3 + $0x311]]
        %v1958 = vstv %s1957
        %v1959 = vmul.f32 %v1958, %v1711
        %v1960 = vmul.f32 %v1958, %v1712
        %1963 = vrot.lane.b32.xlu0 %v1959, 126
        %v1964 = vpop.permute.xlu0 %1963
        %1965 = vrot.lane.b32.xlu0 %v1960, 126
        %v1966 = vpop.permute.xlu0 %1965
        %v1969 = vadd.f32 %v1857, %v1964
        %v1970 = vadd.f32 %v1858, %v1966
        %s1971 = sld [smem:[#allocation3 + $0x391]]
        %v1972 = vstv %s1971
        %v1973 = vmul.f32 %v1972, %v1711
        %v1974 = vmul.f32 %v1972, %v1712
        %1977 = vrot.lane.b32.xlu0 %v1973, 126
        %v1978 = vpop.permute.xlu0 %1977
        %1979 = vrot.lane.b32.xlu0 %v1974, 126
        %v1980 = vpop.permute.xlu0 %1979
        %v1983 = vadd.f32 %v1871, %v1978
        %v1984 = vadd.f32 %v1872, %v1980
        %v1985 = vld [vmem:[%s267] sm:$0xff]
        %v1986 = vld [vmem:[%s267 + $0x8] sm:$0xff]
        %s1987 = sld [smem:[#allocation3 + $0x12]]
        %v1988 = vstv %s1987
        %v1989 = vmul.f32 %v1988, %v1985
        %v1990 = vmul.f32 %v1988, %v1986
        %v1991 = vadd.f32 %v1885, %v1989
        %v1992 = vadd.f32 %v1886, %v1990
        %s1993 = sld [smem:[#allocation3 + $0x92]]
        %v1994 = vstv %s1993
        %v1995 = vmul.f32 %v1994, %v1985
        %v1996 = vmul.f32 %v1994, %v1986
        %v1997 = vadd.f32 %v1899, %v1995
        %v1998 = vadd.f32 %v1900, %v1996
        %s1999 = sld [smem:[#allocation3 + $0x112]]
        %v2000 = vstv %s1999
        %v2001 = vmul.f32 %v2000, %v1985
        %v2002 = vmul.f32 %v2000, %v1986
        %v2003 = vadd.f32 %v1913, %v2001
        %v2004 = vadd.f32 %v1914, %v2002
        %s2005 = sld [smem:[#allocation3 + $0x192]]
        %v2006 = vstv %s2005
        %v2007 = vmul.f32 %v2006, %v1985
        %v2008 = vmul.f32 %v2006, %v1986
        %v2009 = vadd.f32 %v1927, %v2007
        %v2010 = vadd.f32 %v1928, %v2008
        %s2011 = sld [smem:[#allocation3 + $0x212]]
        %v2012 = vstv %s2011
        %v2013 = vmul.f32 %v2012, %v1985
        %v2014 = vmul.f32 %v2012, %v1986
        %v2015 = vadd.f32 %v1941, %v2013
        %v2016 = vadd.f32 %v1942, %v2014
        %s2017 = sld [smem:[#allocation3 + $0x292]]
        %v2018 = vstv %s2017
        %v2019 = vmul.f32 %v2018, %v1985
        %v2020 = vmul.f32 %v2018, %v1986
        %v2021 = vadd.f32 %v1955, %v2019
        %v2022 = vadd.f32 %v1956, %v2020
        %s2023 = sld [smem:[#allocation3 + $0x312]]
        %v2024 = vstv %s2023
        %v2025 = vmul.f32 %v2024, %v1985
        %v2026 = vmul.f32 %v2024, %v1986
        %v2027 = vadd.f32 %v1969, %v2025
        %v2028 = vadd.f32 %v1970, %v2026
        %s2029 = sld [smem:[#allocation3 + $0x392]]
        %v2030 = vstv %s2029
        %v2031 = vmul.f32 %v2030, %v1985
        %v2032 = vmul.f32 %v2030, %v1986
        %v2033 = vadd.f32 %v1983, %v2031
        %v2034 = vadd.f32 %v1984, %v2032
        %s2035 = sld [smem:[#allocation3 + $0x13]]
        %v2036 = vstv %s2035
        %v2037 = vmul.f32 %v2036, %v1985
        %v2038 = vmul.f32 %v2036, %v1986
        %2041 = vrot.lane.b32.xlu0 %v2037, 127
        %v2042 = vpop.permute.xlu0 %2041
        %2043 = vrot.lane.b32.xlu0 %v2038, 127
        %v2044 = vpop.permute.xlu0 %2043
        %v2047 = vadd.f32 %v1991, %v2042
        %v2048 = vadd.f32 %v1992, %v2044
        %s2049 = sld [smem:[#allocation3 + $0x93]]
        %v2050 = vstv %s2049
        %v2051 = vmul.f32 %v2050, %v1985
        %v2052 = vmul.f32 %v2050, %v1986
        %2055 = vrot.lane.b32.xlu0 %v2051, 127
        %v2056 = vpop.permute.xlu0 %2055
        %2057 = vrot.lane.b32.xlu0 %v2052, 127
        %v2058 = vpop.permute.xlu0 %2057
        %v2061 = vadd.f32 %v1997, %v2056
        %v2062 = vadd.f32 %v1998, %v2058
        %s2063 = sld [smem:[#allocation3 + $0x113]]
        %v2064 = vstv %s2063
        %v2065 = vmul.f32 %v2064, %v1985
        %v2066 = vmul.f32 %v2064, %v1986
        %2069 = vrot.lane.b32.xlu0 %v2065, 127
        %v2070 = vpop.permute.xlu0 %2069
        %2071 = vrot.lane.b32.xlu0 %v2066, 127
        %v2072 = vpop.permute.xlu0 %2071
        %v2075 = vadd.f32 %v2003, %v2070
        %v2076 = vadd.f32 %v2004, %v2072
        %s2077 = sld [smem:[#allocation3 + $0x193]]
        %v2078 = vstv %s2077
        %v2079 = vmul.f32 %v2078, %v1985
        %v2080 = vmul.f32 %v2078, %v1986
        %2083 = vrot.lane.b32.xlu0 %v2079, 127
        %v2084 = vpop.permute.xlu0 %2083
        %2085 = vrot.lane.b32.xlu0 %v2080, 127
        %v2086 = vpop.permute.xlu0 %2085
        %v2089 = vadd.f32 %v2009, %v2084
        %v2090 = vadd.f32 %v2010, %v2086
        %s2091 = sld [smem:[#allocation3 + $0x213]]
        %v2092 = vstv %s2091
        %v2093 = vmul.f32 %v2092, %v1985
        %v2094 = vmul.f32 %v2092, %v1986
        %2097 = vrot.lane.b32.xlu0 %v2093, 127
        %v2098 = vpop.permute.xlu0 %2097
        %2099 = vrot.lane.b32.xlu0 %v2094, 127
        %v2100 = vpop.permute.xlu0 %2099
        %v2103 = vadd.f32 %v2015, %v2098
        %v2104 = vadd.f32 %v2016, %v2100
        %s2105 = sld [smem:[#allocation3 + $0x293]]
        %v2106 = vstv %s2105
        %v2107 = vmul.f32 %v2106, %v1985
        %v2108 = vmul.f32 %v2106, %v1986
        %2111 = vrot.lane.b32.xlu0 %v2107, 127
        %v2112 = vpop.permute.xlu0 %2111
        %2113 = vrot.lane.b32.xlu0 %v2108, 127
        %v2114 = vpop.permute.xlu0 %2113
        %v2117 = vadd.f32 %v2021, %v2112
        %v2118 = vadd.f32 %v2022, %v2114
        %s2119 = sld [smem:[#allocation3 + $0x313]]
        %v2120 = vstv %s2119
        %v2121 = vmul.f32 %v2120, %v1985
        %v2122 = vmul.f32 %v2120, %v1986
        %2125 = vrot.lane.b32.xlu0 %v2121, 127
        %v2126 = vpop.permute.xlu0 %2125
        %2127 = vrot.lane.b32.xlu0 %v2122, 127
        %v2128 = vpop.permute.xlu0 %2127
        %v2131 = vadd.f32 %v2027, %v2126
        %v2132 = vadd.f32 %v2028, %v2128
        %s2133 = sld [smem:[#allocation3 + $0x393]]
        %v2134 = vstv %s2133
        %v2135 = vmul.f32 %v2134, %v1985
        %v2136 = vmul.f32 %v2134, %v1986
        %2139 = vrot.lane.b32.xlu0 %v2135, 127
        %v2140 = vpop.permute.xlu0 %2139
        %2141 = vrot.lane.b32.xlu0 %v2136, 127
        %v2142 = vpop.permute.xlu0 %2141
        %v2145 = vadd.f32 %v2033, %v2140
        %v2146 = vadd.f32 %v2034, %v2142
        %s2147 = sld [smem:[#allocation3 + $0x14]]
        %v2148 = vstv %s2147
        %v2149 = vmul.f32 %v2148, %v1985
        %v2150 = vmul.f32 %v2148, %v1986
        %2153 = vrot.lane.b32.xlu0 %v2149, 126
        %v2154 = vpop.permute.xlu0 %2153
        %2155 = vrot.lane.b32.xlu0 %v2150, 126
        %v2156 = vpop.permute.xlu0 %2155
        %v2159 = vadd.f32 %v2047, %v2154
        %v2160 = vadd.f32 %v2048, %v2156
        %s2161 = sld [smem:[#allocation3 + $0x94]]
        %v2162 = vstv %s2161
        %v2163 = vmul.f32 %v2162, %v1985
        %v2164 = vmul.f32 %v2162, %v1986
        %2167 = vrot.lane.b32.xlu0 %v2163, 126
        %v2168 = vpop.permute.xlu0 %2167
        %2169 = vrot.lane.b32.xlu0 %v2164, 126
        %v2170 = vpop.permute.xlu0 %2169
        %v2173 = vadd.f32 %v2061, %v2168
        %v2174 = vadd.f32 %v2062, %v2170
        %s2175 = sld [smem:[#allocation3 + $0x114]]
        %v2176 = vstv %s2175
        %v2177 = vmul.f32 %v2176, %v1985
        %v2178 = vmul.f32 %v2176, %v1986
        %2181 = vrot.lane.b32.xlu0 %v2177, 126
        %v2182 = vpop.permute.xlu0 %2181
        %2183 = vrot.lane.b32.xlu0 %v2178, 126
        %v2184 = vpop.permute.xlu0 %2183
        %v2187 = vadd.f32 %v2075, %v2182
        %v2188 = vadd.f32 %v2076, %v2184
        %s2189 = sld [smem:[#allocation3 + $0x194]]
        %v2190 = vstv %s2189
        %v2191 = vmul.f32 %v2190, %v1985
        %v2192 = vmul.f32 %v2190, %v1986
        %2195 = vrot.lane.b32.xlu0 %v2191, 126
        %v2196 = vpop.permute.xlu0 %2195
        %2197 = vrot.lane.b32.xlu0 %v2192, 126
        %v2198 = vpop.permute.xlu0 %2197
        %v2201 = vadd.f32 %v2089, %v2196
        %v2202 = vadd.f32 %v2090, %v2198
        %s2203 = sld [smem:[#allocation3 + $0x214]]
        %v2204 = vstv %s2203
        %v2205 = vmul.f32 %v2204, %v1985
        %v2206 = vmul.f32 %v2204, %v1986
        %2209 = vrot.lane.b32.xlu0 %v2205, 126
        %v2210 = vpop.permute.xlu0 %2209
        %2211 = vrot.lane.b32.xlu0 %v2206, 126
        %v2212 = vpop.permute.xlu0 %2211
        %v2215 = vadd.f32 %v2103, %v2210
        %v2216 = vadd.f32 %v2104, %v2212
        %s2217 = sld [smem:[#allocation3 + $0x294]]
        %v2218 = vstv %s2217
        %v2219 = vmul.f32 %v2218, %v1985
        %v2220 = vmul.f32 %v2218, %v1986
        %2223 = vrot.lane.b32.xlu0 %v2219, 126
        %v2224 = vpop.permute.xlu0 %2223
        %2225 = vrot.lane.b32.xlu0 %v2220, 126
        %v2226 = vpop.permute.xlu0 %2225
        %v2229 = vadd.f32 %v2117, %v2224
        %v2230 = vadd.f32 %v2118, %v2226
        %s2231 = sld [smem:[#allocation3 + $0x314]]
        %v2232 = vstv %s2231
        %v2233 = vmul.f32 %v2232, %v1985
        %v2234 = vmul.f32 %v2232, %v1986
        %2237 = vrot.lane.b32.xlu0 %v2233, 126
        %v2238 = vpop.permute.xlu0 %2237
        %2239 = vrot.lane.b32.xlu0 %v2234, 126
        %v2240 = vpop.permute.xlu0 %2239
        %v2243 = vadd.f32 %v2131, %v2238
        %v2244 = vadd.f32 %v2132, %v2240
        %s2245 = sld [smem:[#allocation3 + $0x394]]
        %v2246 = vstv %s2245
        %v2247 = vmul.f32 %v2246, %v1985
        %v2248 = vmul.f32 %v2246, %v1986
        %2251 = vrot.lane.b32.xlu0 %v2247, 126
        %v2252 = vpop.permute.xlu0 %2251
        %2253 = vrot.lane.b32.xlu0 %v2248, 126
        %v2254 = vpop.permute.xlu0 %2253
        %v2257 = vadd.f32 %v2145, %v2252
        %v2258 = vadd.f32 %v2146, %v2254
        %v2259 = vld [vmem:[%s267 + $0x1] sm:$0xff]
        %v2260 = vld [vmem:[%s267 + $0x9] sm:$0xff]
        %s2261 = sld [smem:[#allocation3 + $0x15]]
        %v2262 = vstv %s2261
        %v2263 = vmul.f32 %v2262, %v2259
        %v2264 = vmul.f32 %v2262, %v2260
        %v2265 = vadd.f32 %v2159, %v2263
        %v2266 = vadd.f32 %v2160, %v2264
        %s2267 = sld [smem:[#allocation3 + $0x95]]
        %v2268 = vstv %s2267
        %v2269 = vmul.f32 %v2268, %v2259
        %v2270 = vmul.f32 %v2268, %v2260
        %v2271 = vadd.f32 %v2173, %v2269
        %v2272 = vadd.f32 %v2174, %v2270
        %s2273 = sld [smem:[#allocation3 + $0x115]]
        %v2274 = vstv %s2273
        %v2275 = vmul.f32 %v2274, %v2259
        %v2276 = vmul.f32 %v2274, %v2260
        %v2277 = vadd.f32 %v2187, %v2275
        %v2278 = vadd.f32 %v2188, %v2276
        %s2279 = sld [smem:[#allocation3 + $0x195]]
        %v2280 = vstv %s2279
        %v2281 = vmul.f32 %v2280, %v2259
        %v2282 = vmul.f32 %v2280, %v2260
        %v2283 = vadd.f32 %v2201, %v2281
        %v2284 = vadd.f32 %v2202, %v2282
        %s2285 = sld [smem:[#allocation3 + $0x215]]
        %v2286 = vstv %s2285
        %v2287 = vmul.f32 %v2286, %v2259
        %v2288 = vmul.f32 %v2286, %v2260
        %v2289 = vadd.f32 %v2215, %v2287
        %v2290 = vadd.f32 %v2216, %v2288
        %s2291 = sld [smem:[#allocation3 + $0x295]]
        %v2292 = vstv %s2291
        %v2293 = vmul.f32 %v2292, %v2259
        %v2294 = vmul.f32 %v2292, %v2260
        %v2295 = vadd.f32 %v2229, %v2293
        %v2296 = vadd.f32 %v2230, %v2294
        %s2297 = sld [smem:[#allocation3 + $0x315]]
        %v2298 = vstv %s2297
        %v2299 = vmul.f32 %v2298, %v2259
        %v2300 = vmul.f32 %v2298, %v2260
        %v2301 = vadd.f32 %v2243, %v2299
        %v2302 = vadd.f32 %v2244, %v2300
        %s2303 = sld [smem:[#allocation3 + $0x395]]
        %v2304 = vstv %s2303
        %v2305 = vmul.f32 %v2304, %v2259
        %v2306 = vmul.f32 %v2304, %v2260
        %v2307 = vadd.f32 %v2257, %v2305
        %v2308 = vadd.f32 %v2258, %v2306
        %s2309 = sld [smem:[#allocation3 + $0x16]]
        %v2310 = vstv %s2309
        %v2311 = vmul.f32 %v2310, %v2259
        %v2312 = vmul.f32 %v2310, %v2260
        %2315 = vrot.lane.b32.xlu0 %v2311, 127
        %v2316 = vpop.permute.xlu0 %2315
        %2317 = vrot.lane.b32.xlu0 %v2312, 127
        %v2318 = vpop.permute.xlu0 %2317
        %v2321 = vadd.f32 %v2265, %v2316
        %v2322 = vadd.f32 %v2266, %v2318
        %s2323 = sld [smem:[#allocation3 + $0x96]]
        %v2324 = vstv %s2323
        %v2325 = vmul.f32 %v2324, %v2259
        %v2326 = vmul.f32 %v2324, %v2260
        %2329 = vrot.lane.b32.xlu0 %v2325, 127
        %v2330 = vpop.permute.xlu0 %2329
        %2331 = vrot.lane.b32.xlu0 %v2326, 127
        %v2332 = vpop.permute.xlu0 %2331
        %v2335 = vadd.f32 %v2271, %v2330
        %v2336 = vadd.f32 %v2272, %v2332
        %s2337 = sld [smem:[#allocation3 + $0x116]]
        %v2338 = vstv %s2337
        %v2339 = vmul.f32 %v2338, %v2259
        %v2340 = vmul.f32 %v2338, %v2260
        %2343 = vrot.lane.b32.xlu0 %v2339, 127
        %v2344 = vpop.permute.xlu0 %2343
        %2345 = vrot.lane.b32.xlu0 %v2340, 127
        %v2346 = vpop.permute.xlu0 %2345
        %v2349 = vadd.f32 %v2277, %v2344
        %v2350 = vadd.f32 %v2278, %v2346
        %s2351 = sld [smem:[#allocation3 + $0x196]]
        %v2352 = vstv %s2351
        %v2353 = vmul.f32 %v2352, %v2259
        %v2354 = vmul.f32 %v2352, %v2260
        %2357 = vrot.lane.b32.xlu0 %v2353, 127
        %v2358 = vpop.permute.xlu0 %2357
        %2359 = vrot.lane.b32.xlu0 %v2354, 127
        %v2360 = vpop.permute.xlu0 %2359
        %v2363 = vadd.f32 %v2283, %v2358
        %v2364 = vadd.f32 %v2284, %v2360
        %s2365 = sld [smem:[#allocation3 + $0x216]]
        %v2366 = vstv %s2365
        %v2367 = vmul.f32 %v2366, %v2259
        %v2368 = vmul.f32 %v2366, %v2260
        %2371 = vrot.lane.b32.xlu0 %v2367, 127
        %v2372 = vpop.permute.xlu0 %2371
        %2373 = vrot.lane.b32.xlu0 %v2368, 127
        %v2374 = vpop.permute.xlu0 %2373
        %v2377 = vadd.f32 %v2289, %v2372
        %v2378 = vadd.f32 %v2290, %v2374
        %s2379 = sld [smem:[#allocation3 + $0x296]]
        %v2380 = vstv %s2379
        %v2381 = vmul.f32 %v2380, %v2259
        %v2382 = vmul.f32 %v2380, %v2260
        %2385 = vrot.lane.b32.xlu0 %v2381, 127
        %v2386 = vpop.permute.xlu0 %2385
        %2387 = vrot.lane.b32.xlu0 %v2382, 127
        %v2388 = vpop.permute.xlu0 %2387
        %v2391 = vadd.f32 %v2295, %v2386
        %v2392 = vadd.f32 %v2296, %v2388
        %s2393 = sld [smem:[#allocation3 + $0x316]]
        %v2394 = vstv %s2393
        %v2395 = vmul.f32 %v2394, %v2259
        %v2396 = vmul.f32 %v2394, %v2260
        %2399 = vrot.lane.b32.xlu0 %v2395, 127
        %v2400 = vpop.permute.xlu0 %2399
        %2401 = vrot.lane.b32.xlu0 %v2396, 127
        %v2402 = vpop.permute.xlu0 %2401
        %v2405 = vadd.f32 %v2301, %v2400
        %v2406 = vadd.f32 %v2302, %v2402
        %s2407 = sld [smem:[#allocation3 + $0x396]]
        %v2408 = vstv %s2407
        %v2409 = vmul.f32 %v2408, %v2259
        %v2410 = vmul.f32 %v2408, %v2260
        %2413 = vrot.lane.b32.xlu0 %v2409, 127
        %v2414 = vpop.permute.xlu0 %2413
        %2415 = vrot.lane.b32.xlu0 %v2410, 127
        %v2416 = vpop.permute.xlu0 %2415
        %v2419 = vadd.f32 %v2307, %v2414
        %v2420 = vadd.f32 %v2308, %v2416
        %s2421 = sld [smem:[#allocation3 + $0x17]]
        %v2422 = vstv %s2421
        %v2423 = vmul.f32 %v2422, %v2259
        %v2424 = vmul.f32 %v2422, %v2260
        %2427 = vrot.lane.b32.xlu0 %v2423, 126
        %v2428 = vpop.permute.xlu0 %2427
        %2429 = vrot.lane.b32.xlu0 %v2424, 126
        %v2430 = vpop.permute.xlu0 %2429
        %v2433 = vadd.f32 %v2321, %v2428
        %v2434 = vadd.f32 %v2322, %v2430
        %s2435 = sld [smem:[#allocation3 + $0x97]]
        %v2436 = vstv %s2435
        %v2437 = vmul.f32 %v2436, %v2259
        %v2438 = vmul.f32 %v2436, %v2260
        %2441 = vrot.lane.b32.xlu0 %v2437, 126
        %v2442 = vpop.permute.xlu0 %2441
        %2443 = vrot.lane.b32.xlu0 %v2438, 126
        %v2444 = vpop.permute.xlu0 %2443
        %v2447 = vadd.f32 %v2335, %v2442
        %v2448 = vadd.f32 %v2336, %v2444
        %s2449 = sld [smem:[#allocation3 + $0x117]]
        %v2450 = vstv %s2449
        %v2451 = vmul.f32 %v2450, %v2259
        %v2452 = vmul.f32 %v2450, %v2260
        %2455 = vrot.lane.b32.xlu0 %v2451, 126
        %v2456 = vpop.permute.xlu0 %2455
        %2457 = vrot.lane.b32.xlu0 %v2452, 126
        %v2458 = vpop.permute.xlu0 %2457
        %v2461 = vadd.f32 %v2349, %v2456
        %v2462 = vadd.f32 %v2350, %v2458
        %s2463 = sld [smem:[#allocation3 + $0x197]]
        %v2464 = vstv %s2463
        %v2465 = vmul.f32 %v2464, %v2259
        %v2466 = vmul.f32 %v2464, %v2260
        %2469 = vrot.lane.b32.xlu0 %v2465, 126
        %v2470 = vpop.permute.xlu0 %2469
        %2471 = vrot.lane.b32.xlu0 %v2466, 126
        %v2472 = vpop.permute.xlu0 %2471
        %v2475 = vadd.f32 %v2363, %v2470
        %v2476 = vadd.f32 %v2364, %v2472
        %s2477 = sld [smem:[#allocation3 + $0x217]]
        %v2478 = vstv %s2477
        %v2479 = vmul.f32 %v2478, %v2259
        %v2480 = vmul.f32 %v2478, %v2260
        %2483 = vrot.lane.b32.xlu0 %v2479, 126
        %v2484 = vpop.permute.xlu0 %2483
        %2485 = vrot.lane.b32.xlu0 %v2480, 126
        %v2486 = vpop.permute.xlu0 %2485
        %v2489 = vadd.f32 %v2377, %v2484
        %v2490 = vadd.f32 %v2378, %v2486
        %s2491 = sld [smem:[#allocation3 + $0x297]]
        %v2492 = vstv %s2491
        %v2493 = vmul.f32 %v2492, %v2259
        %v2494 = vmul.f32 %v2492, %v2260
        %2497 = vrot.lane.b32.xlu0 %v2493, 126
        %v2498 = vpop.permute.xlu0 %2497
        %2499 = vrot.lane.b32.xlu0 %v2494, 126
        %v2500 = vpop.permute.xlu0 %2499
        %v2503 = vadd.f32 %v2391, %v2498
        %v2504 = vadd.f32 %v2392, %v2500
        %s2505 = sld [smem:[#allocation3 + $0x317]]
        %v2506 = vstv %s2505
        %v2507 = vmul.f32 %v2506, %v2259
        %v2508 = vmul.f32 %v2506, %v2260
        %2511 = vrot.lane.b32.xlu0 %v2507, 126
        %v2512 = vpop.permute.xlu0 %2511
        %2513 = vrot.lane.b32.xlu0 %v2508, 126
        %v2514 = vpop.permute.xlu0 %2513
        %v2517 = vadd.f32 %v2405, %v2512
        %v2518 = vadd.f32 %v2406, %v2514
        %s2519 = sld [smem:[#allocation3 + $0x397]]
        %v2520 = vstv %s2519
        %v2521 = vmul.f32 %v2520, %v2259
        %v2522 = vmul.f32 %v2520, %v2260
        %2525 = vrot.lane.b32.xlu0 %v2521, 126
        %v2526 = vpop.permute.xlu0 %2525
        %2527 = vrot.lane.b32.xlu0 %v2522, 126
        %v2528 = vpop.permute.xlu0 %2527
        %v2531 = vadd.f32 %v2419, %v2526
        %v2532 = vadd.f32 %v2420, %v2528
        %v2533 = vld [vmem:[%s267 + $0x2] sm:$0xff]
        %v2534 = vld [vmem:[%s267 + $0xa] sm:$0xff]
        %s2535 = sld [smem:[#allocation3 + $0x18]]
        %v2536 = vstv %s2535
        %v2537 = vmul.f32 %v2536, %v2533
        %v2538 = vmul.f32 %v2536, %v2534
        %v2539 = vadd.f32 %v2433, %v2537
        %v2540 = vadd.f32 %v2434, %v2538
        %s2541 = sld [smem:[#allocation3 + $0x98]]
        %v2542 = vstv %s2541
        %v2543 = vmul.f32 %v2542, %v2533
        %v2544 = vmul.f32 %v2542, %v2534
        %v2545 = vadd.f32 %v2447, %v2543
        %v2546 = vadd.f32 %v2448, %v2544
        %s2547 = sld [smem:[#allocation3 + $0x118]]
        %v2548 = vstv %s2547
        %v2549 = vmul.f32 %v2548, %v2533
        %v2550 = vmul.f32 %v2548, %v2534
        %v2551 = vadd.f32 %v2461, %v2549
        %v2552 = vadd.f32 %v2462, %v2550
        %s2553 = sld [smem:[#allocation3 + $0x198]]
        %v2554 = vstv %s2553
        %v2555 = vmul.f32 %v2554, %v2533
        %v2556 = vmul.f32 %v2554, %v2534
        %v2557 = vadd.f32 %v2475, %v2555
        %v2558 = vadd.f32 %v2476, %v2556
        %s2559 = sld [smem:[#allocation3 + $0x218]]
        %v2560 = vstv %s2559
        %v2561 = vmul.f32 %v2560, %v2533
        %v2562 = vmul.f32 %v2560, %v2534
        %v2563 = vadd.f32 %v2489, %v2561
        %v2564 = vadd.f32 %v2490, %v2562
        %s2565 = sld [smem:[#allocation3 + $0x298]]
        %v2566 = vstv %s2565
        %v2567 = vmul.f32 %v2566, %v2533
        %v2568 = vmul.f32 %v2566, %v2534
        %v2569 = vadd.f32 %v2503, %v2567
        %v2570 = vadd.f32 %v2504, %v2568
        %s2571 = sld [smem:[#allocation3 + $0x318]]
        %v2572 = vstv %s2571
        %v2573 = vmul.f32 %v2572, %v2533
        %v2574 = vmul.f32 %v2572, %v2534
        %v2575 = vadd.f32 %v2517, %v2573
        %v2576 = vadd.f32 %v2518, %v2574
        %s2577 = sld [smem:[#allocation3 + $0x398]]
        %v2578 = vstv %s2577
        %v2579 = vmul.f32 %v2578, %v2533
        %v2580 = vmul.f32 %v2578, %v2534
        %v2581 = vadd.f32 %v2531, %v2579
        %v2582 = vadd.f32 %v2532, %v2580
        %s2583 = sld [smem:[#allocation3 + $0x19]]
        %v2584 = vstv %s2583
        %v2585 = vmul.f32 %v2584, %v2533
        %v2586 = vmul.f32 %v2584, %v2534
        %2589 = vrot.lane.b32.xlu0 %v2585, 127
        %v2590 = vpop.permute.xlu0 %2589
        %2591 = vrot.lane.b32.xlu0 %v2586, 127
        %v2592 = vpop.permute.xlu0 %2591
        %v2595 = vadd.f32 %v2539, %v2590
        %v2596 = vadd.f32 %v2540, %v2592
        %s2597 = sld [smem:[#allocation3 + $0x99]]
        %v2598 = vstv %s2597
        %v2599 = vmul.f32 %v2598, %v2533
        %v2600 = vmul.f32 %v2598, %v2534
        %2603 = vrot.lane.b32.xlu0 %v2599, 127
        %v2604 = vpop.permute.xlu0 %2603
        %2605 = vrot.lane.b32.xlu0 %v2600, 127
        %v2606 = vpop.permute.xlu0 %2605
        %v2609 = vadd.f32 %v2545, %v2604
        %v2610 = vadd.f32 %v2546, %v2606
        %s2611 = sld [smem:[#allocation3 + $0x119]]
        %v2612 = vstv %s2611
        %v2613 = vmul.f32 %v2612, %v2533
        %v2614 = vmul.f32 %v2612, %v2534
        %2617 = vrot.lane.b32.xlu0 %v2613, 127
        %v2618 = vpop.permute.xlu0 %2617
        %2619 = vrot.lane.b32.xlu0 %v2614, 127
        %v2620 = vpop.permute.xlu0 %2619
        %v2623 = vadd.f32 %v2551, %v2618
        %v2624 = vadd.f32 %v2552, %v2620
        %s2625 = sld [smem:[#allocation3 + $0x199]]
        %v2626 = vstv %s2625
        %v2627 = vmul.f32 %v2626, %v2533
        %v2628 = vmul.f32 %v2626, %v2534
        %2631 = vrot.lane.b32.xlu0 %v2627, 127
        %v2632 = vpop.permute.xlu0 %2631
        %2633 = vrot.lane.b32.xlu0 %v2628, 127
        %v2634 = vpop.permute.xlu0 %2633
        %v2637 = vadd.f32 %v2557, %v2632
        %v2638 = vadd.f32 %v2558, %v2634
        %s2639 = sld [smem:[#allocation3 + $0x219]]
        %v2640 = vstv %s2639
        %v2641 = vmul.f32 %v2640, %v2533
        %v2642 = vmul.f32 %v2640, %v2534
        %2645 = vrot.lane.b32.xlu0 %v2641, 127
        %v2646 = vpop.permute.xlu0 %2645
        %2647 = vrot.lane.b32.xlu0 %v2642, 127
        %v2648 = vpop.permute.xlu0 %2647
        %v2651 = vadd.f32 %v2563, %v2646
        %v2652 = vadd.f32 %v2564, %v2648
        %s2653 = sld [smem:[#allocation3 + $0x299]]
        %v2654 = vstv %s2653
        %v2655 = vmul.f32 %v2654, %v2533
        %v2656 = vmul.f32 %v2654, %v2534
        %2659 = vrot.lane.b32.xlu0 %v2655, 127
        %v2660 = vpop.permute.xlu0 %2659
        %2661 = vrot.lane.b32.xlu0 %v2656, 127
        %v2662 = vpop.permute.xlu0 %2661
        %v2665 = vadd.f32 %v2569, %v2660
        %v2666 = vadd.f32 %v2570, %v2662
        %s2667 = sld [smem:[#allocation3 + $0x319]]
        %v2668 = vstv %s2667
        %v2669 = vmul.f32 %v2668, %v2533
        %v2670 = vmul.f32 %v2668, %v2534
        %2673 = vrot.lane.b32.xlu0 %v2669, 127
        %v2674 = vpop.permute.xlu0 %2673
        %2675 = vrot.lane.b32.xlu0 %v2670, 127
        %v2676 = vpop.permute.xlu0 %2675
        %v2679 = vadd.f32 %v2575, %v2674
        %v2680 = vadd.f32 %v2576, %v2676
        %s2681 = sld [smem:[#allocation3 + $0x399]]
        %v2682 = vstv %s2681
        %v2683 = vmul.f32 %v2682, %v2533
        %v2684 = vmul.f32 %v2682, %v2534
        %2687 = vrot.lane.b32.xlu0 %v2683, 127
        %v2688 = vpop.permute.xlu0 %2687
        %2689 = vrot.lane.b32.xlu0 %v2684, 127
        %v2690 = vpop.permute.xlu0 %2689
        %v2693 = vadd.f32 %v2581, %v2688
        %v2694 = vadd.f32 %v2582, %v2690
        %s2695 = sld [smem:[#allocation3 + $0x1a]]
        %v2696 = vstv %s2695
        %v2697 = vmul.f32 %v2696, %v2533
        %v2698 = vmul.f32 %v2696, %v2534
        %2701 = vrot.lane.b32.xlu0 %v2697, 126
        %v2702 = vpop.permute.xlu0 %2701
        %2703 = vrot.lane.b32.xlu0 %v2698, 126
        %v2704 = vpop.permute.xlu0 %2703
        %v2707 = vadd.f32 %v2595, %v2702
        %v2708 = vadd.f32 %v2596, %v2704
        %s2709 = sld [smem:[#allocation3 + $0x9a]]
        %v2710 = vstv %s2709
        %v2711 = vmul.f32 %v2710, %v2533
        %v2712 = vmul.f32 %v2710, %v2534
        %2715 = vrot.lane.b32.xlu0 %v2711, 126
        %v2716 = vpop.permute.xlu0 %2715
        %2717 = vrot.lane.b32.xlu0 %v2712, 126
        %v2718 = vpop.permute.xlu0 %2717
        %v2721 = vadd.f32 %v2609, %v2716
        %v2722 = vadd.f32 %v2610, %v2718
        %s2723 = sld [smem:[#allocation3 + $0x11a]]
        %v2724 = vstv %s2723
        %v2725 = vmul.f32 %v2724, %v2533
        %v2726 = vmul.f32 %v2724, %v2534
        %2729 = vrot.lane.b32.xlu0 %v2725, 126
        %v2730 = vpop.permute.xlu0 %2729
        %2731 = vrot.lane.b32.xlu0 %v2726, 126
        %v2732 = vpop.permute.xlu0 %2731
        %v2735 = vadd.f32 %v2623, %v2730
        %v2736 = vadd.f32 %v2624, %v2732
        %s2737 = sld [smem:[#allocation3 + $0x19a]]
        %v2738 = vstv %s2737
        %v2739 = vmul.f32 %v2738, %v2533
        %v2740 = vmul.f32 %v2738, %v2534
        %2743 = vrot.lane.b32.xlu0 %v2739, 126
        %v2744 = vpop.permute.xlu0 %2743
        %2745 = vrot.lane.b32.xlu0 %v2740, 126
        %v2746 = vpop.permute.xlu0 %2745
        %v2749 = vadd.f32 %v2637, %v2744
        %v2750 = vadd.f32 %v2638, %v2746
        %s2751 = sld [smem:[#allocation3 + $0x21a]]
        %v2752 = vstv %s2751
        %v2753 = vmul.f32 %v2752, %v2533
        %v2754 = vmul.f32 %v2752, %v2534
        %2757 = vrot.lane.b32.xlu0 %v2753, 126
        %v2758 = vpop.permute.xlu0 %2757
        %2759 = vrot.lane.b32.xlu0 %v2754, 126
        %v2760 = vpop.permute.xlu0 %2759
        %v2763 = vadd.f32 %v2651, %v2758
        %v2764 = vadd.f32 %v2652, %v2760
        %s2765 = sld [smem:[#allocation3 + $0x29a]]
        %v2766 = vstv %s2765
        %v2767 = vmul.f32 %v2766, %v2533
        %v2768 = vmul.f32 %v2766, %v2534
        %2771 = vrot.lane.b32.xlu0 %v2767, 126
        %v2772 = vpop.permute.xlu0 %2771
        %2773 = vrot.lane.b32.xlu0 %v2768, 126
        %v2774 = vpop.permute.xlu0 %2773
        %v2777 = vadd.f32 %v2665, %v2772
        %v2778 = vadd.f32 %v2666, %v2774
        %s2779 = sld [smem:[#allocation3 + $0x31a]]
        %v2780 = vstv %s2779
        %v2781 = vmul.f32 %v2780, %v2533
        %v2782 = vmul.f32 %v2780, %v2534
        %2785 = vrot.lane.b32.xlu0 %v2781, 126
        %v2786 = vpop.permute.xlu0 %2785
        %2787 = vrot.lane.b32.xlu0 %v2782, 126
        %v2788 = vpop.permute.xlu0 %2787
        %v2791 = vadd.f32 %v2679, %v2786
        %v2792 = vadd.f32 %v2680, %v2788
        %s2793 = sld [smem:[#allocation3 + $0x39a]]
        %v2794 = vstv %s2793
        %v2795 = vmul.f32 %v2794, %v2533
        %v2796 = vmul.f32 %v2794, %v2534
        %2799 = vrot.lane.b32.xlu0 %v2795, 126
        %v2800 = vpop.permute.xlu0 %2799
        %2801 = vrot.lane.b32.xlu0 %v2796, 126
        %v2802 = vpop.permute.xlu0 %2801
        %v2805 = vadd.f32 %v2693, %v2800
        %v2806 = vadd.f32 %v2694, %v2802
        %v2807 = vld [vmem:[%s282] sm:$0xff]
        %v2808 = vld [vmem:[%s282 + $0x8] sm:$0xff]
        %s2809 = sld [smem:[#allocation3 + $0x1b]]
        %v2810 = vstv %s2809
        %v2811 = vmul.f32 %v2810, %v2807
        %v2812 = vmul.f32 %v2810, %v2808
        %v2813 = vadd.f32 %v2707, %v2811
        %v2814 = vadd.f32 %v2708, %v2812
        %s2815 = sld [smem:[#allocation3 + $0x9b]]
        %v2816 = vstv %s2815
        %v2817 = vmul.f32 %v2816, %v2807
        %v2818 = vmul.f32 %v2816, %v2808
        %v2819 = vadd.f32 %v2721, %v2817
        %v2820 = vadd.f32 %v2722, %v2818
        %s2821 = sld [smem:[#allocation3 + $0x11b]]
        %v2822 = vstv %s2821
        %v2823 = vmul.f32 %v2822, %v2807
        %v2824 = vmul.f32 %v2822, %v2808
        %v2825 = vadd.f32 %v2735, %v2823
        %v2826 = vadd.f32 %v2736, %v2824
        %s2827 = sld [smem:[#allocation3 + $0x19b]]
        %v2828 = vstv %s2827
        %v2829 = vmul.f32 %v2828, %v2807
        %v2830 = vmul.f32 %v2828, %v2808
        %v2831 = vadd.f32 %v2749, %v2829
        %v2832 = vadd.f32 %v2750, %v2830
        %s2833 = sld [smem:[#allocation3 + $0x21b]]
        %v2834 = vstv %s2833
        %v2835 = vmul.f32 %v2834, %v2807
        %v2836 = vmul.f32 %v2834, %v2808
        %v2837 = vadd.f32 %v2763, %v2835
        %v2838 = vadd.f32 %v2764, %v2836
        %s2839 = sld [smem:[#allocation3 + $0x29b]]
        %v2840 = vstv %s2839
        %v2841 = vmul.f32 %v2840, %v2807
        %v2842 = vmul.f32 %v2840, %v2808
        %v2843 = vadd.f32 %v2777, %v2841
        %v2844 = vadd.f32 %v2778, %v2842
        %s2845 = sld [smem:[#allocation3 + $0x31b]]
        %v2846 = vstv %s2845
        %v2847 = vmul.f32 %v2846, %v2807
        %v2848 = vmul.f32 %v2846, %v2808
        %v2849 = vadd.f32 %v2791, %v2847
        %v2850 = vadd.f32 %v2792, %v2848
        %s2851 = sld [smem:[#allocation3 + $0x39b]]
        %v2852 = vstv %s2851
        %v2853 = vmul.f32 %v2852, %v2807
        %v2854 = vmul.f32 %v2852, %v2808
        %v2855 = vadd.f32 %v2805, %v2853
        %v2856 = vadd.f32 %v2806, %v2854
        %s2857 = sld [smem:[#allocation3 + $0x1c]]
        %v2858 = vstv %s2857
        %v2859 = vmul.f32 %v2858, %v2807
        %v2860 = vmul.f32 %v2858, %v2808
        %2863 = vrot.lane.b32.xlu0 %v2859, 127
        %v2864 = vpop.permute.xlu0 %2863
        %2865 = vrot.lane.b32.xlu0 %v2860, 127
        %v2866 = vpop.permute.xlu0 %2865
        %v2869 = vadd.f32 %v2813, %v2864
        %v2870 = vadd.f32 %v2814, %v2866
        %s2871 = sld [smem:[#allocation3 + $0x9c]]
        %v2872 = vstv %s2871
        %v2873 = vmul.f32 %v2872, %v2807
        %v2874 = vmul.f32 %v2872, %v2808
        %2877 = vrot.lane.b32.xlu0 %v2873, 127
        %v2878 = vpop.permute.xlu0 %2877
        %2879 = vrot.lane.b32.xlu0 %v2874, 127
        %v2880 = vpop.permute.xlu0 %2879
        %v2883 = vadd.f32 %v2819, %v2878
        %v2884 = vadd.f32 %v2820, %v2880
        %s2885 = sld [smem:[#allocation3 + $0x11c]]
        %v2886 = vstv %s2885
        %v2887 = vmul.f32 %v2886, %v2807
        %v2888 = vmul.f32 %v2886, %v2808
        %2891 = vrot.lane.b32.xlu0 %v2887, 127
        %v2892 = vpop.permute.xlu0 %2891
        %2893 = vrot.lane.b32.xlu0 %v2888, 127
        %v2894 = vpop.permute.xlu0 %2893
        %v2897 = vadd.f32 %v2825, %v2892
        %v2898 = vadd.f32 %v2826, %v2894
        %s2899 = sld [smem:[#allocation3 + $0x19c]]
        %v2900 = vstv %s2899
        %v2901 = vmul.f32 %v2900, %v2807
        %v2902 = vmul.f32 %v2900, %v2808
        %2905 = vrot.lane.b32.xlu0 %v2901, 127
        %v2906 = vpop.permute.xlu0 %2905
        %2907 = vrot.lane.b32.xlu0 %v2902, 127
        %v2908 = vpop.permute.xlu0 %2907
        %v2911 = vadd.f32 %v2831, %v2906
        %v2912 = vadd.f32 %v2832, %v2908
        %s2913 = sld [smem:[#allocation3 + $0x21c]]
        %v2914 = vstv %s2913
        %v2915 = vmul.f32 %v2914, %v2807
        %v2916 = vmul.f32 %v2914, %v2808
        %2919 = vrot.lane.b32.xlu0 %v2915, 127
        %v2920 = vpop.permute.xlu0 %2919
        %2921 = vrot.lane.b32.xlu0 %v2916, 127
        %v2922 = vpop.permute.xlu0 %2921
        %v2925 = vadd.f32 %v2837, %v2920
        %v2926 = vadd.f32 %v2838, %v2922
        %s2927 = sld [smem:[#allocation3 + $0x29c]]
        %v2928 = vstv %s2927
        %v2929 = vmul.f32 %v2928, %v2807
        %v2930 = vmul.f32 %v2928, %v2808
        %2933 = vrot.lane.b32.xlu0 %v2929, 127
        %v2934 = vpop.permute.xlu0 %2933
        %2935 = vrot.lane.b32.xlu0 %v2930, 127
        %v2936 = vpop.permute.xlu0 %2935
        %v2939 = vadd.f32 %v2843, %v2934
        %v2940 = vadd.f32 %v2844, %v2936
        %s2941 = sld [smem:[#allocation3 + $0x31c]]
        %v2942 = vstv %s2941
        %v2943 = vmul.f32 %v2942, %v2807
        %v2944 = vmul.f32 %v2942, %v2808
        %2947 = vrot.lane.b32.xlu0 %v2943, 127
        %v2948 = vpop.permute.xlu0 %2947
        %2949 = vrot.lane.b32.xlu0 %v2944, 127
        %v2950 = vpop.permute.xlu0 %2949
        %v2953 = vadd.f32 %v2849, %v2948
        %v2954 = vadd.f32 %v2850, %v2950
        %s2955 = sld [smem:[#allocation3 + $0x39c]]
        %v2956 = vstv %s2955
        %v2957 = vmul.f32 %v2956, %v2807
        %v2958 = vmul.f32 %v2956, %v2808
        %2961 = vrot.lane.b32.xlu0 %v2957, 127
        %v2962 = vpop.permute.xlu0 %2961
        %2963 = vrot.lane.b32.xlu0 %v2958, 127
        %v2964 = vpop.permute.xlu0 %2963
        %v2967 = vadd.f32 %v2855, %v2962
        %v2968 = vadd.f32 %v2856, %v2964
        %s2969 = sld [smem:[#allocation3 + $0x1d]]
        %v2970 = vstv %s2969
        %v2971 = vmul.f32 %v2970, %v2807
        %v2972 = vmul.f32 %v2970, %v2808
        %2975 = vrot.lane.b32.xlu0 %v2971, 126
        %v2976 = vpop.permute.xlu0 %2975
        %2977 = vrot.lane.b32.xlu0 %v2972, 126
        %v2978 = vpop.permute.xlu0 %2977
        %v2981 = vadd.f32 %v2869, %v2976
        %v2982 = vadd.f32 %v2870, %v2978
        %s2983 = sld [smem:[#allocation3 + $0x9d]]
        %v2984 = vstv %s2983
        %v2985 = vmul.f32 %v2984, %v2807
        %v2986 = vmul.f32 %v2984, %v2808
        %2989 = vrot.lane.b32.xlu0 %v2985, 126
        %v2990 = vpop.permute.xlu0 %2989
        %2991 = vrot.lane.b32.xlu0 %v2986, 126
        %v2992 = vpop.permute.xlu0 %2991
        %v2995 = vadd.f32 %v2883, %v2990
        %v2996 = vadd.f32 %v2884, %v2992
        %s2997 = sld [smem:[#allocation3 + $0x11d]]
        %v2998 = vstv %s2997
        %v2999 = vmul.f32 %v2998, %v2807
        %v3000 = vmul.f32 %v2998, %v2808
        %3003 = vrot.lane.b32.xlu0 %v2999, 126
        %v3004 = vpop.permute.xlu0 %3003
        %3005 = vrot.lane.b32.xlu0 %v3000, 126
        %v3006 = vpop.permute.xlu0 %3005
        %v3009 = vadd.f32 %v2897, %v3004
        %v3010 = vadd.f32 %v2898, %v3006
        %s3011 = sld [smem:[#allocation3 + $0x19d]]
        %v3012 = vstv %s3011
        %v3013 = vmul.f32 %v3012, %v2807
        %v3014 = vmul.f32 %v3012, %v2808
        %3017 = vrot.lane.b32.xlu0 %v3013, 126
        %v3018 = vpop.permute.xlu0 %3017
        %3019 = vrot.lane.b32.xlu0 %v3014, 126
        %v3020 = vpop.permute.xlu0 %3019
        %v3023 = vadd.f32 %v2911, %v3018
        %v3024 = vadd.f32 %v2912, %v3020
        %s3025 = sld [smem:[#allocation3 + $0x21d]]
        %v3026 = vstv %s3025
        %v3027 = vmul.f32 %v3026, %v2807
        %v3028 = vmul.f32 %v3026, %v2808
        %3031 = vrot.lane.b32.xlu0 %v3027, 126
        %v3032 = vpop.permute.xlu0 %3031
        %3033 = vrot.lane.b32.xlu0 %v3028, 126
        %v3034 = vpop.permute.xlu0 %3033
        %v3037 = vadd.f32 %v2925, %v3032
        %v3038 = vadd.f32 %v2926, %v3034
        %s3039 = sld [smem:[#allocation3 + $0x29d]]
        %v3040 = vstv %s3039
        %v3041 = vmul.f32 %v3040, %v2807
        %v3042 = vmul.f32 %v3040, %v2808
        %3045 = vrot.lane.b32.xlu0 %v3041, 126
        %v3046 = vpop.permute.xlu0 %3045
        %3047 = vrot.lane.b32.xlu0 %v3042, 126
        %v3048 = vpop.permute.xlu0 %3047
        %v3051 = vadd.f32 %v2939, %v3046
        %v3052 = vadd.f32 %v2940, %v3048
        %s3053 = sld [smem:[#allocation3 + $0x31d]]
        %v3054 = vstv %s3053
        %v3055 = vmul.f32 %v3054, %v2807
        %v3056 = vmul.f32 %v3054, %v2808
        %3059 = vrot.lane.b32.xlu0 %v3055, 126
        %v3060 = vpop.permute.xlu0 %3059
        %3061 = vrot.lane.b32.xlu0 %v3056, 126
        %v3062 = vpop.permute.xlu0 %3061
        %v3065 = vadd.f32 %v2953, %v3060
        %v3066 = vadd.f32 %v2954, %v3062
        %s3067 = sld [smem:[#allocation3 + $0x39d]]
        %v3068 = vstv %s3067
        %v3069 = vmul.f32 %v3068, %v2807
        %v3070 = vmul.f32 %v3068, %v2808
        %3073 = vrot.lane.b32.xlu0 %v3069, 126
        %v3074 = vpop.permute.xlu0 %3073
        %3075 = vrot.lane.b32.xlu0 %v3070, 126
        %v3076 = vpop.permute.xlu0 %3075
        %v3079 = vadd.f32 %v2967, %v3074
        %v3080 = vadd.f32 %v2968, %v3076
        %v3081 = vld [vmem:[%s282 + $0x1] sm:$0xff]
        %v3082 = vld [vmem:[%s282 + $0x9] sm:$0xff]
        %s3083 = sld [smem:[#allocation3 + $0x1e]]
        %v3084 = vstv %s3083
        %v3085 = vmul.f32 %v3084, %v3081
        %v3086 = vmul.f32 %v3084, %v3082
        %v3087 = vadd.f32 %v2981, %v3085
        %v3088 = vadd.f32 %v2982, %v3086
        %s3089 = sld [smem:[#allocation3 + $0x9e]]
        %v3090 = vstv %s3089
        %v3091 = vmul.f32 %v3090, %v3081
        %v3092 = vmul.f32 %v3090, %v3082
        %v3093 = vadd.f32 %v2995, %v3091
        %v3094 = vadd.f32 %v2996, %v3092
        %s3095 = sld [smem:[#allocation3 + $0x11e]]
        %v3096 = vstv %s3095
        %v3097 = vmul.f32 %v3096, %v3081
        %v3098 = vmul.f32 %v3096, %v3082
        %v3099 = vadd.f32 %v3009, %v3097
        %v3100 = vadd.f32 %v3010, %v3098
        %s3101 = sld [smem:[#allocation3 + $0x19e]]
        %v3102 = vstv %s3101
        %v3103 = vmul.f32 %v3102, %v3081
        %v3104 = vmul.f32 %v3102, %v3082
        %v3105 = vadd.f32 %v3023, %v3103
        %v3106 = vadd.f32 %v3024, %v3104
        %s3107 = sld [smem:[#allocation3 + $0x21e]]
        %v3108 = vstv %s3107
        %v3109 = vmul.f32 %v3108, %v3081
        %v3110 = vmul.f32 %v3108, %v3082
        %v3111 = vadd.f32 %v3037, %v3109
        %v3112 = vadd.f32 %v3038, %v3110
        %s3113 = sld [smem:[#allocation3 + $0x29e]]
        %v3114 = vstv %s3113
        %v3115 = vmul.f32 %v3114, %v3081
        %v3116 = vmul.f32 %v3114, %v3082
        %v3117 = vadd.f32 %v3051, %v3115
        %v3118 = vadd.f32 %v3052, %v3116
        %s3119 = sld [smem:[#allocation3 + $0x31e]]
        %v3120 = vstv %s3119
        %v3121 = vmul.f32 %v3120, %v3081
        %v3122 = vmul.f32 %v3120, %v3082
        %v3123 = vadd.f32 %v3065, %v3121
        %v3124 = vadd.f32 %v3066, %v3122
        %s3125 = sld [smem:[#allocation3 + $0x39e]]
        %v3126 = vstv %s3125
        %v3127 = vmul.f32 %v3126, %v3081
        %v3128 = vmul.f32 %v3126, %v3082
        %v3129 = vadd.f32 %v3079, %v3127
        %v3130 = vadd.f32 %v3080, %v3128
        %s3131 = sld [smem:[#allocation3 + $0x1f]]
        %v3132 = vstv %s3131
        %v3133 = vmul.f32 %v3132, %v3081
        %v3134 = vmul.f32 %v3132, %v3082
        %3137 = vrot.lane.b32.xlu0 %v3133, 127
        %v3138 = vpop.permute.xlu0 %3137
        %3139 = vrot.lane.b32.xlu0 %v3134, 127
        %v3140 = vpop.permute.xlu0 %3139
        %v3143 = vadd.f32 %v3087, %v3138
        %v3144 = vadd.f32 %v3088, %v3140
        %s3145 = sld [smem:[#allocation3 + $0x9f]]
        %v3146 = vstv %s3145
        %v3147 = vmul.f32 %v3146, %v3081
        %v3148 = vmul.f32 %v3146, %v3082
        %3151 = vrot.lane.b32.xlu0 %v3147, 127
        %v3152 = vpop.permute.xlu0 %3151
        %3153 = vrot.lane.b32.xlu0 %v3148, 127
        %v3154 = vpop.permute.xlu0 %3153
        %v3157 = vadd.f32 %v3093, %v3152
        %v3158 = vadd.f32 %v3094, %v3154
        %s3159 = sld [smem:[#allocation3 + $0x11f]]
        %v3160 = vstv %s3159
        %v3161 = vmul.f32 %v3160, %v3081
        %v3162 = vmul.f32 %v3160, %v3082
        %3165 = vrot.lane.b32.xlu0 %v3161, 127
        %v3166 = vpop.permute.xlu0 %3165
        %3167 = vrot.lane.b32.xlu0 %v3162, 127
        %v3168 = vpop.permute.xlu0 %3167
        %v3171 = vadd.f32 %v3099, %v3166
        %v3172 = vadd.f32 %v3100, %v3168
        %s3173 = sld [smem:[#allocation3 + $0x19f]]
        %v3174 = vstv %s3173
        %v3175 = vmul.f32 %v3174, %v3081
        %v3176 = vmul.f32 %v3174, %v3082
        %3179 = vrot.lane.b32.xlu0 %v3175, 127
        %v3180 = vpop.permute.xlu0 %3179
        %3181 = vrot.lane.b32.xlu0 %v3176, 127
        %v3182 = vpop.permute.xlu0 %3181
        %v3185 = vadd.f32 %v3105, %v3180
        %v3186 = vadd.f32 %v3106, %v3182
        %s3187 = sld [smem:[#allocation3 + $0x21f]]
        %v3188 = vstv %s3187
        %v3189 = vmul.f32 %v3188, %v3081
        %v3190 = vmul.f32 %v3188, %v3082
        %3193 = vrot.lane.b32.xlu0 %v3189, 127
        %v3194 = vpop.permute.xlu0 %3193
        %3195 = vrot.lane.b32.xlu0 %v3190, 127
        %v3196 = vpop.permute.xlu0 %3195
        %v3199 = vadd.f32 %v3111, %v3194
        %v3200 = vadd.f32 %v3112, %v3196
        %s3201 = sld [smem:[#allocation3 + $0x29f]]
        %v3202 = vstv %s3201
        %v3203 = vmul.f32 %v3202, %v3081
        %v3204 = vmul.f32 %v3202, %v3082
        %3207 = vrot.lane.b32.xlu0 %v3203, 127
        %v3208 = vpop.permute.xlu0 %3207
        %3209 = vrot.lane.b32.xlu0 %v3204, 127
        %v3210 = vpop.permute.xlu0 %3209
        %v3213 = vadd.f32 %v3117, %v3208
        %v3214 = vadd.f32 %v3118, %v3210
        %s3215 = sld [smem:[#allocation3 + $0x31f]]
        %v3216 = vstv %s3215
        %v3217 = vmul.f32 %v3216, %v3081
        %v3218 = vmul.f32 %v3216, %v3082
        %3221 = vrot.lane.b32.xlu0 %v3217, 127
        %v3222 = vpop.permute.xlu0 %3221
        %3223 = vrot.lane.b32.xlu0 %v3218, 127
        %v3224 = vpop.permute.xlu0 %3223
        %v3227 = vadd.f32 %v3123, %v3222
        %v3228 = vadd.f32 %v3124, %v3224
        %s3229 = sld [smem:[#allocation3 + $0x39f]]
        %v3230 = vstv %s3229
        %v3231 = vmul.f32 %v3230, %v3081
        %v3232 = vmul.f32 %v3230, %v3082
        %3235 = vrot.lane.b32.xlu0 %v3231, 127
        %v3236 = vpop.permute.xlu0 %3235
        %3237 = vrot.lane.b32.xlu0 %v3232, 127
        %v3238 = vpop.permute.xlu0 %3237
        %v3241 = vadd.f32 %v3129, %v3236
        %v3242 = vadd.f32 %v3130, %v3238
        %s3243 = sld [smem:[#allocation3 + $0x20]]
        %v3244 = vstv %s3243
        %v3245 = vmul.f32 %v3244, %v3081
        %v3246 = vmul.f32 %v3244, %v3082
        %3249 = vrot.lane.b32.xlu0 %v3245, 126
        %v3250 = vpop.permute.xlu0 %3249
        %3251 = vrot.lane.b32.xlu0 %v3246, 126
        %v3252 = vpop.permute.xlu0 %3251
        %v3255 = vadd.f32 %v3143, %v3250
        %v3256 = vadd.f32 %v3144, %v3252
        %s3257 = sld [smem:[#allocation3 + $0xa0]]
        %v3258 = vstv %s3257
        %v3259 = vmul.f32 %v3258, %v3081
        %v3260 = vmul.f32 %v3258, %v3082
        %3263 = vrot.lane.b32.xlu0 %v3259, 126
        %v3264 = vpop.permute.xlu0 %3263
        %3265 = vrot.lane.b32.xlu0 %v3260, 126
        %v3266 = vpop.permute.xlu0 %3265
        %v3269 = vadd.f32 %v3157, %v3264
        %v3270 = vadd.f32 %v3158, %v3266
        %s3271 = sld [smem:[#allocation3 + $0x120]]
        %v3272 = vstv %s3271
        %v3273 = vmul.f32 %v3272, %v3081
        %v3274 = vmul.f32 %v3272, %v3082
        %3277 = vrot.lane.b32.xlu0 %v3273, 126
        %v3278 = vpop.permute.xlu0 %3277
        %3279 = vrot.lane.b32.xlu0 %v3274, 126
        %v3280 = vpop.permute.xlu0 %3279
        %v3283 = vadd.f32 %v3171, %v3278
        %v3284 = vadd.f32 %v3172, %v3280
        %s3285 = sld [smem:[#allocation3 + $0x1a0]]
        %v3286 = vstv %s3285
        %v3287 = vmul.f32 %v3286, %v3081
        %v3288 = vmul.f32 %v3286, %v3082
        %3291 = vrot.lane.b32.xlu0 %v3287, 126
        %v3292 = vpop.permute.xlu0 %3291
        %3293 = vrot.lane.b32.xlu0 %v3288, 126
        %v3294 = vpop.permute.xlu0 %3293
        %v3297 = vadd.f32 %v3185, %v3292
        %v3298 = vadd.f32 %v3186, %v3294
        %s3299 = sld [smem:[#allocation3 + $0x220]]
        %v3300 = vstv %s3299
        %v3301 = vmul.f32 %v3300, %v3081
        %v3302 = vmul.f32 %v3300, %v3082
        %3305 = vrot.lane.b32.xlu0 %v3301, 126
        %v3306 = vpop.permute.xlu0 %3305
        %3307 = vrot.lane.b32.xlu0 %v3302, 126
        %v3308 = vpop.permute.xlu0 %3307
        %v3311 = vadd.f32 %v3199, %v3306
        %v3312 = vadd.f32 %v3200, %v3308
        %s3313 = sld [smem:[#allocation3 + $0x2a0]]
        %v3314 = vstv %s3313
        %v3315 = vmul.f32 %v3314, %v3081
        %v3316 = vmul.f32 %v3314, %v3082
        %3319 = vrot.lane.b32.xlu0 %v3315, 126
        %v3320 = vpop.permute.xlu0 %3319
        %3321 = vrot.lane.b32.xlu0 %v3316, 126
        %v3322 = vpop.permute.xlu0 %3321
        %v3325 = vadd.f32 %v3213, %v3320
        %v3326 = vadd.f32 %v3214, %v3322
        %s3327 = sld [smem:[#allocation3 + $0x320]]
        %v3328 = vstv %s3327
        %v3329 = vmul.f32 %v3328, %v3081
        %v3330 = vmul.f32 %v3328, %v3082
        %3333 = vrot.lane.b32.xlu0 %v3329, 126
        %v3334 = vpop.permute.xlu0 %3333
        %3335 = vrot.lane.b32.xlu0 %v3330, 126
        %v3336 = vpop.permute.xlu0 %3335
        %v3339 = vadd.f32 %v3227, %v3334
        %v3340 = vadd.f32 %v3228, %v3336
        %s3341 = sld [smem:[#allocation3 + $0x3a0]]
        %v3342 = vstv %s3341
        %v3343 = vmul.f32 %v3342, %v3081
        %v3344 = vmul.f32 %v3342, %v3082
        %3347 = vrot.lane.b32.xlu0 %v3343, 126
        %v3348 = vpop.permute.xlu0 %3347
        %3349 = vrot.lane.b32.xlu0 %v3344, 126
        %v3350 = vpop.permute.xlu0 %3349
        %v3353 = vadd.f32 %v3241, %v3348
        %v3354 = vadd.f32 %v3242, %v3350
        %v3355 = vld [vmem:[%s282 + $0x2] sm:$0xff]
        %v3356 = vld [vmem:[%s282 + $0xa] sm:$0xff]
        %s3357 = sld [smem:[#allocation3 + $0x21]]
        %v3358 = vstv %s3357
        %v3359 = vmul.f32 %v3358, %v3355
        %v3360 = vmul.f32 %v3358, %v3356
        %v3361 = vadd.f32 %v3255, %v3359
        %v3362 = vadd.f32 %v3256, %v3360
        %s3363 = sld [smem:[#allocation3 + $0xa1]]
        %v3364 = vstv %s3363
        %v3365 = vmul.f32 %v3364, %v3355
        %v3366 = vmul.f32 %v3364, %v3356
        %v3367 = vadd.f32 %v3269, %v3365
        %v3368 = vadd.f32 %v3270, %v3366
        %s3369 = sld [smem:[#allocation3 + $0x121]]
        %v3370 = vstv %s3369
        %v3371 = vmul.f32 %v3370, %v3355
        %v3372 = vmul.f32 %v3370, %v3356
        %v3373 = vadd.f32 %v3283, %v3371
        %v3374 = vadd.f32 %v3284, %v3372
        %s3375 = sld [smem:[#allocation3 + $0x1a1]]
        %v3376 = vstv %s3375
        %v3377 = vmul.f32 %v3376, %v3355
        %v3378 = vmul.f32 %v3376, %v3356
        %v3379 = vadd.f32 %v3297, %v3377
        %v3380 = vadd.f32 %v3298, %v3378
        %s3381 = sld [smem:[#allocation3 + $0x221]]
        %v3382 = vstv %s3381
        %v3383 = vmul.f32 %v3382, %v3355
        %v3384 = vmul.f32 %v3382, %v3356
        %v3385 = vadd.f32 %v3311, %v3383
        %v3386 = vadd.f32 %v3312, %v3384
        %s3387 = sld [smem:[#allocation3 + $0x2a1]]
        %v3388 = vstv %s3387
        %v3389 = vmul.f32 %v3388, %v3355
        %v3390 = vmul.f32 %v3388, %v3356
        %v3391 = vadd.f32 %v3325, %v3389
        %v3392 = vadd.f32 %v3326, %v3390
        %s3393 = sld [smem:[#allocation3 + $0x321]]
        %v3394 = vstv %s3393
        %v3395 = vmul.f32 %v3394, %v3355
        %v3396 = vmul.f32 %v3394, %v3356
        %v3397 = vadd.f32 %v3339, %v3395
        %v3398 = vadd.f32 %v3340, %v3396
        %s3399 = sld [smem:[#allocation3 + $0x3a1]]
        %v3400 = vstv %s3399
        %v3401 = vmul.f32 %v3400, %v3355
        %v3402 = vmul.f32 %v3400, %v3356
        %v3403 = vadd.f32 %v3353, %v3401
        %v3404 = vadd.f32 %v3354, %v3402
        %s3405 = sld [smem:[#allocation3 + $0x22]]
        %v3406 = vstv %s3405
        %v3407 = vmul.f32 %v3406, %v3355
        %v3408 = vmul.f32 %v3406, %v3356
        %3411 = vrot.lane.b32.xlu0 %v3407, 127
        %v3412 = vpop.permute.xlu0 %3411
        %3413 = vrot.lane.b32.xlu0 %v3408, 127
        %v3414 = vpop.permute.xlu0 %3413
        %v3417 = vadd.f32 %v3361, %v3412
        %v3418 = vadd.f32 %v3362, %v3414
        %s3419 = sld [smem:[#allocation3 + $0xa2]]
        %v3420 = vstv %s3419
        %v3421 = vmul.f32 %v3420, %v3355
        %v3422 = vmul.f32 %v3420, %v3356
        %3425 = vrot.lane.b32.xlu0 %v3421, 127
        %v3426 = vpop.permute.xlu0 %3425
        %3427 = vrot.lane.b32.xlu0 %v3422, 127
        %v3428 = vpop.permute.xlu0 %3427
        %v3431 = vadd.f32 %v3367, %v3426
        %v3432 = vadd.f32 %v3368, %v3428
        %s3433 = sld [smem:[#allocation3 + $0x122]]
        %v3434 = vstv %s3433
        %v3435 = vmul.f32 %v3434, %v3355
        %v3436 = vmul.f32 %v3434, %v3356
        %3439 = vrot.lane.b32.xlu0 %v3435, 127
        %v3440 = vpop.permute.xlu0 %3439
        %3441 = vrot.lane.b32.xlu0 %v3436, 127
        %v3442 = vpop.permute.xlu0 %3441
        %v3445 = vadd.f32 %v3373, %v3440
        %v3446 = vadd.f32 %v3374, %v3442
        %s3447 = sld [smem:[#allocation3 + $0x1a2]]
        %v3448 = vstv %s3447
        %v3449 = vmul.f32 %v3448, %v3355
        %v3450 = vmul.f32 %v3448, %v3356
        %3453 = vrot.lane.b32.xlu0 %v3449, 127
        %v3454 = vpop.permute.xlu0 %3453
        %3455 = vrot.lane.b32.xlu0 %v3450, 127
        %v3456 = vpop.permute.xlu0 %3455
        %v3459 = vadd.f32 %v3379, %v3454
        %v3460 = vadd.f32 %v3380, %v3456
        %s3461 = sld [smem:[#allocation3 + $0x222]]
        %v3462 = vstv %s3461
        %v3463 = vmul.f32 %v3462, %v3355
        %v3464 = vmul.f32 %v3462, %v3356
        %3467 = vrot.lane.b32.xlu0 %v3463, 127
        %v3468 = vpop.permute.xlu0 %3467
        %3469 = vrot.lane.b32.xlu0 %v3464, 127
        %v3470 = vpop.permute.xlu0 %3469
        %v3473 = vadd.f32 %v3385, %v3468
        %v3474 = vadd.f32 %v3386, %v3470
        %s3475 = sld [smem:[#allocation3 + $0x2a2]]
        %v3476 = vstv %s3475
        %v3477 = vmul.f32 %v3476, %v3355
        %v3478 = vmul.f32 %v3476, %v3356
        %3481 = vrot.lane.b32.xlu0 %v3477, 127
        %v3482 = vpop.permute.xlu0 %3481
        %3483 = vrot.lane.b32.xlu0 %v3478, 127
        %v3484 = vpop.permute.xlu0 %3483
        %v3487 = vadd.f32 %v3391, %v3482
        %v3488 = vadd.f32 %v3392, %v3484
        %s3489 = sld [smem:[#allocation3 + $0x322]]
        %v3490 = vstv %s3489
        %v3491 = vmul.f32 %v3490, %v3355
        %v3492 = vmul.f32 %v3490, %v3356
        %3495 = vrot.lane.b32.xlu0 %v3491, 127
        %v3496 = vpop.permute.xlu0 %3495
        %3497 = vrot.lane.b32.xlu0 %v3492, 127
        %v3498 = vpop.permute.xlu0 %3497
        %v3501 = vadd.f32 %v3397, %v3496
        %v3502 = vadd.f32 %v3398, %v3498
        %s3503 = sld [smem:[#allocation3 + $0x3a2]]
        %v3504 = vstv %s3503
        %v3505 = vmul.f32 %v3504, %v3355
        %v3506 = vmul.f32 %v3504, %v3356
        %3509 = vrot.lane.b32.xlu0 %v3505, 127
        %v3510 = vpop.permute.xlu0 %3509
        %3511 = vrot.lane.b32.xlu0 %v3506, 127
        %v3512 = vpop.permute.xlu0 %3511
        %v3515 = vadd.f32 %v3403, %v3510
        %v3516 = vadd.f32 %v3404, %v3512
        %s3517 = sld [smem:[#allocation3 + $0x23]]
        %v3518 = vstv %s3517
        %v3519 = vmul.f32 %v3518, %v3355
        %v3520 = vmul.f32 %v3518, %v3356
        %3523 = vrot.lane.b32.xlu0 %v3519, 126
        %v3524 = vpop.permute.xlu0 %3523
        %3525 = vrot.lane.b32.xlu0 %v3520, 126
        %v3526 = vpop.permute.xlu0 %3525
        %v3529 = vadd.f32 %v3417, %v3524
        %v3530 = vadd.f32 %v3418, %v3526
        %s3531 = sld [smem:[#allocation3 + $0xa3]]
        %v3532 = vstv %s3531
        %v3533 = vmul.f32 %v3532, %v3355
        %v3534 = vmul.f32 %v3532, %v3356
        %3537 = vrot.lane.b32.xlu0 %v3533, 126
        %v3538 = vpop.permute.xlu0 %3537
        %3539 = vrot.lane.b32.xlu0 %v3534, 126
        %v3540 = vpop.permute.xlu0 %3539
        %v3543 = vadd.f32 %v3431, %v3538
        %v3544 = vadd.f32 %v3432, %v3540
        %s3545 = sld [smem:[#allocation3 + $0x123]]
        %v3546 = vstv %s3545
        %v3547 = vmul.f32 %v3546, %v3355
        %v3548 = vmul.f32 %v3546, %v3356
        %3551 = vrot.lane.b32.xlu0 %v3547, 126
        %v3552 = vpop.permute.xlu0 %3551
        %3553 = vrot.lane.b32.xlu0 %v3548, 126
        %v3554 = vpop.permute.xlu0 %3553
        %v3557 = vadd.f32 %v3445, %v3552
        %v3558 = vadd.f32 %v3446, %v3554
        %s3559 = sld [smem:[#allocation3 + $0x1a3]]
        %v3560 = vstv %s3559
        %v3561 = vmul.f32 %v3560, %v3355
        %v3562 = vmul.f32 %v3560, %v3356
        %3565 = vrot.lane.b32.xlu0 %v3561, 126
        %v3566 = vpop.permute.xlu0 %3565
        %3567 = vrot.lane.b32.xlu0 %v3562, 126
        %v3568 = vpop.permute.xlu0 %3567
        %v3571 = vadd.f32 %v3459, %v3566
        %v3572 = vadd.f32 %v3460, %v3568
        %s3573 = sld [smem:[#allocation3 + $0x223]]
        %v3574 = vstv %s3573
        %v3575 = vmul.f32 %v3574, %v3355
        %v3576 = vmul.f32 %v3574, %v3356
        %3579 = vrot.lane.b32.xlu0 %v3575, 126
        %v3580 = vpop.permute.xlu0 %3579
        %3581 = vrot.lane.b32.xlu0 %v3576, 126
        %v3582 = vpop.permute.xlu0 %3581
        %v3585 = vadd.f32 %v3473, %v3580
        %v3586 = vadd.f32 %v3474, %v3582
        %s3587 = sld [smem:[#allocation3 + $0x2a3]]
        %v3588 = vstv %s3587
        %v3589 = vmul.f32 %v3588, %v3355
        %v3590 = vmul.f32 %v3588, %v3356
        %3593 = vrot.lane.b32.xlu0 %v3589, 126
        %v3594 = vpop.permute.xlu0 %3593
        %3595 = vrot.lane.b32.xlu0 %v3590, 126
        %v3596 = vpop.permute.xlu0 %3595
        %v3599 = vadd.f32 %v3487, %v3594
        %v3600 = vadd.f32 %v3488, %v3596
        %s3601 = sld [smem:[#allocation3 + $0x323]]
        %v3602 = vstv %s3601
        %v3603 = vmul.f32 %v3602, %v3355
        %v3604 = vmul.f32 %v3602, %v3356
        %3607 = vrot.lane.b32.xlu0 %v3603, 126
        %v3608 = vpop.permute.xlu0 %3607
        %3609 = vrot.lane.b32.xlu0 %v3604, 126
        %v3610 = vpop.permute.xlu0 %3609
        %v3613 = vadd.f32 %v3501, %v3608
        %v3614 = vadd.f32 %v3502, %v3610
        %s3615 = sld [smem:[#allocation3 + $0x3a3]]
        %v3616 = vstv %s3615
        %v3617 = vmul.f32 %v3616, %v3355
        %v3618 = vmul.f32 %v3616, %v3356
        %3621 = vrot.lane.b32.xlu0 %v3617, 126
        %v3622 = vpop.permute.xlu0 %3621
        %3623 = vrot.lane.b32.xlu0 %v3618, 126
        %v3624 = vpop.permute.xlu0 %3623
        %v3627 = vadd.f32 %v3515, %v3622
        %v3628 = vadd.f32 %v3516, %v3624
        %s3629 = sld [smem:[#allocation6]]
        %v3630 = vstv %s3629
        %v3631 = vadd.f32 %v3529, %v3630
        %v3632 = vadd.f32 %v3530, %v3630
        %s3633 = sld [smem:[#allocation6 + $0x1]]
        %v3634 = vstv %s3633
        %v3635 = vadd.f32 %v3543, %v3634
        %v3636 = vadd.f32 %v3544, %v3634
        %s3637 = sld [smem:[#allocation6 + $0x2]]
        %v3638 = vstv %s3637
        %v3639 = vadd.f32 %v3557, %v3638
        %v3640 = vadd.f32 %v3558, %v3638
        %s3641 = sld [smem:[#allocation6 + $0x3]]
        %v3642 = vstv %s3641
        %v3643 = vadd.f32 %v3571, %v3642
        %v3644 = vadd.f32 %v3572, %v3642
        %s3645 = sld [smem:[#allocation6 + $0x4]]
        %v3646 = vstv %s3645
        %v3647 = vadd.f32 %v3585, %v3646
        %v3648 = vadd.f32 %v3586, %v3646
        %s3649 = sld [smem:[#allocation6 + $0x5]]
        %v3650 = vstv %s3649
        %v3651 = vadd.f32 %v3599, %v3650
        %v3652 = vadd.f32 %v3600, %v3650
        %s3653 = sld [smem:[#allocation6 + $0x6]]
        %v3654 = vstv %s3653
        %v3655 = vadd.f32 %v3613, %v3654
        %v3656 = vadd.f32 %v3614, %v3654
        %s3657 = sld [smem:[#allocation6 + $0x7]]
        %v3658 = vstv %s3657
        %v3659 = vadd.f32 %v3627, %v3658
        %v3660 = vadd.f32 %v3628, %v3658
        %v3661 = vand.u32 2147483647, %v3631
        %v3662 = vand.u32 2147483647, %v3632
        %v3663 = vand.u32 2147483647, %v3635
        %v3664 = vand.u32 2147483647, %v3636
        %v3665 = vadd.f32 %v3661, %v3663
        %v3666 = vadd.f32 %v3662, %v3664
        %v3667 = vadd.f32 %v3631, %v3635
        %v3668 = vadd.f32 %v3632, %v3636
        %v3669 = vand.u32 2147483647, %v3639
        %v3670 = vand.u32 2147483647, %v3640
        %v3671 = vadd.f32 %v3665, %v3669
        %v3672 = vadd.f32 %v3666, %v3670
        %v3673 = vadd.f32 %v3667, %v3639
        %v3674 = vadd.f32 %v3668, %v3640
        %v3675 = vand.u32 2147483647, %v3643
        %v3676 = vand.u32 2147483647, %v3644
        %v3677 = vadd.f32 %v3671, %v3675
        %v3678 = vadd.f32 %v3672, %v3676
        %v3679 = vadd.f32 %v3673, %v3643
        %v3680 = vadd.f32 %v3674, %v3644
        %v3681 = vand.u32 2147483647, %v3647
        %v3682 = vand.u32 2147483647, %v3648
        %v3683 = vadd.f32 %v3677, %v3681
        %v3684 = vadd.f32 %v3678, %v3682
        %v3685 = vadd.f32 %v3679, %v3647
        %v3686 = vadd.f32 %v3680, %v3648
        %v3687 = vand.u32 2147483647, %v3651
        %v3688 = vand.u32 2147483647, %v3652
        %v3689 = vadd.f32 %v3683, %v3687
        %v3690 = vadd.f32 %v3684, %v3688
        %v3691 = vadd.f32 %v3685, %v3651
        %v3692 = vadd.f32 %v3686, %v3652
        %v3693 = vand.u32 2147483647, %v3655
        %v3694 = vand.u32 2147483647, %v3656
        %v3695 = vadd.f32 %v3689, %v3693
        %v3696 = vadd.f32 %v3690, %v3694
        %v3697 = vadd.f32 %v3691, %v3655
        %v3698 = vadd.f32 %v3692, %v3656
        %v3699 = vand.u32 2147483647, %v3659
        %v3700 = vand.u32 2147483647, %v3660
        %v3701 = vadd.f32 %v3695, %v3699
        %v3702 = vadd.f32 %v3696, %v3700
        %v3703 = vadd.f32 %v3697, %v3659
        %v3704 = vadd.f32 %v3698, %v3660
        %v3705 = vrcp.pop %v3701
        %v3706 = vrcp.pop %v3702
        %v3707 = vmul.f32 %v3703, %v3705
        %v3708 = vmul.f32 %v3704, %v3706
        %v3709 = vsub.f32 1.0, %v3707
        %v3710 = vsub.f32 1.0, %v3708
        %v3711 = vmul.f32 %v3631, %v3705
        %v3712 = vmul.f32 %v3632, %v3706
        %vm3713 = vcmask 130048
        %3714 = vst.msk [vmem:[%s204] sm:$0xff] %vm3713, %v3711
        %3715 = vst.msk [vmem:[%s204 + $0x8] sm:$0xff] %vm3713, %v3712
        %v3716 = vmul.f32 %v3635, %v3705
        %v3717 = vmul.f32 %v3636, %v3706
        %s3718 = scalar_lea.vmem %s204, 16 [#allocation8]
        %3719 = vst.msk [vmem:[%s3718] sm:$0xff] %vm3713, %v3716
        %3720 = vst.msk [vmem:[%s3718 + $0x8] sm:$0xff] %vm3713, %v3717
        %v3721 = vmul.f32 %v3639, %v3705
        %v3722 = vmul.f32 %v3640, %v3706
        %s3723 = scalar_lea.vmem %s204, 32 [#allocation8]
        %3724 = vst.msk [vmem:[%s3723] sm:$0xff] %vm3713, %v3721
        %3725 = vst.msk [vmem:[%s3723 + $0x8] sm:$0xff] %vm3713, %v3722
        %v3726 = vmul.f32 %v3643, %v3705
        %v3727 = vmul.f32 %v3644, %v3706
        %s3728 = scalar_lea.vmem %s204, 48 [#allocation8]
        %3729 = vst.msk [vmem:[%s3728] sm:$0xff] %vm3713, %v3726
        %3730 = vst.msk [vmem:[%s3728 + $0x8] sm:$0xff] %vm3713, %v3727
        %s3731 = scalar_lea.vmem %s204, 64 [#allocation8]
        %3732 = vst.msk [vmem:[%s3731] sm:$0xff] %vm3713, %v3709
        %3733 = vst.msk [vmem:[%s3731 + $0x8] sm:$0xff] %vm3713, %v3710
        %v3734 = vmul.f32 %v3647, %v3705
        %v3735 = vmul.f32 %v3648, %v3706
        %s3736 = scalar_lea.vmem %s204, 80 [#allocation8]
        %3737 = vst.msk [vmem:[%s3736] sm:$0xff] %vm3713, %v3734
        %3738 = vst.msk [vmem:[%s3736 + $0x8] sm:$0xff] %vm3713, %v3735
        %v3739 = vmul.f32 %v3651, %v3705
        %v3740 = vmul.f32 %v3652, %v3706
        %s3741 = scalar_lea.vmem %s204, 96 [#allocation8]
        %3742 = vst.msk [vmem:[%s3741] sm:$0xff] %vm3713, %v3739
        %3743 = vst.msk [vmem:[%s3741 + $0x8] sm:$0xff] %vm3713, %v3740
        %v3744 = vmul.f32 %v3655, %v3705
        %v3745 = vmul.f32 %v3656, %v3706
        %s3746 = scalar_lea.vmem %s204, 112 [#allocation8]
        %3747 = vst.msk [vmem:[%s3746] sm:$0xff] %vm3713, %v3744
        %3748 = vst.msk [vmem:[%s3746 + $0x8] sm:$0xff] %vm3713, %v3745
        %v3749 = vmul.f32 %v3659, %v3705
        %v3750 = vmul.f32 %v3660, %v3706
        %s3751 = scalar_lea.vmem %s204, 128 [#allocation8]
        %3752 = vst.msk [vmem:[%s3751] sm:$0xff] %vm3713, %v3749
        %3753 = vst.msk [vmem:[%s3751 + $0x8] sm:$0xff] %vm3713, %v3750
        %s3754 = sand.u32 %s109, 1
        %s3755 = scalar_lea.sflag [#allocation4], %s3754
        %s3756 = sand.u32 %s109, 1
        %s3757 = smul.addr %s3756, 144
        %s3758 = scalar_lea.vmem [#allocation8], %s3757
        // Predicated region
        $region49: #{cspn_generate_accelerate.1} parent=31 // pred_check
          %p3759 = pneg %p119
        $region50: #{cspn_generate_accelerate.1} parent=31 // pred_check_branch
          %3761 = sbr.rel (%p3759) target = $region52
        $region51: #{cspn_generate_accelerate.1} parent=31 // pred_region
          %s3762 = smul.u32 2, %s24
          %s3764 = ssub.s32 2304, 2304
          %3765 = vsyncadd %s3755, %s3764
          %s3766 = smul.addr %s23, 18
          %s3767 = sadd.s32 %s3762, %s3766
          %s3768 = smul.addr %s3767, 128
          %s3769 = scalar_lea.hbm %s3, %s3768
          %s3770 = sshll.u32 %s3758, 4
          %s3771 = int_to_ptr.vmem [resolvable:$true] %s3770
          %3776 = dma.vmem_to_hbm [thread:$0]  %s3771, 2304, %s3769, %s3755, 128, 128, 8
        $region52: #{cspn_generate_accelerate.1} parent=31 // pred_fallthru
          _
      $region32: #{cspn_generate_accelerate.1} parent=5 // pred_fallthru
        _
      %p3777 = scmp.le.s32.totalorder 2, %s14
      // Predicated region
      $region53: #{cspn_generate_accelerate.1} parent=5 // pred_check
        %p3778 = pneg %p3777
      $region54: #{cspn_generate_accelerate.1} parent=5 // pred_check_branch
        %3780 = sbr.rel (%p3778) target = $region56
      $region55: #{cspn_generate_accelerate.1} parent=5 // pred_region
        %s3781 = ssub.s32 %s14, 2
        // Predicated region
        $region57: #{cspn_generate_accelerate.1} parent=55 // pred_check
          %p3782 = pneg %p125
        $region58: #{cspn_generate_accelerate.1} parent=55 // pred_check_branch
          %3784 = sbr.rel (%p3782) target = $region60
        $region59: #{cspn_generate_accelerate.1} parent=55 // pred_region
          %s3785 = sand.u32 %s110, 1
          %s3786 = scalar_lea.sflag [#allocation4], %s3785
          %s3787 = sand.u32 %s110, 1
          %s3788 = smul.addr %s3787, 144
          %s3789 = scalar_lea.vmem [#allocation8], %s3788
          %3790 = dma.done %s3786, 2304
        $region60: #{cspn_generate_accelerate.1} parent=55 // pred_fallthru
          _
      $region56: #{cspn_generate_accelerate.1} parent=5 // pred_fallthru
        _
    $region6: #{cspn_generate_accelerate.1} parent=1 // loop_footer
      %s18 = sadd.s32 1, %s14
    $region7: #{cspn_generate_accelerate.1} parent=1 // loop_footer_branch
      %13 = sbr.rel target = $region3
    $region8: #{cspn_generate_accelerate.1} parent=1 // loop_exit
      _
    %3791 = vsyncpa [#allocation4], 1
    %s3792 = scalar_lea.sflag [#allocation4], 1
    %3793 = vsyncpa %s3792, 1
    %3794 = vsyncpa [#allocation5], 1
    %s3795 = scalar_lea.sflag [#allocation5], 1
    %3796 = vsyncpa %s3795, 1
    %3797 = vsyncpa [#allocation7], 1

</llo_original>
